<compile_context>
chip_gen: v5e
topology: v5e:2x2
jax: 0.10.0
libtpu: 0.0.40
codegen_flags: <defaults>
</compile_context>

<pallas_src>
import math
import functools

import jax
import jax.numpy as jnp
from jax.experimental import pallas as pl
from jax.experimental.pallas import tpu as pltpu


MXU_DTYPE = jnp.bfloat16      # MXU operand dtype (f32 accumulation)
ACT_DTYPE = jnp.bfloat16      # inter-kernel activation dtype
_LN_EPS = 1e-5


def _default_vmem_budget():
    # ~75% of per-core VMEM: ~48 MiB on v7x (64 MiB/TC), ~96 MiB on v5e/v6e (128 MiB).
    try:
        cap = int(pltpu.get_tpu_info().vmem_capacity_bytes)
    except Exception:
        cap = 64 * 1024 * 1024
    return max(32 * 1024 * 1024, (cap * 3) // 4)


_VMEM_BUDGET = _default_vmem_budget()


# ----------------------------- Pallas kernels ------------------------------

def _qkv_proj_kernel(x_ref, wqkv_ref, bqkv_ref, q_ref, k_ref, v_ref, *, q_scale):
    # x: (tm, E) bf16 rows of the flattened (M, E) activation; wqkv: (E, 3E) bf16.
    # Emits q (pre-scaled by 1/sqrt(dh)), k, v as separate bf16 slabs so the
    # attention kernel can tile queries while keeping K/V whole per batch elem.
    E = q_ref.shape[-1]
    qkv = jnp.dot(x_ref[...], wqkv_ref[...],
                  preferred_element_type=jnp.float32) + bqkv_ref[...]     # (tm, 3E) f32
    q_ref[...] = (qkv[:, :E] * q_scale).astype(q_ref.dtype)
    k_ref[...] = qkv[:, E:2 * E].astype(k_ref.dtype)
    v_ref[...] = qkv[:, 2 * E:].astype(v_ref.dtype)


def _attn_kernel(q_ref, k_ref, v_ref, x_ref, wo_ref, bo_ref, g_ref, b_ref,
                 o_ref, ctx_ref, *, nhead, eps):
    # Query-tiled causal attention -> single K=E out-projection -> residual
    # add -> LayerNorm1.  Grid step = (batch element n, query tile qi).
    # Blocks: q/x (1,tq,E) bf16; k/v (1,S,E) bf16 (resident across qi);
    #         wo (E,E) bf16; bo/g/b (1,E) f32; ctx scratch (tq,E) f32.
    qi = pl.program_id(1)
    q = q_ref[0]                                   # (tq, E) bf16, already *1/sqrt(dh)
    k = k_ref[0]                                   # (S, E)  bf16
    v = v_ref[0]                                   # (S, E)  bf16
    tq, E = q.shape
    S = k.shape[0]
    dh = E // nhead

    # Causal mask built in-kernel from iotas (no (S,S) mask DMA).
    row = jax.lax.broadcasted_iota(jnp.int32, (tq, S), 0) + qi * tq
    col = jax.lax.broadcasted_iota(jnp.int32, (tq, S), 1)
    allowed = row >= col
    neg = jnp.float32(-1e30)

    # TODO(synk): online-softmax over KV tiles (with masked-tile skipping) for long S.
    for h in range(nhead):
        lo = h * dh
        s = jax.lax.dot_general(q[:, lo:lo + dh], k[:, lo:lo + dh],
                                (((1,), (1,)), ((), ())),
                                preferred_element_type=jnp.float32)       # (tq, S) f32
        s = jnp.where(allowed, s, neg)
        m = jnp.max(s, axis=-1, keepdims=True)
        e = jnp.exp(s - m)
        p = e * pl.reciprocal(jnp.sum(e, axis=-1, keepdims=True), approx=True)
        ctx_ref[:, lo:lo + dh] = jnp.dot(p.astype(v.dtype), v[:, lo:lo + dh],
                                         preferred_element_type=jnp.float32)

    # Single full-width (K = E) output projection from the context slab.
    attn = jnp.dot(ctx_ref[...].astype(wo_ref.dtype), wo_ref[...],
                   preferred_element_type=jnp.float32) + bo_ref[...]      # (tq, E) f32

    # residual + LayerNorm1 (post-norm), f32 math; store bf16.
    z = x_ref[0].astype(jnp.float32) + attn
    mu = jnp.mean(z, axis=-1, keepdims=True)
    zc = z - mu
    var = jnp.mean(zc * zc, axis=-1, keepdims=True)
    o_ref[0] = (zc * jax.lax.rsqrt(var + eps) * g_ref[...] + b_ref[...]).astype(o_ref.dtype)


def _ffn_kernel(x_ref, w1_ref, b1_ref, w2_ref, b2_ref, g_ref, b_ref, o_ref, *, eps):
    # Fused: relu(x @ W1 + b1) @ W2 + b2 -> residual add -> LayerNorm2.
    x = x_ref[...]                                                         # (tm, E) bf16
    h = jnp.dot(x, w1_ref[...], preferred_element_type=jnp.float32) + b1_ref[...]
    h = jnp.maximum(h, 0.0)
    y = jnp.dot(h.astype(w2_ref.dtype), w2_ref[...],
                preferred_element_type=jnp.float32) + b2_ref[...]
    z = x.astype(jnp.float32) + y
    mu = jnp.mean(z, axis=-1, keepdims=True)
    zc = z - mu
    var = jnp.mean(zc * zc, axis=-1, keepdims=True)
    o_ref[...] = (zc * jax.lax.rsqrt(var + eps) * g_ref[...] + b_ref[...]).astype(o_ref.dtype)


def _decoder_kernel(x_ref, w_ref, b_ref, o_ref):
    # (tm, E) bf16 @ (E, tv) bf16 + (1, tv) f32 -> (tm, tv) f32 (lane-dense tv).
    o_ref[...] = jnp.dot(x_ref[...], w_ref[...],
                         preferred_element_type=jnp.float32) + b_ref[...]


# ------------------------------ helpers -------------------------------------

def _pick_tile(n, candidates):
    for t in candidates:
        if t <= n and n % t == 0:
            return t
    return n  # fall back to the full dimension (always legal)


def positional_encoding(seq_len, d_model):
    position = jnp.arange(seq_len, dtype=jnp.float32)[:, None]
    div_term = jnp.exp(jnp.arange(0, d_model, 2, dtype=jnp.float32)
                       * (-math.log(10000.0) / d_model))
    pe = jnp.zeros((seq_len, d_model), jnp.float32)
    pe = pe.at[:, 0::2].set(jnp.sin(position * div_term))
    pe = pe.at[:, 1::2].set(jnp.cos(position * div_term))
    return pe


def init_params(key, ntoken, ninp, nhead, nhid, nlayers, mxu_dtype=MXU_DTYPE):
    del nhead  # head count does not change parameter shapes
    keys = jax.random.split(key, 2 + 4 * nlayers)
    u = lambda k, shape: jax.random.uniform(k, shape, jnp.float32, -0.1, 0.1)
    params = {
        "emb": u(keys[0], (ntoken, ninp)),                       # embedding table (f32)
        "dec_w": u(keys[1], (ninp, ntoken)).astype(mxu_dtype),   # pre-transposed
        "dec_b": jnp.zeros((1, ntoken), jnp.float32),            # decoder bias = 0
    }
    layers = []
    ki = 2
    for _ in range(nlayers):
        layers.append({
            "wqkv": u(keys[ki + 0], (ninp, 3 * ninp)).astype(mxu_dtype),
            "bqkv": jnp.zeros((1, 3 * ninp), jnp.float32),
            "wo":   u(keys[ki + 1], (ninp, ninp)).astype(mxu_dtype),
            "bo":   jnp.zeros((1, ninp), jnp.float32),
            "w1":   u(keys[ki + 2], (ninp, nhid)).astype(mxu_dtype),
            "b1":   jnp.zeros((1, nhid), jnp.float32),
            "w2":   u(keys[ki + 3], (nhid, ninp)).astype(mxu_dtype),
            "b2":   jnp.zeros((1, ninp), jnp.float32),
            "ln1_g": jnp.ones((1, ninp), jnp.float32),
            "ln1_b": jnp.zeros((1, ninp), jnp.float32),
            "ln2_g": jnp.ones((1, ninp), jnp.float32),
            "ln2_b": jnp.zeros((1, ninp), jnp.float32),
        })
        ki += 4
    params["layers"] = layers
    return params


# ------------------------------ forward pass --------------------------------

def transformer_forward(src_tokens, params, pe, *, nhead, tq=None):
    S, N = src_tokens.shape
    E = params["emb"].shape[1]
    ntoken = params["dec_w"].shape[1]
    nhid = params["layers"][0]["w1"].shape[1]
    assert E % nhead == 0
    M = N * S

    if tq is None:
        tq = _pick_tile(S, (256, 128, 64, 32, 16, 8))
    tm = _pick_tile(M, (512, 256, 128, 64, 32, 16, 8))
    tv = _pick_tile(ntoken, (512, 256, 128))

    cp1 = pltpu.CompilerParams(dimension_semantics=("parallel",),
                               vmem_limit_bytes=_VMEM_BUDGET)
    cp2 = pltpu.CompilerParams(dimension_semantics=("parallel", "parallel"),
                               vmem_limit_bytes=_VMEM_BUDGET)

    # Embedding gather + *sqrt(E) + positional encoding: one fused XLA op
    # (no standalone Pallas round trip); activations stored bf16, batch-first.
    x = (params["emb"][src_tokens.T] * math.sqrt(E) + pe[None]).astype(ACT_DTYPE)  # (N,S,E)

    for layer in params["layers"]:
        # ---- QKV projection (row-tiled over M = N*S) -> bf16 q/k/v slabs ----
        q, k, v = pl.pallas_call(
            functools.partial(_qkv_proj_kernel, q_scale=1.0 / math.sqrt(E // nhead)),
            out_shape=tuple(jax.ShapeDtypeStruct((M, E), ACT_DTYPE) for _ in range(3)),
            grid=(M // tm,),
            in_specs=[pl.BlockSpec((tm, E), lambda i: (i, 0)),
                      pl.BlockSpec((E, 3 * E), lambda i: (0, 0)),
                      pl.BlockSpec((1, 3 * E), lambda i: (0, 0))],
            out_specs=tuple(pl.BlockSpec((tm, E), lambda i: (i, 0)) for _ in range(3)),
            compiler_params=cp1,
        )(x.reshape(M, E), layer["wqkv"], layer["bqkv"])
        q = q.reshape(N, S, E)
        k = k.reshape(N, S, E)
        v = v.reshape(N, S, E)

        # ---- query-tiled causal MHA -> out-proj -> add & LayerNorm1 ----
        x = pl.pallas_call(
            functools.partial(_attn_kernel, nhead=nhead, eps=_LN_EPS),
            out_shape=jax.ShapeDtypeStruct((N, S, E), ACT_DTYPE),
            grid=(N, S // tq),
            in_specs=[
                pl.BlockSpec((1, tq, E), lambda n, i: (n, i, 0)),   # q tile
                pl.BlockSpec((1, S, E), lambda n, i: (n, 0, 0)),    # k (resident over i)
                pl.BlockSpec((1, S, E), lambda n, i: (n, 0, 0)),    # v (resident over i)
                pl.BlockSpec((1, tq, E), lambda n, i: (n, i, 0)),   # residual rows
                pl.BlockSpec((E, E), lambda n, i: (0, 0)),          # wo
                pl.BlockSpec((1, E), lambda n, i: (0, 0)),          # bo
                pl.BlockSpec((1, E), lambda n, i: (0, 0)),          # ln1_g
                pl.BlockSpec((1, E), lambda n, i: (0, 0)),          # ln1_b
            ],
            out_specs=pl.BlockSpec((1, tq, E), lambda n, i: (n, i, 0)),
            scratch_shapes=[pltpu.VMEM((tq, E), jnp.float32)],      # per-head ctx slab
            compiler_params=cp2,
        )(q, k, v, x, layer["wo"], layer["bo"], layer["ln1_g"], layer["ln1_b"])

        # ---- FFN -> add & LayerNorm2 (row-tiled over M = N*S) ----
        x = pl.pallas_call(
            functools.partial(_ffn_kernel, eps=_LN_EPS),
            out_shape=jax.ShapeDtypeStruct((M, E), ACT_DTYPE),
            grid=(M // tm,),
            in_specs=[
                pl.BlockSpec((tm, E), lambda i: (i, 0)),            # x rows
                pl.BlockSpec((E, nhid), lambda i: (0, 0)),          # w1
                pl.BlockSpec((1, nhid), lambda i: (0, 0)),          # b1
                pl.BlockSpec((nhid, E), lambda i: (0, 0)),          # w2
                pl.BlockSpec((1, E), lambda i: (0, 0)),             # b2
                pl.BlockSpec((1, E), lambda i: (0, 0)),             # ln2_g
                pl.BlockSpec((1, E), lambda i: (0, 0)),             # ln2_b
            ],
            out_specs=pl.BlockSpec((tm, E), lambda i: (i, 0)),
            compiler_params=cp1,
        )(x.reshape(M, E), layer["w1"], layer["b1"], layer["w2"], layer["b2"],
          layer["ln2_g"], layer["ln2_b"]).reshape(N, S, E)

    # ---- Decoder: (M, E) @ (E, ntoken); keep the larger operand resident ----
    n_i, n_j = M // tm, ntoken // tv
    w_bytes = E * ntoken * params["dec_w"].dtype.itemsize
    a_bytes = M * E * 2  # bf16 activations
    if w_bytes > a_bytes:
        # vocab outer/slow axis -> the (E, tv) weight tile stays resident
        # across the inner row sweep (weight HBM traffic paid once).
        grid = (n_j, n_i)
        x_map, w_map, b_map, o_map = (lambda j, i: (i, 0), lambda j, i: (0, j),
                                      lambda j, i: (0, j), lambda j, i: (i, j))
    else:
        grid = (n_i, n_j)
        x_map, w_map, b_map, o_map = (lambda i, j: (i, 0), lambda i, j: (0, j),
                                      lambda i, j: (0, j), lambda i, j: (i, j))

    out = pl.pallas_call(
        _decoder_kernel,
        out_shape=jax.ShapeDtypeStruct((M, ntoken), jnp.float32),
        grid=grid,
        in_specs=[pl.BlockSpec((tm, E), x_map),
                  pl.BlockSpec((E, tv), w_map),
                  pl.BlockSpec((1, tv), b_map)],
        out_specs=pl.BlockSpec((tm, tv), o_map),
        compiler_params=cp2,
    )(x.reshape(M, E), params["dec_w"], params["dec_b"])

    # back to the PyTorch seq-first (S, N, ntoken) layout
    return out.reshape(N, S, ntoken).transpose(1, 0, 2)


# ---------------------------------- main -------------------------------------

if __name__ == "__main__":
    # Small but lane-dense shapes (multiples of 128 on lane dims).
    ntoken, ninp, nhead, nhid, nlayers = 256, 128, 4, 256, 2
    S, N = 32, 2   # seq-first: src is (S, N) int tokens

    key = jax.random.PRNGKey(0)
    params = init_params(key, ntoken, ninp, nhead, nhid, nlayers)
    src = jax.random.randint(jax.random.fold_in(key, 999),
                             (S, N), 0, ntoken, dtype=jnp.int32)

    # hoisted positional-encoding table (causal mask is built in-kernel)
    pe = positional_encoding(S, ninp)

    fwd = jax.jit(functools.partial(transformer_forward, nhead=nhead, tq=16))
    out = fwd(src, params, pe)
    out = jax.block_until_ready(out)

    assert out.shape == (S, N, ntoken), out.shape
    assert out.dtype == jnp.float32
    assert bool(jnp.all(jnp.isfinite(out)))
    print("KERNEL_OK")
</pallas_src>

<mosaic_0001>
module attributes {stable_mosaic.version = 11 : i64} {
  func.func @_qkv_proj_kernel(%arg0: i32, %arg1: memref<64x128xbf16, #tpu.memory_space<vmem>>, %arg2: memref<128x384xbf16, #tpu.memory_space<vmem>>, %arg3: memref<1x384xf32, #tpu.memory_space<vmem>>, %arg4: memref<64x128xbf16, #tpu.memory_space<vmem>>, %arg5: memref<64x128xbf16, #tpu.memory_space<vmem>>, %arg6: memref<64x128xbf16, #tpu.memory_space<vmem>>) attributes {dimension_semantics = [#tpu.dimension_semantics<parallel>], iteration_bounds = array<i64: 1>, scalar_prefetch = 0 : i64, scratch_operands = 0 : i64, tpu.core_type = #tpu.core_type<tc>, window_params = [{transform_indices = @transform_0, window_bounds = array<i64: 64, 128>}, {pipeline_mode = #tpu.pipeline_mode<synchronous>, transform_indices = @transform_1, window_bounds = array<i64: 128, 384>}, {pipeline_mode = #tpu.pipeline_mode<synchronous>, transform_indices = @transform_2, window_bounds = array<i64: 1, 384>}, {transform_indices = @transform_3, window_bounds = array<i64: 64, 128>}, {transform_indices = @transform_4, window_bounds = array<i64: 64, 128>}, {transform_indices = @transform_5, window_bounds = array<i64: 64, 128>}]} {
    %c0 = arith.constant 0 : index
    %c0_0 = arith.constant 0 : index
    %0 = vector.load %arg1[%c0, %c0_0] : memref<64x128xbf16, #tpu.memory_space<vmem>>, vector<64x128xbf16>
    %c0_1 = arith.constant 0 : index
    %c0_2 = arith.constant 0 : index
    %1 = vector.load %arg2[%c0_1, %c0_2] : memref<128x384xbf16, #tpu.memory_space<vmem>>, vector<128x384xbf16>
    %cst = arith.constant dense<0.000000e+00> : vector<64x384xf32>
    %2 = tpu.matmul %0, %1, %cst {dimension_numbers = #tpu.dot_dimension_numbers<[1], [0], [0], [1], [0, 0, 1, 1], [], []>} : vector<64x128xbf16>, vector<128x384xbf16>, vector<64x384xf32> -> vector<64x384xf32>
    %c0_3 = arith.constant 0 : index
    %c0_4 = arith.constant 0 : index
    %3 = vector.load %arg3[%c0_3, %c0_4] : memref<1x384xf32, #tpu.memory_space<vmem>>, vector<1x384xf32>
    %4 = vector.broadcast %3 : vector<1x384xf32> to vector<64x384xf32>
    %5 = arith.addf %2, %4 : vector<64x384xf32>
    %6 = vector.extract_strided_slice %5 {offsets = [0, 0], sizes = [64, 128], strides = [1, 1]} : vector<64x384xf32> to vector<64x128xf32>
    %cst_5 = arith.constant 0.176776692 : f32
    %7 = vector.broadcast %cst_5 : f32 to vector<64x128xf32>
    %8 = arith.mulf %6, %7 : vector<64x128xf32>
    %9 = arith.truncf %8 : vector<64x128xf32> to vector<64x128xbf16>
    %c0_6 = arith.constant 0 : index
    %c0_7 = arith.constant 0 : index
    %10 = vector.load %arg4[%c0_6, %c0_7] : memref<64x128xbf16, #tpu.memory_space<vmem>>, vector<64x128xbf16>
    tpu.vector_store %arg4[%c0_6, %c0_7], %9 {strides = array<i32>} : memref<64x128xbf16, #tpu.memory_space<vmem>>, vector<64x128xbf16>,
    %11 = vector.extract_strided_slice %5 {offsets = [0, 128], sizes = [64, 128], strides = [1, 1]} : vector<64x384xf32> to vector<64x128xf32>
    %12 = arith.truncf %11 : vector<64x128xf32> to vector<64x128xbf16>
    %c0_8 = arith.constant 0 : index
    %c0_9 = arith.constant 0 : index
    %13 = vector.load %arg5[%c0_8, %c0_9] : memref<64x128xbf16, #tpu.memory_space<vmem>>, vector<64x128xbf16>
    tpu.vector_store %arg5[%c0_8, %c0_9], %12 {strides = array<i32>} : memref<64x128xbf16, #tpu.memory_space<vmem>>, vector<64x128xbf16>,
    %14 = vector.extract_strided_slice %5 {offsets = [0, 256], sizes = [64, 128], strides = [1, 1]} : vector<64x384xf32> to vector<64x128xf32>
    %15 = arith.truncf %14 : vector<64x128xf32> to vector<64x128xbf16>
    %c0_10 = arith.constant 0 : index
    %c0_11 = arith.constant 0 : index
    %16 = vector.load %arg6[%c0_10, %c0_11] : memref<64x128xbf16, #tpu.memory_space<vmem>>, vector<64x128xbf16>
    tpu.vector_store %arg6[%c0_10, %c0_11], %15 {strides = array<i32>} : memref<64x128xbf16, #tpu.memory_space<vmem>>, vector<64x128xbf16>,
    return
  }
  func.func @transform_0(%arg0: i32) -> (i32, i32) {
    %c0_i32 = arith.constant 0 : i32
    %c0_i32_0 = arith.constant 0 : i32
    return %arg0, %c0_i32 : i32, i32
  }
  func.func @transform_1(%arg0: i32) -> (i32, i32) {
    %c0_i32 = arith.constant 0 : i32
    %c0_i32_0 = arith.constant 0 : i32
    %c0_i32_1 = arith.constant 0 : i32
    return %c0_i32, %c0_i32_0 : i32, i32
  }
  func.func @transform_2(%arg0: i32) -> (i32, i32) {
    %c0_i32 = arith.constant 0 : i32
    %c0_i32_0 = arith.constant 0 : i32
    %c0_i32_1 = arith.constant 0 : i32
    return %c0_i32, %c0_i32_0 : i32, i32
  }
  func.func @transform_3(%arg0: i32) -> (i32, i32) {
    %c0_i32 = arith.constant 0 : i32
    %c0_i32_0 = arith.constant 0 : i32
    return %arg0, %c0_i32 : i32, i32
  }
  func.func @transform_4(%arg0: i32) -> (i32, i32) {
    %c0_i32 = arith.constant 0 : i32
    %c0_i32_0 = arith.constant 0 : i32
    return %arg0, %c0_i32 : i32, i32
  }
  func.func @transform_5(%arg0: i32) -> (i32, i32) {
    %c0_i32 = arith.constant 0 : i32
    %c0_i32_0 = arith.constant 0 : i32
    return %arg0, %c0_i32 : i32, i32
  }
}

module attributes {stable_mosaic.version = 11 : i64} {
  func.func @_ffn_kernel(%arg0: i32, %arg1: memref<64x128xbf16, #tpu.memory_space<vmem>>, %arg2: memref<128x256xbf16, #tpu.memory_space<vmem>>, %arg3: memref<1x256xf32, #tpu.memory_space<vmem>>, %arg4: memref<256x128xbf16, #tpu.memory_space<vmem>>, %arg5: memref<1x128xf32, #tpu.memory_space<vmem>>, %arg6: memref<1x128xf32, #tpu.memory_space<vmem>>, %arg7: memref<1x128xf32, #tpu.memory_space<vmem>>, %arg8: memref<64x128xbf16, #tpu.memory_space<vmem>>) attributes {dimension_semantics = [#tpu.dimension_semantics<parallel>], iteration_bounds = array<i64: 1>, scalar_prefetch = 0 : i64, scratch_operands = 0 : i64, tpu.core_type = #tpu.core_type<tc>, window_params = [{transform_indices = @transform_0, window_bounds = array<i64: 64, 128>}, {pipeline_mode = #tpu.pipeline_mode<synchronous>, transform_indices = @transform_1, window_bounds = array<i64: 128, 256>}, {pipeline_mode = #tpu.pipeline_mode<synchronous>, transform_indices = @transform_2, window_bounds = array<i64: 1, 256>}, {pipeline_mode = #tpu.pipeline_mode<synchronous>, transform_indices = @transform_3, window_bounds = array<i64: 256, 128>}, {pipeline_mode = #tpu.pipeline_mode<synchronous>, transform_indices = @transform_4, window_bounds = array<i64: 1, 128>}, {pipeline_mode = #tpu.pipeline_mode<synchronous>, transform_indices = @transform_5, window_bounds = array<i64: 1, 128>}, {pipeline_mode = #tpu.pipeline_mode<synchronous>, transform_indices = @transform_6, window_bounds = array<i64: 1, 128>}, {transform_indices = @transform_7, window_bounds = array<i64: 64, 128>}]} {
    %c0 = arith.constant 0 : index
    %c0_0 = arith.constant 0 : index
    %0 = vector.load %arg1[%c0, %c0_0] : memref<64x128xbf16, #tpu.memory_space<vmem>>, vector<64x128xbf16>
    %c0_1 = arith.constant 0 : index
    %c0_2 = arith.constant 0 : index
    %1 = vector.load %arg2[%c0_1, %c0_2] : memref<128x256xbf16, #tpu.memory_space<vmem>>, vector<128x256xbf16>
    %cst = arith.constant dense<0.000000e+00> : vector<64x256xf32>
    %2 = tpu.matmul %0, %1, %cst {dimension_numbers = #tpu.dot_dimension_numbers<[1], [0], [0], [1], [0, 0, 1, 1], [], []>} : vector<64x128xbf16>, vector<128x256xbf16>, vector<64x256xf32> -> vector<64x256xf32>
    %c0_3 = arith.constant 0 : index
    %c0_4 = arith.constant 0 : index
    %3 = vector.load %arg3[%c0_3, %c0_4] : memref<1x256xf32, #tpu.memory_space<vmem>>, vector<1x256xf32>
    %4 = vector.broadcast %3 : vector<1x256xf32> to vector<64x256xf32>
    %5 = arith.addf %2, %4 : vector<64x256xf32>
    %cst_5 = arith.constant 0.000000e+00 : f32
    %6 = vector.broadcast %cst_5 : f32 to vector<64x256xf32>
    %7 = arith.maximumf %5, %6 : vector<64x256xf32>
    %8 = arith.truncf %7 : vector<64x256xf32> to vector<64x256xbf16>
    %c0_6 = arith.constant 0 : index
    %c0_7 = arith.constant 0 : index
    %9 = vector.load %arg4[%c0_6, %c0_7] : memref<256x128xbf16, #tpu.memory_space<vmem>>, vector<256x128xbf16>
    %cst_8 = arith.constant dense<0.000000e+00> : vector<64x128xf32>
    %10 = tpu.matmul %8, %9, %cst_8 {dimension_numbers = #tpu.dot_dimension_numbers<[1], [0], [0], [1], [0, 0, 1, 1], [], []>} : vector<64x256xbf16>, vector<256x128xbf16>, vector<64x128xf32> -> vector<64x128xf32>
    %c0_9 = arith.constant 0 : index
    %c0_10 = arith.constant 0 : index
    %11 = vector.load %arg5[%c0_9, %c0_10] : memref<1x128xf32, #tpu.memory_space<vmem>>, vector<1x128xf32>
    %12 = vector.broadcast %11 : vector<1x128xf32> to vector<64x128xf32>
    %13 = arith.addf %10, %12 : vector<64x128xf32>
    %14 = arith.extf %0 : vector<64x128xbf16> to vector<64x128xf32>
    %15 = arith.addf %14, %13 : vector<64x128xf32>
    %cst_11 = arith.constant dense<0.000000e+00> : vector<64xf32>
    %16 = vector.multi_reduction <add>, %15, %cst_11 [1] : vector<64x128xf32> to vector<64xf32>
    %17 = vector.shape_cast %16 : vector<64xf32> to vector<64x1xf32>
    %cst_12 = arith.constant 1.280000e+02 : f32
    %18 = vector.broadcast %cst_12 : f32 to vector<64x1xf32>
    %19 = arith.divf %17, %18 : vector<64x1xf32>
    %20 = vector.broadcast %19 : vector<64x1xf32> to vector<64x128xf32>
    %21 = arith.subf %15, %20 : vector<64x128xf32>
    %22 = arith.mulf %21, %21 : vector<64x128xf32>
    %cst_13 = arith.constant dense<0.000000e+00> : vector<64xf32>
    %23 = vector.multi_reduction <add>, %22, %cst_13 [1] : vector<64x128xf32> to vector<64xf32>
    %24 = vector.shape_cast %23 : vector<64xf32> to vector<64x1xf32>
    %cst_14 = arith.constant 1.280000e+02 : f32
    %25 = vector.broadcast %cst_14 : f32 to vector<64x1xf32>
    %26 = arith.divf %24, %25 : vector<64x1xf32>
    %cst_15 = arith.constant 9.99999974E-6 : f32
    %27 = vector.broadcast %cst_15 : f32 to vector<64x1xf32>
    %28 = arith.addf %26, %27 : vector<64x1xf32>
    %29 = math.rsqrt %28 : vector<64x1xf32>
    %30 = vector.broadcast %29 : vector<64x1xf32> to vector<64x128xf32>
    %31 = arith.mulf %21, %30 : vector<64x128xf32>
    %c0_16 = arith.constant 0 : index
    %c0_17 = arith.constant 0 : index
    %32 = vector.load %arg6[%c0_16, %c0_17] : memref<1x128xf32, #tpu.memory_space<vmem>>, vector<1x128xf32>
    %33 = vector.broadcast %32 : vector<1x128xf32> to vector<64x128xf32>
    %34 = arith.mulf %31, %33 : vector<64x128xf32>
    %c0_18 = arith.constant 0 : index
    %c0_19 = arith.constant 0 : index
    %35 = vector.load %arg7[%c0_18, %c0_19] : memref<1x128xf32, #tpu.memory_space<vmem>>, vector<1x128xf32>
    %36 = vector.broadcast %35 : vector<1x128xf32> to vector<64x128xf32>
    %37 = arith.addf %34, %36 : vector<64x128xf32>
    %38 = arith.truncf %37 : vector<64x128xf32> to vector<64x128xbf16>
    %c0_20 = arith.constant 0 : index
    %c0_21 = arith.constant 0 : index
    %39 = vector.load %arg8[%c0_20, %c0_21] : memref<64x128xbf16, #tpu.memory_space<vmem>>, vector<64x128xbf16>
    tpu.vector_store %arg8[%c0_20, %c0_21], %38 {strides = array<i32>} : memref<64x128xbf16, #tpu.memory_space<vmem>>, vector<64x128xbf16>,
    return
  }
  func.func @transform_0(%arg0: i32) -> (i32, i32) {
    %c0_i32 = arith.constant 0 : i32
    %c0_i32_0 = arith.constant 0 : i32
    return %arg0, %c0_i32 : i32, i32
  }
  func.func @transform_1(%arg0: i32) -> (i32, i32) {
    %c0_i32 = arith.constant 0 : i32
    %c0_i32_0 = arith.constant 0 : i32
    %c0_i32_1 = arith.constant 0 : i32
    return %c0_i32, %c0_i32_0 : i32, i32
  }
  func.func @transform_2(%arg0: i32) -> (i32, i32) {
    %c0_i32 = arith.constant 0 : i32
    %c0_i32_0 = arith.constant 0 : i32
    %c0_i32_1 = arith.constant 0 : i32
    return %c0_i32, %c0_i32_0 : i32, i32
  }
  func.func @transform_3(%arg0: i32) -> (i32, i32) {
    %c0_i32 = arith.constant 0 : i32
    %c0_i32_0 = arith.constant 0 : i32
    %c0_i32_1 = arith.constant 0 : i32
    return %c0_i32, %c0_i32_0 : i32, i32
  }
  func.func @transform_4(%arg0: i32) -> (i32, i32) {
    %c0_i32 = arith.constant 0 : i32
    %c0_i32_0 = arith.constant 0 : i32
    %c0_i32_1 = arith.constant 0 : i32
    return %c0_i32, %c0_i32_0 : i32, i32
  }
  func.func @transform_5(%arg0: i32) -> (i32, i32) {
    %c0_i32 = arith.constant 0 : i32
    %c0_i32_0 = arith.constant 0 : i32
    %c0_i32_1 = arith.constant 0 : i32
    return %c0_i32, %c0_i32_0 : i32, i32
  }
  func.func @transform_6(%arg0: i32) -> (i32, i32) {
    %c0_i32 = arith.constant 0 : i32
    %c0_i32_0 = arith.constant 0 : i32
    %c0_i32_1 = arith.constant 0 : i32
    return %c0_i32, %c0_i32_0 : i32, i32
  }
  func.func @transform_7(%arg0: i32) -> (i32, i32) {
    %c0_i32 = arith.constant 0 : i32
    %c0_i32_0 = arith.constant 0 : i32
    return %arg0, %c0_i32 : i32, i32
  }
}

module attributes {stable_mosaic.version = 11 : i64} {
  func.func @_qkv_proj_kernel(%arg0: i32, %arg1: memref<64x128xbf16, #tpu.memory_space<vmem>>, %arg2: memref<128x384xbf16, #tpu.memory_space<vmem>>, %arg3: memref<1x384xf32, #tpu.memory_space<vmem>>, %arg4: memref<64x128xbf16, #tpu.memory_space<vmem>>, %arg5: memref<64x128xbf16, #tpu.memory_space<vmem>>, %arg6: memref<64x128xbf16, #tpu.memory_space<vmem>>) attributes {dimension_semantics = [#tpu.dimension_semantics<parallel>], iteration_bounds = array<i64: 1>, scalar_prefetch = 0 : i64, scratch_operands = 0 : i64, tpu.core_type = #tpu.core_type<tc>, window_params = [{transform_indices = @transform_0, window_bounds = array<i64: 64, 128>}, {pipeline_mode = #tpu.pipeline_mode<synchronous>, transform_indices = @transform_1, window_bounds = array<i64: 128, 384>}, {pipeline_mode = #tpu.pipeline_mode<synchronous>, transform_indices = @transform_2, window_bounds = array<i64: 1, 384>}, {transform_indices = @transform_3, window_bounds = array<i64: 64, 128>}, {transform_indices = @transform_4, window_bounds = array<i64: 64, 128>}, {transform_indices = @transform_5, window_bounds = array<i64: 64, 128>}]} {
    %c0 = arith.constant 0 : index
    %c0_0 = arith.constant 0 : index
    %0 = vector.load %arg1[%c0, %c0_0] : memref<64x128xbf16, #tpu.memory_space<vmem>>, vector<64x128xbf16>
    %c0_1 = arith.constant 0 : index
    %c0_2 = arith.constant 0 : index
    %1 = vector.load %arg2[%c0_1, %c0_2] : memref<128x384xbf16, #tpu.memory_space<vmem>>, vector<128x384xbf16>
    %cst = arith.constant dense<0.000000e+00> : vector<64x384xf32>
    %2 = tpu.matmul %0, %1, %cst {dimension_numbers = #tpu.dot_dimension_numbers<[1], [0], [0], [1], [0, 0, 1, 1], [], []>} : vector<64x128xbf16>, vector<128x384xbf16>, vector<64x384xf32> -> vector<64x384xf32>
    %c0_3 = arith.constant 0 : index
    %c0_4 = arith.constant 0 : index
    %3 = vector.load %arg3[%c0_3, %c0_4] : memref<1x384xf32, #tpu.memory_space<vmem>>, vector<1x384xf32>
    %4 = vector.broadcast %3 : vector<1x384xf32> to vector<64x384xf32>
    %5 = arith.addf %2, %4 : vector<64x384xf32>
    %6 = vector.extract_strided_slice %5 {offsets = [0, 0], sizes = [64, 128], strides = [1, 1]} : vector<64x384xf32> to vector<64x128xf32>
    %cst_5 = arith.constant 0.176776692 : f32
    %7 = vector.broadcast %cst_5 : f32 to vector<64x128xf32>
    %8 = arith.mulf %6, %7 : vector<64x128xf32>
    %9 = arith.truncf %8 : vector<64x128xf32> to vector<64x128xbf16>
    %c0_6 = arith.constant 0 : index
    %c0_7 = arith.constant 0 : index
    %10 = vector.load %arg4[%c0_6, %c0_7] : memref<64x128xbf16, #tpu.memory_space<vmem>>, vector<64x128xbf16>
    tpu.vector_store %arg4[%c0_6, %c0_7], %9 {strides = array<i32>} : memref<64x128xbf16, #tpu.memory_space<vmem>>, vector<64x128xbf16>,
    %11 = vector.extract_strided_slice %5 {offsets = [0, 128], sizes = [64, 128], strides = [1, 1]} : vector<64x384xf32> to vector<64x128xf32>
    %12 = arith.truncf %11 : vector<64x128xf32> to vector<64x128xbf16>
    %c0_8 = arith.constant 0 : index
    %c0_9 = arith.constant 0 : index
    %13 = vector.load %arg5[%c0_8, %c0_9] : memref<64x128xbf16, #tpu.memory_space<vmem>>, vector<64x128xbf16>
    tpu.vector_store %arg5[%c0_8, %c0_9], %12 {strides = array<i32>} : memref<64x128xbf16, #tpu.memory_space<vmem>>, vector<64x128xbf16>,
    %14 = vector.extract_strided_slice %5 {offsets = [0, 256], sizes = [64, 128], strides = [1, 1]} : vector<64x384xf32> to vector<64x128xf32>
    %15 = arith.truncf %14 : vector<64x128xf32> to vector<64x128xbf16>
    %c0_10 = arith.constant 0 : index
    %c0_11 = arith.constant 0 : index
    %16 = vector.load %arg6[%c0_10, %c0_11] : memref<64x128xbf16, #tpu.memory_space<vmem>>, vector<64x128xbf16>
    tpu.vector_store %arg6[%c0_10, %c0_11], %15 {strides = array<i32>} : memref<64x128xbf16, #tpu.memory_space<vmem>>, vector<64x128xbf16>,
    return
  }
  func.func @transform_0(%arg0: i32) -> (i32, i32) {
    %c0_i32 = arith.constant 0 : i32
    %c0_i32_0 = arith.constant 0 : i32
    return %arg0, %c0_i32 : i32, i32
  }
  func.func @transform_1(%arg0: i32) -> (i32, i32) {
    %c0_i32 = arith.constant 0 : i32
    %c0_i32_0 = arith.constant 0 : i32
    %c0_i32_1 = arith.constant 0 : i32
    return %c0_i32, %c0_i32_0 : i32, i32
  }
  func.func @transform_2(%arg0: i32) -> (i32, i32) {
    %c0_i32 = arith.constant 0 : i32
    %c0_i32_0 = arith.constant 0 : i32
    %c0_i32_1 = arith.constant 0 : i32
    return %c0_i32, %c0_i32_0 : i32, i32
  }
  func.func @transform_3(%arg0: i32) -> (i32, i32) {
    %c0_i32 = arith.constant 0 : i32
    %c0_i32_0 = arith.constant 0 : i32
    return %arg0, %c0_i32 : i32, i32
  }
  func.func @transform_4(%arg0: i32) -> (i32, i32) {
    %c0_i32 = arith.constant 0 : i32
    %c0_i32_0 = arith.constant 0 : i32
    return %arg0, %c0_i32 : i32, i32
  }
  func.func @transform_5(%arg0: i32) -> (i32, i32) {
    %c0_i32 = arith.constant 0 : i32
    %c0_i32_0 = arith.constant 0 : i32
    return %arg0, %c0_i32 : i32, i32
  }
}

module attributes {stable_mosaic.version = 11 : i64} {
  func.func @_attn_kernel(%arg0: i32, %arg1: i32, %arg2: memref<1x16x128xbf16, #tpu.memory_space<vmem>>, %arg3: memref<1x32x128xbf16, #tpu.memory_space<vmem>>, %arg4: memref<1x32x128xbf16, #tpu.memory_space<vmem>>, %arg5: memref<1x16x128xbf16, #tpu.memory_space<vmem>>, %arg6: memref<128x128xbf16, #tpu.memory_space<vmem>>, %arg7: memref<1x128xf32, #tpu.memory_space<vmem>>, %arg8: memref<1x128xf32, #tpu.memory_space<vmem>>, %arg9: memref<1x128xf32, #tpu.memory_space<vmem>>, %arg10: memref<1x16x128xbf16, #tpu.memory_space<vmem>>, %arg11: memref<16x128xf32, #tpu.memory_space<vmem>>) attributes {dimension_semantics = [#tpu.dimension_semantics<parallel>, #tpu.dimension_semantics<parallel>], iteration_bounds = array<i64: 2, 2>, scalar_prefetch = 0 : i64, scratch_operands = 1 : i64, tpu.core_type = #tpu.core_type<tc>, window_params = [{transform_indices = @transform_0, window_bounds = array<i64: 1, 16, 128>}, {transform_indices = @transform_1, window_bounds = array<i64: 1, 32, 128>}, {transform_indices = @transform_2, window_bounds = array<i64: 1, 32, 128>}, {transform_indices = @transform_3, window_bounds = array<i64: 1, 16, 128>}, {pipeline_mode = #tpu.pipeline_mode<synchronous>, transform_indices = @transform_4, window_bounds = array<i64: 128, 128>}, {pipeline_mode = #tpu.pipeline_mode<synchronous>, transform_indices = @transform_5, window_bounds = array<i64: 1, 128>}, {pipeline_mode = #tpu.pipeline_mode<synchronous>, transform_indices = @transform_6, window_bounds = array<i64: 1, 128>}, {pipeline_mode = #tpu.pipeline_mode<synchronous>, transform_indices = @transform_7, window_bounds = array<i64: 1, 128>}, {transform_indices = @transform_8, window_bounds = array<i64: 1, 16, 128>}]} {
    %c0 = arith.constant 0 : index
    %c0_0 = arith.constant 0 : index
    %c0_1 = arith.constant 0 : index
    %0 = vector.load %arg2[%c0, %c0_0, %c0_1] : memref<1x16x128xbf16, #tpu.memory_space<vmem>>, vector<1x16x128xbf16>
    %1 = vector.shape_cast %0 : vector<1x16x128xbf16> to vector<16x128xbf16>
    %c0_2 = arith.constant 0 : index
    %c0_3 = arith.constant 0 : index
    %c0_4 = arith.constant 0 : index
    %2 = vector.load %arg3[%c0_2, %c0_3, %c0_4] : memref<1x32x128xbf16, #tpu.memory_space<vmem>>, vector<1x32x128xbf16>
    %3 = vector.shape_cast %2 : vector<1x32x128xbf16> to vector<32x128xbf16>
    %c0_5 = arith.constant 0 : index
    %c0_6 = arith.constant 0 : index
    %c0_7 = arith.constant 0 : index
    %4 = vector.load %arg4[%c0_5, %c0_6, %c0_7] : memref<1x32x128xbf16, #tpu.memory_space<vmem>>, vector<1x32x128xbf16>
    %5 = vector.shape_cast %4 : vector<1x32x128xbf16> to vector<32x128xbf16>
    %6 = tpu.iota {dimensions = array<i32: 0>} : vector<16x32xi32>
    %c16_i32 = arith.constant 16 : i32
    %7 = arith.muli %arg1, %c16_i32 : i32
    %8 = vector.broadcast %7 : i32 to vector<16x32xi32>
    %9 = arith.addi %6, %8 : vector<16x32xi32>
    %10 = tpu.iota {dimensions = array<i32: 1>} : vector<16x32xi32>
    %11 = arith.cmpi sge, %9, %10 : vector<16x32xi32>
    %12 = vector.extract_strided_slice %1 {offsets = [0, 0], sizes = [16, 32], strides = [1, 1]} : vector<16x128xbf16> to vector<16x32xbf16>
    %13 = vector.extract_strided_slice %3 {offsets = [0, 0], sizes = [32, 32], strides = [1, 1]} : vector<32x128xbf16> to vector<32x32xbf16>
    %cst = arith.constant dense<0.000000e+00> : vector<16x32xf32>
    %14 = tpu.matmul %12, %13, %cst {dimension_numbers = #tpu.dot_dimension_numbers<[1], [1], [0], [0], [0, 0, 1, 0], [], []>} : vector<16x32xbf16>, vector<32x32xbf16>, vector<16x32xf32> -> vector<16x32xf32>
    %cst_8 = arith.constant -1.000000e+30 : f32
    %15 = vector.broadcast %cst_8 : f32 to vector<16x32xf32>
    %16 = arith.select %11, %14, %15 : vector<16x32xi1>, vector<16x32xf32>
    %cst_9 = arith.constant dense<0xFF800000> : vector<16xf32>
    %17 = vector.multi_reduction <maximumf>, %16, %cst_9 [1] : vector<16x32xf32> to vector<16xf32>
    %18 = vector.shape_cast %17 : vector<16xf32> to vector<16x1xf32>
    %19 = vector.broadcast %18 : vector<16x1xf32> to vector<16x32xf32>
    %20 = arith.subf %16, %19 : vector<16x32xf32>
    %21 = math.exp %20 : vector<16x32xf32>
    %cst_10 = arith.constant dense<0.000000e+00> : vector<16xf32>
    %22 = vector.multi_reduction <add>, %21, %cst_10 [1] : vector<16x32xf32> to vector<16xf32>
    %23 = vector.shape_cast %22 : vector<16xf32> to vector<16x1xf32>
    %24 = tpu.reciprocal %23 {approx = true} : vector<16x1xf32> -> vector<16x1xf32>
    %25 = vector.broadcast %24 : vector<16x1xf32> to vector<16x32xf32>
    %26 = arith.mulf %21, %25 : vector<16x32xf32>
    %27 = arith.truncf %26 : vector<16x32xf32> to vector<16x32xbf16>
    %28 = vector.extract_strided_slice %5 {offsets = [0, 0], sizes = [32, 32], strides = [1, 1]} : vector<32x128xbf16> to vector<32x32xbf16>
    %cst_11 = arith.constant dense<0.000000e+00> : vector<16x32xf32>
    %29 = tpu.matmul %27, %28, %cst_11 {dimension_numbers = #tpu.dot_dimension_numbers<[1], [0], [0], [1], [0, 0, 1, 1], [], []>} : vector<16x32xbf16>, vector<32x32xbf16>, vector<16x32xf32> -> vector<16x32xf32>
    %c0_12 = arith.constant 0 : index
    %c0_13 = arith.constant 0 : index
    %30 = vector.load %arg11[%c0_12, %c0_13] : memref<16x128xf32, #tpu.memory_space<vmem>>, vector<16x32xf32>
    tpu.vector_store %arg11[%c0_12, %c0_13], %29 {strides = array<i32>} : memref<16x128xf32, #tpu.memory_space<vmem>>, vector<16x32xf32>,
    %31 = vector.extract_strided_slice %1 {offsets = [0, 32], sizes = [16, 32], strides = [1, 1]} : vector<16x128xbf16> to vector<16x32xbf16>
    %32 = vector.extract_strided_slice %3 {offsets = [0, 32], sizes = [32, 32], strides = [1, 1]} : vector<32x128xbf16> to vector<32x32xbf16>
    %cst_14 = arith.constant dense<0.000000e+00> : vector<16x32xf32>
    %33 = tpu.matmul %31, %32, %cst_14 {dimension_numbers = #tpu.dot_dimension_numbers<[1], [1], [0], [0], [0, 0, 1, 0], [], []>} : vector<16x32xbf16>, vector<32x32xbf16>, vector<16x32xf32> -> vector<16x32xf32>
    %cst_15 = arith.constant -1.000000e+30 : f32
    %34 = vector.broadcast %cst_15 : f32 to vector<16x32xf32>
    %35 = arith.select %11, %33, %34 : vector<16x32xi1>, vector<16x32xf32>
    %cst_16 = arith.constant dense<0xFF800000> : vector<16xf32>
    %36 = vector.multi_reduction <maximumf>, %35, %cst_16 [1] : vector<16x32xf32> to vector<16xf32>
    %37 = vector.shape_cast %36 : vector<16xf32> to vector<16x1xf32>
    %38 = vector.broadcast %37 : vector<16x1xf32> to vector<16x32xf32>
    %39 = arith.subf %35, %38 : vector<16x32xf32>
    %40 = math.exp %39 : vector<16x32xf32>
    %cst_17 = arith.constant dense<0.000000e+00> : vector<16xf32>
    %41 = vector.multi_reduction <add>, %40, %cst_17 [1] : vector<16x32xf32> to vector<16xf32>
    %42 = vector.shape_cast %41 : vector<16xf32> to vector<16x1xf32>
    %43 = tpu.reciprocal %42 {approx = true} : vector<16x1xf32> -> vector<16x1xf32>
    %44 = vector.broadcast %43 : vector<16x1xf32> to vector<16x32xf32>
    %45 = arith.mulf %40, %44 : vector<16x32xf32>
    %46 = arith.truncf %45 : vector<16x32xf32> to vector<16x32xbf16>
    %47 = vector.extract_strided_slice %5 {offsets = [0, 32], sizes = [32, 32], strides = [1, 1]} : vector<32x128xbf16> to vector<32x32xbf16>
    %cst_18 = arith.constant dense<0.000000e+00> : vector<16x32xf32>
    %48 = tpu.matmul %46, %47, %cst_18 {dimension_numbers = #tpu.dot_dimension_numbers<[1], [0], [0], [1], [0, 0, 1, 1], [], []>} : vector<16x32xbf16>, vector<32x32xbf16>, vector<16x32xf32> -> vector<16x32xf32>
    %c0_19 = arith.constant 0 : index
    %c32 = arith.constant 32 : index
    %49 = vector.load %arg11[%c0_19, %c32] : memref<16x128xf32, #tpu.memory_space<vmem>>, vector<16x32xf32>
    tpu.vector_store %arg11[%c0_19, %c32], %48 {strides = array<i32>} : memref<16x128xf32, #tpu.memory_space<vmem>>, vector<16x32xf32>,
    %50 = vector.extract_strided_slice %1 {offsets = [0, 64], sizes = [16, 32], strides = [1, 1]} : vector<16x128xbf16> to vector<16x32xbf16>
    %51 = vector.extract_strided_slice %3 {offsets = [0, 64], sizes = [32, 32], strides = [1, 1]} : vector<32x128xbf16> to vector<32x32xbf16>
    %cst_20 = arith.constant dense<0.000000e+00> : vector<16x32xf32>
    %52 = tpu.matmul %50, %51, %cst_20 {dimension_numbers = #tpu.dot_dimension_numbers<[1], [1], [0], [0], [0, 0, 1, 0], [], []>} : vector<16x32xbf16>, vector<32x32xbf16>, vector<16x32xf32> -> vector<16x32xf32>
    %cst_21 = arith.constant -1.000000e+30 : f32
    %53 = vector.broadcast %cst_21 : f32 to vector<16x32xf32>
    %54 = arith.select %11, %52, %53 : vector<16x32xi1>, vector<16x32xf32>
    %cst_22 = arith.constant dense<0xFF800000> : vector<16xf32>
    %55 = vector.multi_reduction <maximumf>, %54, %cst_22 [1] : vector<16x32xf32> to vector<16xf32>
    %56 = vector.shape_cast %55 : vector<16xf32> to vector<16x1xf32>
    %57 = vector.broadcast %56 : vector<16x1xf32> to vector<16x32xf32>
    %58 = arith.subf %54, %57 : vector<16x32xf32>
    %59 = math.exp %58 : vector<16x32xf32>
    %cst_23 = arith.constant dense<0.000000e+00> : vector<16xf32>
    %60 = vector.multi_reduction <add>, %59, %cst_23 [1] : vector<16x32xf32> to vector<16xf32>
    %61 = vector.shape_cast %60 : vector<16xf32> to vector<16x1xf32>
    %62 = tpu.reciprocal %61 {approx = true} : vector<16x1xf32> -> vector<16x1xf32>
    %63 = vector.broadcast %62 : vector<16x1xf32> to vector<16x32xf32>
    %64 = arith.mulf %59, %63 : vector<16x32xf32>
    %65 = arith.truncf %64 : vector<16x32xf32> to vector<16x32xbf16>
    %66 = vector.extract_strided_slice %5 {offsets = [0, 64], sizes = [32, 32], strides = [1, 1]} : vector<32x128xbf16> to vector<32x32xbf16>
    %cst_24 = arith.constant dense<0.000000e+00> : vector<16x32xf32>
    %67 = tpu.matmul %65, %66, %cst_24 {dimension_numbers = #tpu.dot_dimension_numbers<[1], [0], [0], [1], [0, 0, 1, 1], [], []>} : vector<16x32xbf16>, vector<32x32xbf16>, vector<16x32xf32> -> vector<16x32xf32>
    %c0_25 = arith.constant 0 : index
    %c64 = arith.constant 64 : index
    %68 = vector.load %arg11[%c0_25, %c64] : memref<16x128xf32, #tpu.memory_space<vmem>>, vector<16x32xf32>
    tpu.vector_store %arg11[%c0_25, %c64], %67 {strides = array<i32>} : memref<16x128xf32, #tpu.memory_space<vmem>>, vector<16x32xf32>,
    %69 = vector.extract_strided_slice %1 {offsets = [0, 96], sizes = [16, 32], strides = [1, 1]} : vector<16x128xbf16> to vector<16x32xbf16>
    %70 = vector.extract_strided_slice %3 {offsets = [0, 96], sizes = [32, 32], strides = [1, 1]} : vector<32x128xbf16> to vector<32x32xbf16>
    %cst_26 = arith.constant dense<0.000000e+00> : vector<16x32xf32>
    %71 = tpu.matmul %69, %70, %cst_26 {dimension_numbers = #tpu.dot_dimension_numbers<[1], [1], [0], [0], [0, 0, 1, 0], [], []>} : vector<16x32xbf16>, vector<32x32xbf16>, vector<16x32xf32> -> vector<16x32xf32>
    %cst_27 = arith.constant -1.000000e+30 : f32
    %72 = vector.broadcast %cst_27 : f32 to vector<16x32xf32>
    %73 = arith.select %11, %71, %72 : vector<16x32xi1>, vector<16x32xf32>
    %cst_28 = arith.constant dense<0xFF800000> : vector<16xf32>
    %74 = vector.multi_reduction <maximumf>, %73, %cst_28 [1] : vector<16x32xf32> to vector<16xf32>
    %75 = vector.shape_cast %74 : vector<16xf32> to vector<16x1xf32>
    %76 = vector.broadcast %75 : vector<16x1xf32> to vector<16x32xf32>
    %77 = arith.subf %73, %76 : vector<16x32xf32>
    %78 = math.exp %77 : vector<16x32xf32>
    %cst_29 = arith.constant dense<0.000000e+00> : vector<16xf32>
    %79 = vector.multi_reduction <add>, %78, %cst_29 [1] : vector<16x32xf32> to vector<16xf32>
    %80 = vector.shape_cast %79 : vector<16xf32> to vector<16x1xf32>
    %81 = tpu.reciprocal %80 {approx = true} : vector<16x1xf32> -> vector<16x1xf32>
    %82 = vector.broadcast %81 : vector<16x1xf32> to vector<16x32xf32>
    %83 = arith.mulf %78, %82 : vector<16x32xf32>
    %84 = arith.truncf %83 : vector<16x32xf32> to vector<16x32xbf16>
    %85 = vector.extract_strided_slice %5 {offsets = [0, 96], sizes = [32, 32], strides = [1, 1]} : vector<32x128xbf16> to vector<32x32xbf16>
    %cst_30 = arith.constant dense<0.000000e+00> : vector<16x32xf32>
    %86 = tpu.matmul %84, %85, %cst_30 {dimension_numbers = #tpu.dot_dimension_numbers<[1], [0], [0], [1], [0, 0, 1, 1], [], []>} : vector<16x32xbf16>, vector<32x32xbf16>, vector<16x32xf32> -> vector<16x32xf32>
    %c0_31 = arith.constant 0 : index
    %c96 = arith.constant 96 : index
    %87 = vector.load %arg11[%c0_31, %c96] : memref<16x128xf32, #tpu.memory_space<vmem>>, vector<16x32xf32>
    tpu.vector_store %arg11[%c0_31, %c96], %86 {strides = array<i32>} : memref<16x128xf32, #tpu.memory_space<vmem>>, vector<16x32xf32>,
    %c0_32 = arith.constant 0 : index
    %c0_33 = arith.constant 0 : index
    %88 = vector.load %arg11[%c0_32, %c0_33] : memref<16x128xf32, #tpu.memory_space<vmem>>, vector<16x128xf32>
    %89 = arith.truncf %88 : vector<16x128xf32> to vector<16x128xbf16>
    %c0_34 = arith.constant 0 : index
    %c0_35 = arith.constant 0 : index
    %90 = vector.load %arg6[%c0_34, %c0_35] : memref<128x128xbf16, #tpu.memory_space<vmem>>, vector<128x128xbf16>
    %cst_36 = arith.constant dense<0.000000e+00> : vector<16x128xf32>
    %91 = tpu.matmul %89, %90, %cst_36 {dimension_numbers = #tpu.dot_dimension_numbers<[1], [0], [0], [1], [0, 0, 1, 1], [], []>} : vector<16x128xbf16>, vector<128x128xbf16>, vector<16x128xf32> -> vector<16x128xf32>
    %c0_37 = arith.constant 0 : index
    %c0_38 = arith.constant 0 : index
    %92 = vector.load %arg7[%c0_37, %c0_38] : memref<1x128xf32, #tpu.memory_space<vmem>>, vector<1x128xf32>
    %93 = vector.broadcast %92 : vector<1x128xf32> to vector<16x128xf32>
    %94 = arith.addf %91, %93 : vector<16x128xf32>
    %c0_39 = arith.constant 0 : index
    %c0_40 = arith.constant 0 : index
    %c0_41 = arith.constant 0 : index
    %95 = vector.load %arg5[%c0_39, %c0_40, %c0_41] : memref<1x16x128xbf16, #tpu.memory_space<vmem>>, vector<1x16x128xbf16>
    %96 = vector.shape_cast %95 : vector<1x16x128xbf16> to vector<16x128xbf16>
    %97 = arith.extf %96 : vector<16x128xbf16> to vector<16x128xf32>
    %98 = arith.addf %97, %94 : vector<16x128xf32>
    %cst_42 = arith.constant dense<0.000000e+00> : vector<16xf32>
    %99 = vector.multi_reduction <add>, %98, %cst_42 [1] : vector<16x128xf32> to vector<16xf32>
    %100 = vector.shape_cast %99 : vector<16xf32> to vector<16x1xf32>
    %cst_43 = arith.constant 1.280000e+02 : f32
    %101 = vector.broadcast %cst_43 : f32 to vector<16x1xf32>
    %102 = arith.divf %100, %101 : vector<16x1xf32>
    %103 = vector.broadcast %102 : vector<16x1xf32> to vector<16x128xf32>
    %104 = arith.subf %98, %103 : vector<16x128xf32>
    %105 = arith.mulf %104, %104 : vector<16x128xf32>
    %cst_44 = arith.constant dense<0.000000e+00> : vector<16xf32>
    %106 = vector.multi_reduction <add>, %105, %cst_44 [1] : vector<16x128xf32> to vector<16xf32>
    %107 = vector.shape_cast %106 : vector<16xf32> to vector<16x1xf32>
    %cst_45 = arith.constant 1.280000e+02 : f32
    %108 = vector.broadcast %cst_45 : f32 to vector<16x1xf32>
    %109 = arith.divf %107, %108 : vector<16x1xf32>
    %cst_46 = arith.constant 9.99999974E-6 : f32
    %110 = vector.broadcast %cst_46 : f32 to vector<16x1xf32>
    %111 = arith.addf %109, %110 : vector<16x1xf32>
    %112 = math.rsqrt %111 : vector<16x1xf32>
    %113 = vector.broadcast %112 : vector<16x1xf32> to vector<16x128xf32>
    %114 = arith.mulf %104, %113 : vector<16x128xf32>
    %c0_47 = arith.constant 0 : index
    %c0_48 = arith.constant 0 : index
    %115 = vector.load %arg8[%c0_47, %c0_48] : memref<1x128xf32, #tpu.memory_space<vmem>>, vector<1x128xf32>
    %116 = vector.broadcast %115 : vector<1x128xf32> to vector<16x128xf32>
    %117 = arith.mulf %114, %116 : vector<16x128xf32>
    %c0_49 = arith.constant 0 : index
    %c0_50 = arith.constant 0 : index
    %118 = vector.load %arg9[%c0_49, %c0_50] : memref<1x128xf32, #tpu.memory_space<vmem>>, vector<1x128xf32>
    %119 = vector.broadcast %118 : vector<1x128xf32> to vector<16x128xf32>
    %120 = arith.addf %117, %119 : vector<16x128xf32>
    %121 = arith.truncf %120 : vector<16x128xf32> to vector<16x128xbf16>
    %c0_51 = arith.constant 0 : index
    %c0_52 = arith.constant 0 : index
    %c0_53 = arith.constant 0 : index
    %122 = vector.load %arg10[%c0_51, %c0_52, %c0_53] : memref<1x16x128xbf16, #tpu.memory_space<vmem>>, vector<1x16x128xbf16>
    %123 = vector.shape_cast %122 : vector<1x16x128xbf16> to vector<16x128xbf16>
    %124 = vector.shape_cast %121 : vector<16x128xbf16> to vector<1x16x128xbf16>
    tpu.vector_store %arg10[%c0_51, %c0_52, %c0_53], %124 {strides = array<i32>} : memref<1x16x128xbf16, #tpu.memory_space<vmem>>, vector<1x16x128xbf16>,
    return
  }
  func.func @transform_0(%arg0: i32, %arg1: i32) -> (i32, i32, i32) {
    %c0_i32 = arith.constant 0 : i32
    %c0_i32_0 = arith.constant 0 : i32
    return %arg0, %arg1, %c0_i32 : i32, i32, i32
  }
  func.func @transform_1(%arg0: i32, %arg1: i32) -> (i32, i32, i32) {
    %c0_i32 = arith.constant 0 : i32
    %c0_i32_0 = arith.constant 0 : i32
    %c0_i32_1 = arith.constant 0 : i32
    return %arg0, %c0_i32, %c0_i32_0 : i32, i32, i32
  }
  func.func @transform_2(%arg0: i32, %arg1: i32) -> (i32, i32, i32) {
    %c0_i32 = arith.constant 0 : i32
    %c0_i32_0 = arith.constant 0 : i32
    %c0_i32_1 = arith.constant 0 : i32
    return %arg0, %c0_i32, %c0_i32_0 : i32, i32, i32
  }
  func.func @transform_3(%arg0: i32, %arg1: i32) -> (i32, i32, i32) {
    %c0_i32 = arith.constant 0 : i32
    %c0_i32_0 = arith.constant 0 : i32
    return %arg0, %arg1, %c0_i32 : i32, i32, i32
  }
  func.func @transform_4(%arg0: i32, %arg1: i32) -> (i32, i32) {
    %c0_i32 = arith.constant 0 : i32
    %c0_i32_0 = arith.constant 0 : i32
    %c0_i32_1 = arith.constant 0 : i32
    return %c0_i32, %c0_i32_0 : i32, i32
  }
  func.func @transform_5(%arg0: i32, %arg1: i32) -> (i32, i32) {
    %c0_i32 = arith.constant 0 : i32
    %c0_i32_0 = arith.constant 0 : i32
    %c0_i32_1 = arith.constant 0 : i32
    return %c0_i32, %c0_i32_0 : i32, i32
  }
  func.func @transform_6(%arg0: i32, %arg1: i32) -> (i32, i32) {
    %c0_i32 = arith.constant 0 : i32
    %c0_i32_0 = arith.constant 0 : i32
    %c0_i32_1 = arith.constant 0 : i32
    return %c0_i32, %c0_i32_0 : i32, i32
  }
  func.func @transform_7(%arg0: i32, %arg1: i32) -> (i32, i32) {
    %c0_i32 = arith.constant 0 : i32
    %c0_i32_0 = arith.constant 0 : i32
    %c0_i32_1 = arith.constant 0 : i32
    return %c0_i32, %c0_i32_0 : i32, i32
  }
  func.func @transform_8(%arg0: i32, %arg1: i32) -> (i32, i32, i32) {
    %c0_i32 = arith.constant 0 : i32
    %c0_i32_0 = arith.constant 0 : i32
    return %arg0, %arg1, %c0_i32 : i32, i32, i32
  }
}

module attributes {stable_mosaic.version = 11 : i64} {
  func.func @_attn_kernel(%arg0: i32, %arg1: i32, %arg2: memref<1x16x128xbf16, #tpu.memory_space<vmem>>, %arg3: memref<1x32x128xbf16, #tpu.memory_space<vmem>>, %arg4: memref<1x32x128xbf16, #tpu.memory_space<vmem>>, %arg5: memref<1x16x128xbf16, #tpu.memory_space<vmem>>, %arg6: memref<128x128xbf16, #tpu.memory_space<vmem>>, %arg7: memref<1x128xf32, #tpu.memory_space<vmem>>, %arg8: memref<1x128xf32, #tpu.memory_space<vmem>>, %arg9: memref<1x128xf32, #tpu.memory_space<vmem>>, %arg10: memref<1x16x128xbf16, #tpu.memory_space<vmem>>, %arg11: memref<16x128xf32, #tpu.memory_space<vmem>>) attributes {dimension_semantics = [#tpu.dimension_semantics<parallel>, #tpu.dimension_semantics<parallel>], iteration_bounds = array<i64: 2, 2>, scalar_prefetch = 0 : i64, scratch_operands = 1 : i64, tpu.core_type = #tpu.core_type<tc>, window_params = [{transform_indices = @transform_0, window_bounds = array<i64: 1, 16, 128>}, {transform_indices = @transform_1, window_bounds = array<i64: 1, 32, 128>}, {transform_indices = @transform_2, window_bounds = array<i64: 1, 32, 128>}, {transform_indices = @transform_3, window_bounds = array<i64: 1, 16, 128>}, {pipeline_mode = #tpu.pipeline_mode<synchronous>, transform_indices = @transform_4, window_bounds = array<i64: 128, 128>}, {pipeline_mode = #tpu.pipeline_mode<synchronous>, transform_indices = @transform_5, window_bounds = array<i64: 1, 128>}, {pipeline_mode = #tpu.pipeline_mode<synchronous>, transform_indices = @transform_6, window_bounds = array<i64: 1, 128>}, {pipeline_mode = #tpu.pipeline_mode<synchronous>, transform_indices = @transform_7, window_bounds = array<i64: 1, 128>}, {transform_indices = @transform_8, window_bounds = array<i64: 1, 16, 128>}]} {
    %c0 = arith.constant 0 : index
    %c0_0 = arith.constant 0 : index
    %c0_1 = arith.constant 0 : index
    %0 = vector.load %arg2[%c0, %c0_0, %c0_1] : memref<1x16x128xbf16, #tpu.memory_space<vmem>>, vector<1x16x128xbf16>
    %1 = vector.shape_cast %0 : vector<1x16x128xbf16> to vector<16x128xbf16>
    %c0_2 = arith.constant 0 : index
    %c0_3 = arith.constant 0 : index
    %c0_4 = arith.constant 0 : index
    %2 = vector.load %arg3[%c0_2, %c0_3, %c0_4] : memref<1x32x128xbf16, #tpu.memory_space<vmem>>, vector<1x32x128xbf16>
    %3 = vector.shape_cast %2 : vector<1x32x128xbf16> to vector<32x128xbf16>
    %c0_5 = arith.constant 0 : index
    %c0_6 = arith.constant 0 : index
    %c0_7 = arith.constant 0 : index
    %4 = vector.load %arg4[%c0_5, %c0_6, %c0_7] : memref<1x32x128xbf16, #tpu.memory_space<vmem>>, vector<1x32x128xbf16>
    %5 = vector.shape_cast %4 : vector<1x32x128xbf16> to vector<32x128xbf16>
    %6 = tpu.iota {dimensions = array<i32: 0>} : vector<16x32xi32>
    %c16_i32 = arith.constant 16 : i32
    %7 = arith.muli %arg1, %c16_i32 : i32
    %8 = vector.broadcast %7 : i32 to vector<16x32xi32>
    %9 = arith.addi %6, %8 : vector<16x32xi32>
    %10 = tpu.iota {dimensions = array<i32: 1>} : vector<16x32xi32>
    %11 = arith.cmpi sge, %9, %10 : vector<16x32xi32>
    %12 = vector.extract_strided_slice %1 {offsets = [0, 0], sizes = [16, 32], strides = [1, 1]} : vector<16x128xbf16> to vector<16x32xbf16>
    %13 = vector.extract_strided_slice %3 {offsets = [0, 0], sizes = [32, 32], strides = [1, 1]} : vector<32x128xbf16> to vector<32x32xbf16>
    %cst = arith.constant dense<0.000000e+00> : vector<16x32xf32>
    %14 = tpu.matmul %12, %13, %cst {dimension_numbers = #tpu.dot_dimension_numbers<[1], [1], [0], [0], [0, 0, 1, 0], [], []>} : vector<16x32xbf16>, vector<32x32xbf16>, vector<16x32xf32> -> vector<16x32xf32>
    %cst_8 = arith.constant -1.000000e+30 : f32
    %15 = vector.broadcast %cst_8 : f32 to vector<16x32xf32>
    %16 = arith.select %11, %14, %15 : vector<16x32xi1>, vector<16x32xf32>
    %cst_9 = arith.constant dense<0xFF800000> : vector<16xf32>
    %17 = vector.multi_reduction <maximumf>, %16, %cst_9 [1] : vector<16x32xf32> to vector<16xf32>
    %18 = vector.shape_cast %17 : vector<16xf32> to vector<16x1xf32>
    %19 = vector.broadcast %18 : vector<16x1xf32> to vector<16x32xf32>
    %20 = arith.subf %16, %19 : vector<16x32xf32>
    %21 = math.exp %20 : vector<16x32xf32>
    %cst_10 = arith.constant dense<0.000000e+00> : vector<16xf32>
    %22 = vector.multi_reduction <add>, %21, %cst_10 [1] : vector<16x32xf32> to vector<16xf32>
    %23 = vector.shape_cast %22 : vector<16xf32> to vector<16x1xf32>
    %24 = tpu.reciprocal %23 {approx = true} : vector<16x1xf32> -> vector<16x1xf32>
    %25 = vector.broadcast %24 : vector<16x1xf32> to vector<16x32xf32>
    %26 = arith.mulf %21, %25 : vector<16x32xf32>
    %27 = arith.truncf %26 : vector<16x32xf32> to vector<16x32xbf16>
    %28 = vector.extract_strided_slice %5 {offsets = [0, 0], sizes = [32, 32], strides = [1, 1]} : vector<32x128xbf16> to vector<32x32xbf16>
    %cst_11 = arith.constant dense<0.000000e+00> : vector<16x32xf32>
    %29 = tpu.matmul %27, %28, %cst_11 {dimension_numbers = #tpu.dot_dimension_numbers<[1], [0], [0], [1], [0, 0, 1, 1], [], []>} : vector<16x32xbf16>, vector<32x32xbf16>, vector<16x32xf32> -> vector<16x32xf32>
    %c0_12 = arith.constant 0 : index
    %c0_13 = arith.constant 0 : index
    %30 = vector.load %arg11[%c0_12, %c0_13] : memref<16x128xf32, #tpu.memory_space<vmem>>, vector<16x32xf32>
    tpu.vector_store %arg11[%c0_12, %c0_13], %29 {strides = array<i32>} : memref<16x128xf32, #tpu.memory_space<vmem>>, vector<16x32xf32>,
    %31 = vector.extract_strided_slice %1 {offsets = [0, 32], sizes = [16, 32], strides = [1, 1]} : vector<16x128xbf16> to vector<16x32xbf16>
    %32 = vector.extract_strided_slice %3 {offsets = [0, 32], sizes = [32, 32], strides = [1, 1]} : vector<32x128xbf16> to vector<32x32xbf16>
    %cst_14 = arith.constant dense<0.000000e+00> : vector<16x32xf32>
    %33 = tpu.matmul %31, %32, %cst_14 {dimension_numbers = #tpu.dot_dimension_numbers<[1], [1], [0], [0], [0, 0, 1, 0], [], []>} : vector<16x32xbf16>, vector<32x32xbf16>, vector<16x32xf32> -> vector<16x32xf32>
    %cst_15 = arith.constant -1.000000e+30 : f32
    %34 = vector.broadcast %cst_15 : f32 to vector<16x32xf32>
    %35 = arith.select %11, %33, %34 : vector<16x32xi1>, vector<16x32xf32>
    %cst_16 = arith.constant dense<0xFF800000> : vector<16xf32>
    %36 = vector.multi_reduction <maximumf>, %35, %cst_16 [1] : vector<16x32xf32> to vector<16xf32>
    %37 = vector.shape_cast %36 : vector<16xf32> to vector<16x1xf32>
    %38 = vector.broadcast %37 : vector<16x1xf32> to vector<16x32xf32>
    %39 = arith.subf %35, %38 : vector<16x32xf32>
    %40 = math.exp %39 : vector<16x32xf32>
    %cst_17 = arith.constant dense<0.000000e+00> : vector<16xf32>
    %41 = vector.multi_reduction <add>, %40, %cst_17 [1] : vector<16x32xf32> to vector<16xf32>
    %42 = vector.shape_cast %41 : vector<16xf32> to vector<16x1xf32>
    %43 = tpu.reciprocal %42 {approx = true} : vector<16x1xf32> -> vector<16x1xf32>
    %44 = vector.broadcast %43 : vector<16x1xf32> to vector<16x32xf32>
    %45 = arith.mulf %40, %44 : vector<16x32xf32>
    %46 = arith.truncf %45 : vector<16x32xf32> to vector<16x32xbf16>
    %47 = vector.extract_strided_slice %5 {offsets = [0, 32], sizes = [32, 32], strides = [1, 1]} : vector<32x128xbf16> to vector<32x32xbf16>
    %cst_18 = arith.constant dense<0.000000e+00> : vector<16x32xf32>
    %48 = tpu.matmul %46, %47, %cst_18 {dimension_numbers = #tpu.dot_dimension_numbers<[1], [0], [0], [1], [0, 0, 1, 1], [], []>} : vector<16x32xbf16>, vector<32x32xbf16>, vector<16x32xf32> -> vector<16x32xf32>
    %c0_19 = arith.constant 0 : index
    %c32 = arith.constant 32 : index
    %49 = vector.load %arg11[%c0_19, %c32] : memref<16x128xf32, #tpu.memory_space<vmem>>, vector<16x32xf32>
    tpu.vector_store %arg11[%c0_19, %c32], %48 {strides = array<i32>} : memref<16x128xf32, #tpu.memory_space<vmem>>, vector<16x32xf32>,
    %50 = vector.extract_strided_slice %1 {offsets = [0, 64], sizes = [16, 32], strides = [1, 1]} : vector<16x128xbf16> to vector<16x32xbf16>
    %51 = vector.extract_strided_slice %3 {offsets = [0, 64], sizes = [32, 32], strides = [1, 1]} : vector<32x128xbf16> to vector<32x32xbf16>
    %cst_20 = arith.constant dense<0.000000e+00> : vector<16x32xf32>
    %52 = tpu.matmul %50, %51, %cst_20 {dimension_numbers = #tpu.dot_dimension_numbers<[1], [1], [0], [0], [0, 0, 1, 0], [], []>} : vector<16x32xbf16>, vector<32x32xbf16>, vector<16x32xf32> -> vector<16x32xf32>
    %cst_21 = arith.constant -1.000000e+30 : f32
    %53 = vector.broadcast %cst_21 : f32 to vector<16x32xf32>
    %54 = arith.select %11, %52, %53 : vector<16x32xi1>, vector<16x32xf32>
    %cst_22 = arith.constant dense<0xFF800000> : vector<16xf32>
    %55 = vector.multi_reduction <maximumf>, %54, %cst_22 [1] : vector<16x32xf32> to vector<16xf32>
    %56 = vector.shape_cast %55 : vector<16xf32> to vector<16x1xf32>
    %57 = vector.broadcast %56 : vector<16x1xf32> to vector<16x32xf32>
    %58 = arith.subf %54, %57 : vector<16x32xf32>
    %59 = math.exp %58 : vector<16x32xf32>
    %cst_23 = arith.constant dense<0.000000e+00> : vector<16xf32>
    %60 = vector.multi_reduction <add>, %59, %cst_23 [1] : vector<16x32xf32> to vector<16xf32>
    %61 = vector.shape_cast %60 : vector<16xf32> to vector<16x1xf32>
    %62 = tpu.reciprocal %61 {approx = true} : vector<16x1xf32> -> vector<16x1xf32>
    %63 = vector.broadcast %62 : vector<16x1xf32> to vector<16x32xf32>
    %64 = arith.mulf %59, %63 : vector<16x32xf32>
    %65 = arith.truncf %64 : vector<16x32xf32> to vector<16x32xbf16>
    %66 = vector.extract_strided_slice %5 {offsets = [0, 64], sizes = [32, 32], strides = [1, 1]} : vector<32x128xbf16> to vector<32x32xbf16>
    %cst_24 = arith.constant dense<0.000000e+00> : vector<16x32xf32>
    %67 = tpu.matmul %65, %66, %cst_24 {dimension_numbers = #tpu.dot_dimension_numbers<[1], [0], [0], [1], [0, 0, 1, 1], [], []>} : vector<16x32xbf16>, vector<32x32xbf16>, vector<16x32xf32> -> vector<16x32xf32>
    %c0_25 = arith.constant 0 : index
    %c64 = arith.constant 64 : index
    %68 = vector.load %arg11[%c0_25, %c64] : memref<16x128xf32, #tpu.memory_space<vmem>>, vector<16x32xf32>
    tpu.vector_store %arg11[%c0_25, %c64], %67 {strides = array<i32>} : memref<16x128xf32, #tpu.memory_space<vmem>>, vector<16x32xf32>,
    %69 = vector.extract_strided_slice %1 {offsets = [0, 96], sizes = [16, 32], strides = [1, 1]} : vector<16x128xbf16> to vector<16x32xbf16>
    %70 = vector.extract_strided_slice %3 {offsets = [0, 96], sizes = [32, 32], strides = [1, 1]} : vector<32x128xbf16> to vector<32x32xbf16>
    %cst_26 = arith.constant dense<0.000000e+00> : vector<16x32xf32>
    %71 = tpu.matmul %69, %70, %cst_26 {dimension_numbers = #tpu.dot_dimension_numbers<[1], [1], [0], [0], [0, 0, 1, 0], [], []>} : vector<16x32xbf16>, vector<32x32xbf16>, vector<16x32xf32> -> vector<16x32xf32>
    %cst_27 = arith.constant -1.000000e+30 : f32
    %72 = vector.broadcast %cst_27 : f32 to vector<16x32xf32>
    %73 = arith.select %11, %71, %72 : vector<16x32xi1>, vector<16x32xf32>
    %cst_28 = arith.constant dense<0xFF800000> : vector<16xf32>
    %74 = vector.multi_reduction <maximumf>, %73, %cst_28 [1] : vector<16x32xf32> to vector<16xf32>
    %75 = vector.shape_cast %74 : vector<16xf32> to vector<16x1xf32>
    %76 = vector.broadcast %75 : vector<16x1xf32> to vector<16x32xf32>
    %77 = arith.subf %73, %76 : vector<16x32xf32>
    %78 = math.exp %77 : vector<16x32xf32>
    %cst_29 = arith.constant dense<0.000000e+00> : vector<16xf32>
    %79 = vector.multi_reduction <add>, %78, %cst_29 [1] : vector<16x32xf32> to vector<16xf32>
    %80 = vector.shape_cast %79 : vector<16xf32> to vector<16x1xf32>
    %81 = tpu.reciprocal %80 {approx = true} : vector<16x1xf32> -> vector<16x1xf32>
    %82 = vector.broadcast %81 : vector<16x1xf32> to vector<16x32xf32>
    %83 = arith.mulf %78, %82 : vector<16x32xf32>
    %84 = arith.truncf %83 : vector<16x32xf32> to vector<16x32xbf16>
    %85 = vector.extract_strided_slice %5 {offsets = [0, 96], sizes = [32, 32], strides = [1, 1]} : vector<32x128xbf16> to vector<32x32xbf16>
    %cst_30 = arith.constant dense<0.000000e+00> : vector<16x32xf32>
    %86 = tpu.matmul %84, %85, %cst_30 {dimension_numbers = #tpu.dot_dimension_numbers<[1], [0], [0], [1], [0, 0, 1, 1], [], []>} : vector<16x32xbf16>, vector<32x32xbf16>, vector<16x32xf32> -> vector<16x32xf32>
    %c0_31 = arith.constant 0 : index
    %c96 = arith.constant 96 : index
    %87 = vector.load %arg11[%c0_31, %c96] : memref<16x128xf32, #tpu.memory_space<vmem>>, vector<16x32xf32>
    tpu.vector_store %arg11[%c0_31, %c96], %86 {strides = array<i32>} : memref<16x128xf32, #tpu.memory_space<vmem>>, vector<16x32xf32>,
    %c0_32 = arith.constant 0 : index
    %c0_33 = arith.constant 0 : index
    %88 = vector.load %arg11[%c0_32, %c0_33] : memref<16x128xf32, #tpu.memory_space<vmem>>, vector<16x128xf32>
    %89 = arith.truncf %88 : vector<16x128xf32> to vector<16x128xbf16>
    %c0_34 = arith.constant 0 : index
    %c0_35 = arith.constant 0 : index
    %90 = vector.load %arg6[%c0_34, %c0_35] : memref<128x128xbf16, #tpu.memory_space<vmem>>, vector<128x128xbf16>
    %cst_36 = arith.constant dense<0.000000e+00> : vector<16x128xf32>
    %91 = tpu.matmul %89, %90, %cst_36 {dimension_numbers = #tpu.dot_dimension_numbers<[1], [0], [0], [1], [0, 0, 1, 1], [], []>} : vector<16x128xbf16>, vector<128x128xbf16>, vector<16x128xf32> -> vector<16x128xf32>
    %c0_37 = arith.constant 0 : index
    %c0_38 = arith.constant 0 : index
    %92 = vector.load %arg7[%c0_37, %c0_38] : memref<1x128xf32, #tpu.memory_space<vmem>>, vector<1x128xf32>
    %93 = vector.broadcast %92 : vector<1x128xf32> to vector<16x128xf32>
    %94 = arith.addf %91, %93 : vector<16x128xf32>
    %c0_39 = arith.constant 0 : index
    %c0_40 = arith.constant 0 : index
    %c0_41 = arith.constant 0 : index
    %95 = vector.load %arg5[%c0_39, %c0_40, %c0_41] : memref<1x16x128xbf16, #tpu.memory_space<vmem>>, vector<1x16x128xbf16>
    %96 = vector.shape_cast %95 : vector<1x16x128xbf16> to vector<16x128xbf16>
    %97 = arith.extf %96 : vector<16x128xbf16> to vector<16x128xf32>
    %98 = arith.addf %97, %94 : vector<16x128xf32>
    %cst_42 = arith.constant dense<0.000000e+00> : vector<16xf32>
    %99 = vector.multi_reduction <add>, %98, %cst_42 [1] : vector<16x128xf32> to vector<16xf32>
    %100 = vector.shape_cast %99 : vector<16xf32> to vector<16x1xf32>
    %cst_43 = arith.constant 1.280000e+02 : f32
    %101 = vector.broadcast %cst_43 : f32 to vector<16x1xf32>
    %102 = arith.divf %100, %101 : vector<16x1xf32>
    %103 = vector.broadcast %102 : vector<16x1xf32> to vector<16x128xf32>
    %104 = arith.subf %98, %103 : vector<16x128xf32>
    %105 = arith.mulf %104, %104 : vector<16x128xf32>
    %cst_44 = arith.constant dense<0.000000e+00> : vector<16xf32>
    %106 = vector.multi_reduction <add>, %105, %cst_44 [1] : vector<16x128xf32> to vector<16xf32>
    %107 = vector.shape_cast %106 : vector<16xf32> to vector<16x1xf32>
    %cst_45 = arith.constant 1.280000e+02 : f32
    %108 = vector.broadcast %cst_45 : f32 to vector<16x1xf32>
    %109 = arith.divf %107, %108 : vector<16x1xf32>
    %cst_46 = arith.constant 9.99999974E-6 : f32
    %110 = vector.broadcast %cst_46 : f32 to vector<16x1xf32>
    %111 = arith.addf %109, %110 : vector<16x1xf32>
    %112 = math.rsqrt %111 : vector<16x1xf32>
    %113 = vector.broadcast %112 : vector<16x1xf32> to vector<16x128xf32>
    %114 = arith.mulf %104, %113 : vector<16x128xf32>
    %c0_47 = arith.constant 0 : index
    %c0_48 = arith.constant 0 : index
    %115 = vector.load %arg8[%c0_47, %c0_48] : memref<1x128xf32, #tpu.memory_space<vmem>>, vector<1x128xf32>
    %116 = vector.broadcast %115 : vector<1x128xf32> to vector<16x128xf32>
    %117 = arith.mulf %114, %116 : vector<16x128xf32>
    %c0_49 = arith.constant 0 : index
    %c0_50 = arith.constant 0 : index
    %118 = vector.load %arg9[%c0_49, %c0_50] : memref<1x128xf32, #tpu.memory_space<vmem>>, vector<1x128xf32>
    %119 = vector.broadcast %118 : vector<1x128xf32> to vector<16x128xf32>
    %120 = arith.addf %117, %119 : vector<16x128xf32>
    %121 = arith.truncf %120 : vector<16x128xf32> to vector<16x128xbf16>
    %c0_51 = arith.constant 0 : index
    %c0_52 = arith.constant 0 : index
    %c0_53 = arith.constant 0 : index
    %122 = vector.load %arg10[%c0_51, %c0_52, %c0_53] : memref<1x16x128xbf16, #tpu.memory_space<vmem>>, vector<1x16x128xbf16>
    %123 = vector.shape_cast %122 : vector<1x16x128xbf16> to vector<16x128xbf16>
    %124 = vector.shape_cast %121 : vector<16x128xbf16> to vector<1x16x128xbf16>
    tpu.vector_store %arg10[%c0_51, %c0_52, %c0_53], %124 {strides = array<i32>} : memref<1x16x128xbf16, #tpu.memory_space<vmem>>, vector<1x16x128xbf16>,
    return
  }
  func.func @transform_0(%arg0: i32, %arg1: i32) -> (i32, i32, i32) {
    %c0_i32 = arith.constant 0 : i32
    %c0_i32_0 = arith.constant 0 : i32
    return %arg0, %arg1, %c0_i32 : i32, i32, i32
  }
  func.func @transform_1(%arg0: i32, %arg1: i32) -> (i32, i32, i32) {
    %c0_i32 = arith.constant 0 : i32
    %c0_i32_0 = arith.constant 0 : i32
    %c0_i32_1 = arith.constant 0 : i32
    return %arg0, %c0_i32, %c0_i32_0 : i32, i32, i32
  }
  func.func @transform_2(%arg0: i32, %arg1: i32) -> (i32, i32, i32) {
    %c0_i32 = arith.constant 0 : i32
    %c0_i32_0 = arith.constant 0 : i32
    %c0_i32_1 = arith.constant 0 : i32
    return %arg0, %c0_i32, %c0_i32_0 : i32, i32, i32
  }
  func.func @transform_3(%arg0: i32, %arg1: i32) -> (i32, i32, i32) {
    %c0_i32 = arith.constant 0 : i32
    %c0_i32_0 = arith.constant 0 : i32
    return %arg0, %arg1, %c0_i32 : i32, i32, i32
  }
  func.func @transform_4(%arg0: i32, %arg1: i32) -> (i32, i32) {
    %c0_i32 = arith.constant 0 : i32
    %c0_i32_0 = arith.constant 0 : i32
    %c0_i32_1 = arith.constant 0 : i32
    return %c0_i32, %c0_i32_0 : i32, i32
  }
  func.func @transform_5(%arg0: i32, %arg1: i32) -> (i32, i32) {
    %c0_i32 = arith.constant 0 : i32
    %c0_i32_0 = arith.constant 0 : i32
    %c0_i32_1 = arith.constant 0 : i32
    return %c0_i32, %c0_i32_0 : i32, i32
  }
  func.func @transform_6(%arg0: i32, %arg1: i32) -> (i32, i32) {
    %c0_i32 = arith.constant 0 : i32
    %c0_i32_0 = arith.constant 0 : i32
    %c0_i32_1 = arith.constant 0 : i32
    return %c0_i32, %c0_i32_0 : i32, i32
  }
  func.func @transform_7(%arg0: i32, %arg1: i32) -> (i32, i32) {
    %c0_i32 = arith.constant 0 : i32
    %c0_i32_0 = arith.constant 0 : i32
    %c0_i32_1 = arith.constant 0 : i32
    return %c0_i32, %c0_i32_0 : i32, i32
  }
  func.func @transform_8(%arg0: i32, %arg1: i32) -> (i32, i32, i32) {
    %c0_i32 = arith.constant 0 : i32
    %c0_i32_0 = arith.constant 0 : i32
    return %arg0, %arg1, %c0_i32 : i32, i32, i32
  }
}

module attributes {stable_mosaic.version = 11 : i64} {
  func.func @_ffn_kernel(%arg0: i32, %arg1: memref<64x128xbf16, #tpu.memory_space<vmem>>, %arg2: memref<128x256xbf16, #tpu.memory_space<vmem>>, %arg3: memref<1x256xf32, #tpu.memory_space<vmem>>, %arg4: memref<256x128xbf16, #tpu.memory_space<vmem>>, %arg5: memref<1x128xf32, #tpu.memory_space<vmem>>, %arg6: memref<1x128xf32, #tpu.memory_space<vmem>>, %arg7: memref<1x128xf32, #tpu.memory_space<vmem>>, %arg8: memref<64x128xbf16, #tpu.memory_space<vmem>>) attributes {dimension_semantics = [#tpu.dimension_semantics<parallel>], iteration_bounds = array<i64: 1>, scalar_prefetch = 0 : i64, scratch_operands = 0 : i64, tpu.core_type = #tpu.core_type<tc>, window_params = [{transform_indices = @transform_0, window_bounds = array<i64: 64, 128>}, {pipeline_mode = #tpu.pipeline_mode<synchronous>, transform_indices = @transform_1, window_bounds = array<i64: 128, 256>}, {pipeline_mode = #tpu.pipeline_mode<synchronous>, transform_indices = @transform_2, window_bounds = array<i64: 1, 256>}, {pipeline_mode = #tpu.pipeline_mode<synchronous>, transform_indices = @transform_3, window_bounds = array<i64: 256, 128>}, {pipeline_mode = #tpu.pipeline_mode<synchronous>, transform_indices = @transform_4, window_bounds = array<i64: 1, 128>}, {pipeline_mode = #tpu.pipeline_mode<synchronous>, transform_indices = @transform_5, window_bounds = array<i64: 1, 128>}, {pipeline_mode = #tpu.pipeline_mode<synchronous>, transform_indices = @transform_6, window_bounds = array<i64: 1, 128>}, {transform_indices = @transform_7, window_bounds = array<i64: 64, 128>}]} {
    %c0 = arith.constant 0 : index
    %c0_0 = arith.constant 0 : index
    %0 = vector.load %arg1[%c0, %c0_0] : memref<64x128xbf16, #tpu.memory_space<vmem>>, vector<64x128xbf16>
    %c0_1 = arith.constant 0 : index
    %c0_2 = arith.constant 0 : index
    %1 = vector.load %arg2[%c0_1, %c0_2] : memref<128x256xbf16, #tpu.memory_space<vmem>>, vector<128x256xbf16>
    %cst = arith.constant dense<0.000000e+00> : vector<64x256xf32>
    %2 = tpu.matmul %0, %1, %cst {dimension_numbers = #tpu.dot_dimension_numbers<[1], [0], [0], [1], [0, 0, 1, 1], [], []>} : vector<64x128xbf16>, vector<128x256xbf16>, vector<64x256xf32> -> vector<64x256xf32>
    %c0_3 = arith.constant 0 : index
    %c0_4 = arith.constant 0 : index
    %3 = vector.load %arg3[%c0_3, %c0_4] : memref<1x256xf32, #tpu.memory_space<vmem>>, vector<1x256xf32>
    %4 = vector.broadcast %3 : vector<1x256xf32> to vector<64x256xf32>
    %5 = arith.addf %2, %4 : vector<64x256xf32>
    %cst_5 = arith.constant 0.000000e+00 : f32
    %6 = vector.broadcast %cst_5 : f32 to vector<64x256xf32>
    %7 = arith.maximumf %5, %6 : vector<64x256xf32>
    %8 = arith.truncf %7 : vector<64x256xf32> to vector<64x256xbf16>
    %c0_6 = arith.constant 0 : index
    %c0_7 = arith.constant 0 : index
    %9 = vector.load %arg4[%c0_6, %c0_7] : memref<256x128xbf16, #tpu.memory_space<vmem>>, vector<256x128xbf16>
    %cst_8 = arith.constant dense<0.000000e+00> : vector<64x128xf32>
    %10 = tpu.matmul %8, %9, %cst_8 {dimension_numbers = #tpu.dot_dimension_numbers<[1], [0], [0], [1], [0, 0, 1, 1], [], []>} : vector<64x256xbf16>, vector<256x128xbf16>, vector<64x128xf32> -> vector<64x128xf32>
    %c0_9 = arith.constant 0 : index
    %c0_10 = arith.constant 0 : index
    %11 = vector.load %arg5[%c0_9, %c0_10] : memref<1x128xf32, #tpu.memory_space<vmem>>, vector<1x128xf32>
    %12 = vector.broadcast %11 : vector<1x128xf32> to vector<64x128xf32>
    %13 = arith.addf %10, %12 : vector<64x128xf32>
    %14 = arith.extf %0 : vector<64x128xbf16> to vector<64x128xf32>
    %15 = arith.addf %14, %13 : vector<64x128xf32>
    %cst_11 = arith.constant dense<0.000000e+00> : vector<64xf32>
    %16 = vector.multi_reduction <add>, %15, %cst_11 [1] : vector<64x128xf32> to vector<64xf32>
    %17 = vector.shape_cast %16 : vector<64xf32> to vector<64x1xf32>
    %cst_12 = arith.constant 1.280000e+02 : f32
    %18 = vector.broadcast %cst_12 : f32 to vector<64x1xf32>
    %19 = arith.divf %17, %18 : vector<64x1xf32>
    %20 = vector.broadcast %19 : vector<64x1xf32> to vector<64x128xf32>
    %21 = arith.subf %15, %20 : vector<64x128xf32>
    %22 = arith.mulf %21, %21 : vector<64x128xf32>
    %cst_13 = arith.constant dense<0.000000e+00> : vector<64xf32>
    %23 = vector.multi_reduction <add>, %22, %cst_13 [1] : vector<64x128xf32> to vector<64xf32>
    %24 = vector.shape_cast %23 : vector<64xf32> to vector<64x1xf32>
    %cst_14 = arith.constant 1.280000e+02 : f32
    %25 = vector.broadcast %cst_14 : f32 to vector<64x1xf32>
    %26 = arith.divf %24, %25 : vector<64x1xf32>
    %cst_15 = arith.constant 9.99999974E-6 : f32
    %27 = vector.broadcast %cst_15 : f32 to vector<64x1xf32>
    %28 = arith.addf %26, %27 : vector<64x1xf32>
    %29 = math.rsqrt %28 : vector<64x1xf32>
    %30 = vector.broadcast %29 : vector<64x1xf32> to vector<64x128xf32>
    %31 = arith.mulf %21, %30 : vector<64x128xf32>
    %c0_16 = arith.constant 0 : index
    %c0_17 = arith.constant 0 : index
    %32 = vector.load %arg6[%c0_16, %c0_17] : memref<1x128xf32, #tpu.memory_space<vmem>>, vector<1x128xf32>
    %33 = vector.broadcast %32 : vector<1x128xf32> to vector<64x128xf32>
    %34 = arith.mulf %31, %33 : vector<64x128xf32>
    %c0_18 = arith.constant 0 : index
    %c0_19 = arith.constant 0 : index
    %35 = vector.load %arg7[%c0_18, %c0_19] : memref<1x128xf32, #tpu.memory_space<vmem>>, vector<1x128xf32>
    %36 = vector.broadcast %35 : vector<1x128xf32> to vector<64x128xf32>
    %37 = arith.addf %34, %36 : vector<64x128xf32>
    %38 = arith.truncf %37 : vector<64x128xf32> to vector<64x128xbf16>
    %c0_20 = arith.constant 0 : index
    %c0_21 = arith.constant 0 : index
    %39 = vector.load %arg8[%c0_20, %c0_21] : memref<64x128xbf16, #tpu.memory_space<vmem>>, vector<64x128xbf16>
    tpu.vector_store %arg8[%c0_20, %c0_21], %38 {strides = array<i32>} : memref<64x128xbf16, #tpu.memory_space<vmem>>, vector<64x128xbf16>,
    return
  }
  func.func @transform_0(%arg0: i32) -> (i32, i32) {
    %c0_i32 = arith.constant 0 : i32
    %c0_i32_0 = arith.constant 0 : i32
    return %arg0, %c0_i32 : i32, i32
  }
  func.func @transform_1(%arg0: i32) -> (i32, i32) {
    %c0_i32 = arith.constant 0 : i32
    %c0_i32_0 = arith.constant 0 : i32
    %c0_i32_1 = arith.constant 0 : i32
    return %c0_i32, %c0_i32_0 : i32, i32
  }
  func.func @transform_2(%arg0: i32) -> (i32, i32) {
    %c0_i32 = arith.constant 0 : i32
    %c0_i32_0 = arith.constant 0 : i32
    %c0_i32_1 = arith.constant 0 : i32
    return %c0_i32, %c0_i32_0 : i32, i32
  }
  func.func @transform_3(%arg0: i32) -> (i32, i32) {
    %c0_i32 = arith.constant 0 : i32
    %c0_i32_0 = arith.constant 0 : i32
    %c0_i32_1 = arith.constant 0 : i32
    return %c0_i32, %c0_i32_0 : i32, i32
  }
  func.func @transform_4(%arg0: i32) -> (i32, i32) {
    %c0_i32 = arith.constant 0 : i32
    %c0_i32_0 = arith.constant 0 : i32
    %c0_i32_1 = arith.constant 0 : i32
    return %c0_i32, %c0_i32_0 : i32, i32
  }
  func.func @transform_5(%arg0: i32) -> (i32, i32) {
    %c0_i32 = arith.constant 0 : i32
    %c0_i32_0 = arith.constant 0 : i32
    %c0_i32_1 = arith.constant 0 : i32
    return %c0_i32, %c0_i32_0 : i32, i32
  }
  func.func @transform_6(%arg0: i32) -> (i32, i32) {
    %c0_i32 = arith.constant 0 : i32
    %c0_i32_0 = arith.constant 0 : i32
    %c0_i32_1 = arith.constant 0 : i32
    return %c0_i32, %c0_i32_0 : i32, i32
  }
  func.func @transform_7(%arg0: i32) -> (i32, i32) {
    %c0_i32 = arith.constant 0 : i32
    %c0_i32_0 = arith.constant 0 : i32
    return %arg0, %c0_i32 : i32, i32
  }
}

module attributes {stable_mosaic.version = 11 : i64} {
  func.func @_decoder_kernel(%arg0: i32, %arg1: i32, %arg2: memref<64x128xbf16, #tpu.memory_space<vmem>>, %arg3: memref<128x256xbf16, #tpu.memory_space<vmem>>, %arg4: memref<1x256xf32, #tpu.memory_space<vmem>>, %arg5: memref<64x256xf32, #tpu.memory_space<vmem>>) attributes {dimension_semantics = [#tpu.dimension_semantics<parallel>, #tpu.dimension_semantics<parallel>], iteration_bounds = array<i64: 1, 1>, scalar_prefetch = 0 : i64, scratch_operands = 0 : i64, tpu.core_type = #tpu.core_type<tc>, window_params = [{transform_indices = @transform_0, window_bounds = array<i64: 64, 128>}, {transform_indices = @transform_1, window_bounds = array<i64: 128, 256>}, {transform_indices = @transform_2, window_bounds = array<i64: 1, 256>}, {transform_indices = @transform_3, window_bounds = array<i64: 64, 256>}]} {
    %c0 = arith.constant 0 : index
    %c0_0 = arith.constant 0 : index
    %0 = vector.load %arg2[%c0, %c0_0] : memref<64x128xbf16, #tpu.memory_space<vmem>>, vector<64x128xbf16>
    %c0_1 = arith.constant 0 : index
    %c0_2 = arith.constant 0 : index
    %1 = vector.load %arg3[%c0_1, %c0_2] : memref<128x256xbf16, #tpu.memory_space<vmem>>, vector<128x256xbf16>
    %cst = arith.constant dense<0.000000e+00> : vector<64x256xf32>
    %2 = tpu.matmul %0, %1, %cst {dimension_numbers = #tpu.dot_dimension_numbers<[1], [0], [0], [1], [0, 0, 1, 1], [], []>} : vector<64x128xbf16>, vector<128x256xbf16>, vector<64x256xf32> -> vector<64x256xf32>
    %c0_3 = arith.constant 0 : index
    %c0_4 = arith.constant 0 : index
    %3 = vector.load %arg4[%c0_3, %c0_4] : memref<1x256xf32, #tpu.memory_space<vmem>>, vector<1x256xf32>
    %4 = vector.broadcast %3 : vector<1x256xf32> to vector<64x256xf32>
    %5 = arith.addf %2, %4 : vector<64x256xf32>
    %c0_5 = arith.constant 0 : index
    %c0_6 = arith.constant 0 : index
    %6 = vector.load %arg5[%c0_5, %c0_6] : memref<64x256xf32, #tpu.memory_space<vmem>>, vector<64x256xf32>
    tpu.vector_store %arg5[%c0_5, %c0_6], %5 {strides = array<i32>} : memref<64x256xf32, #tpu.memory_space<vmem>>, vector<64x256xf32>,
    return
  }
  func.func @transform_0(%arg0: i32, %arg1: i32) -> (i32, i32) {
    %c0_i32 = arith.constant 0 : i32
    %c0_i32_0 = arith.constant 0 : i32
    return %arg1, %c0_i32 : i32, i32
  }
  func.func @transform_1(%arg0: i32, %arg1: i32) -> (i32, i32) {
    %c0_i32 = arith.constant 0 : i32
    %c0_i32_0 = arith.constant 0 : i32
    return %c0_i32, %arg0 : i32, i32
  }
  func.func @transform_2(%arg0: i32, %arg1: i32) -> (i32, i32) {
    %c0_i32 = arith.constant 0 : i32
    %c0_i32_0 = arith.constant 0 : i32
    return %c0_i32, %arg0 : i32, i32
  }
  func.func @transform_3(%arg0: i32, %arg1: i32) -> (i32, i32) {
    %c0_i32 = arith.constant 0 : i32
    return %arg1, %arg0 : i32, i32
  }
}

</mosaic_0001>

<llo_original>
// kernel: transformer_forward.7
$region0: #{transformer_forward.7}
  #allocation0 [shape = 'u32[]', space=smem, size = 0x4, offset = 0x4, fixed_abs, tag = 'smem constant byte address 0x4 - core index']
  #allocation1 [shape = 'u32[72,128]{1,0:T(1,128)}', space=vmem, size = 0x9000, scoped, tag = 'internal scratch']
  %s0 = inlined_call_operand.vmem [shape: bf16[64,128], index: 0, kind: input, shape index: {}]
  %s1 = inlined_call_operand.vmem [shape: bf16[128,384], index: 1, kind: input, shape index: {}]
  %s2 = inlined_call_operand.hbm [shape: f32[1,384], index: 2, kind: input, shape index: {}]
  %s3 = inlined_call_operand.vmem [shape: bf16[64,128], index: 3, kind: output, shape index: {0}]
  %s4 = inlined_call_operand.vmem [shape: bf16[64,128], index: 4, kind: output, shape index: {1}]
  %s5 = inlined_call_operand.vmem [shape: bf16[64,128], index: 5, kind: output, shape index: {2}]
  %6 = xla_tuple %s3, %s4, %s5
  %s7 = sld [smem:[#allocation0]]
  $region42: #{transformer_forward.7} parent=0
    _
  %s9 = ssub.s32 1, %s7
  %s10 = scalar_select 0, %s9, %s7
  $region1: #{transformer_forward.7} parent=0
    #allocation2 [shape = 'u8[1536]{0}', space=vmem, size = 0x800, scoped, tag = 'input window, operand 2, single buffered']
    #allocation3 [shape = 's32[1]{0}', space=sflag, size = 0x4, scoped, tag = 'scoped memory for transformer_forward.7']
    %11 = vsyncpa [#allocation3], 0
    // Predicated region
    $region2: #{transformer_forward.7} parent=1 // pred_check
      _
    $region3: #{transformer_forward.7} parent=1 // pred_check_branch
      %13 = sbr.rel (0) target = $region5
    $region4: #{transformer_forward.7} parent=1 // pred_region
      _
    $region5: #{transformer_forward.7} parent=1 // pred_fallthru
      _
    // Predicated region
    $region6: #{transformer_forward.7} parent=1 // pred_check
      _
    $region7: #{transformer_forward.7} parent=1 // pred_check_branch
      %15 = sbr.rel (0) target = $region9
    $region8: #{transformer_forward.7} parent=1 // pred_region
      _
    $region9: #{transformer_forward.7} parent=1 // pred_fallthru
      _
    // Predicated region
    $region10: #{transformer_forward.7} parent=1 // pred_check
      _
    $region11: #{transformer_forward.7} parent=1 // pred_check_branch
      %17 = sbr.rel (0) target = $region13
    $region12: #{transformer_forward.7} parent=1 // pred_region
      %19 = vsyncadd [#allocation3], 0
      %s21 = sshll.u32 %s2, 4
      %s22 = int_to_ptr.hbm [resolvable:$true] %s21
      %s23 = sshll.u32 [#allocation2], 4
      %s24 = int_to_ptr.vmem [resolvable:$true] %s23
      %26 = dma.hbm_to_vmem [thread:$0]  %s22, 48, %s24, [#allocation3]
    $region13: #{transformer_forward.7} parent=1 // pred_fallthru
      _
    // Predicated region
    $region14: #{transformer_forward.7} parent=1 // pred_check
      _
    $region15: #{transformer_forward.7} parent=1 // pred_check_branch
      %28 = sbr.rel (0) target = $region17
    $region16: #{transformer_forward.7} parent=1 // pred_region
      %30 = dma.done [#allocation3], 48
    $region17: #{transformer_forward.7} parent=1 // pred_fallthru
      _
    %v31 = vld [vmem:[%s0] sm:$0xf]
    %v32 = vld [vmem:[%s0 + $0x4] sm:$0xf]
    %v33 = vld [vmem:[%s0 + $0x8] sm:$0xf]
    %v34 = vld [vmem:[%s0 + $0xc] sm:$0xf]
    %v35 = vld [vmem:[%s0 + $0x10] sm:$0xf]
    %v36 = vld [vmem:[%s0 + $0x14] sm:$0xf]
    %v37 = vld [vmem:[%s0 + $0x18] sm:$0xf]
    %v38 = vld [vmem:[%s0 + $0x1c] sm:$0xf]
    %v39 = vld [vmem:[%s1] sm:$0xff]
    %v40 = vld [vmem:[%s1 + $0x8] sm:$0xf]
    %v41 = vld [vmem:[%s1 + $0xc] sm:$0xff]
    %v42 = vld [vmem:[%s1 + $0x14] sm:$0xf]
    %v43 = vld [vmem:[%s1 + $0x18] sm:$0xff]
    %v44 = vld [vmem:[%s1 + $0x20] sm:$0xf]
    %v45 = vld [vmem:[%s1 + $0x24] sm:$0xff]
    %v46 = vld [vmem:[%s1 + $0x2c] sm:$0xf]
    %v47 = vld [vmem:[%s1 + $0x30] sm:$0xff]
    %v48 = vld [vmem:[%s1 + $0x38] sm:$0xf]
    %v49 = vld [vmem:[%s1 + $0x3c] sm:$0xff]
    %v50 = vld [vmem:[%s1 + $0x44] sm:$0xf]
    %v51 = vld [vmem:[%s1 + $0x48] sm:$0xff]
    %v52 = vld [vmem:[%s1 + $0x50] sm:$0xf]
    %v53 = vld [vmem:[%s1 + $0x54] sm:$0xff]
    %v54 = vld [vmem:[%s1 + $0x5c] sm:$0xf]
    %v55 = vld [vmem:[%s1 + $0x60] sm:$0xff]
    %v56 = vld [vmem:[%s1 + $0x68] sm:$0xf]
    %v57 = vld [vmem:[%s1 + $0x6c] sm:$0xff]
    %v58 = vld [vmem:[%s1 + $0x74] sm:$0xf]
    %v59 = vld [vmem:[%s1 + $0x78] sm:$0xff]
    %v60 = vld [vmem:[%s1 + $0x80] sm:$0xf]
    %v61 = vld [vmem:[%s1 + $0x84] sm:$0xff]
    %v62 = vld [vmem:[%s1 + $0x8c] sm:$0xf]
    %v63 = vld [vmem:[%s1 + $0x90] sm:$0xff]
    %v64 = vld [vmem:[%s1 + $0x98] sm:$0xf]
    %v65 = vld [vmem:[%s1 + $0x9c] sm:$0xff]
    %v66 = vld [vmem:[%s1 + $0xa4] sm:$0xf]
    %v67 = vld [vmem:[%s1 + $0xa8] sm:$0xff]
    %v68 = vld [vmem:[%s1 + $0xb0] sm:$0xf]
    %v69 = vld [vmem:[%s1 + $0xb4] sm:$0xff]
    %v70 = vld [vmem:[%s1 + $0xbc] sm:$0xf]
    %v71 = vld [vmem:[#allocation2] sm:$0x7]
    %v73 = vperm.slane %v71, 0
    %v74 = vperm.slane %v71, 1
    %v75 = vperm.slane %v71, 2
    %v87 = vunpack.c.l.b16 %v31
    %v88 = vunpack.c.l.b16 %v32
    %v89 = vunpack.c.l.b16 %v33
    %v90 = vunpack.c.l.b16 %v34
    %v91 = vunpack.c.l.b16 %v35
    %v92 = vunpack.c.l.b16 %v36
    %v93 = vunpack.c.l.b16 %v37
    %v94 = vunpack.c.l.b16 %v38
    %v95 = vpack.c.b16 %v88, %v87
    %v96 = vpack.c.b16 %v90, %v89
    %v97 = vpack.c.b16 %v92, %v91
    %v98 = vpack.c.b16 %v94, %v93
    %v135 = vunpack.c.l.b16 %v39
    %v136 = vunpack.c.h.b16 %v39
    %v137 = vunpack.c.l.b16 %v40
    %v138 = vunpack.c.l.b16 %v41
    %v139 = vunpack.c.h.b16 %v41
    %v140 = vunpack.c.l.b16 %v42
    %v141 = vunpack.c.l.b16 %v43
    %v142 = vunpack.c.h.b16 %v43
    %v143 = vunpack.c.l.b16 %v44
    %v144 = vunpack.c.l.b16 %v45
    %v145 = vunpack.c.h.b16 %v45
    %v146 = vunpack.c.l.b16 %v46
    %v147 = vunpack.c.l.b16 %v47
    %v148 = vunpack.c.h.b16 %v47
    %v149 = vunpack.c.l.b16 %v48
    %v150 = vunpack.c.l.b16 %v49
    %v151 = vunpack.c.h.b16 %v49
    %v152 = vunpack.c.l.b16 %v50
    %v153 = vunpack.c.l.b16 %v51
    %v154 = vunpack.c.h.b16 %v51
    %v155 = vunpack.c.l.b16 %v52
    %v156 = vunpack.c.l.b16 %v53
    %v157 = vunpack.c.h.b16 %v53
    %v158 = vunpack.c.l.b16 %v54
    %v159 = vunpack.c.l.b16 %v55
    %v160 = vunpack.c.h.b16 %v55
    %v161 = vunpack.c.l.b16 %v56
    %v162 = vunpack.c.l.b16 %v57
    %v163 = vunpack.c.h.b16 %v57
    %v164 = vunpack.c.l.b16 %v58
    %v165 = vunpack.c.l.b16 %v59
    %v166 = vunpack.c.h.b16 %v59
    %v167 = vunpack.c.l.b16 %v60
    %v168 = vunpack.c.l.b16 %v61
    %v169 = vunpack.c.h.b16 %v61
    %v170 = vunpack.c.l.b16 %v62
    %v171 = vunpack.c.l.b16 %v63
    %v172 = vunpack.c.h.b16 %v63
    %v173 = vunpack.c.l.b16 %v64
    %v174 = vunpack.c.l.b16 %v65
    %v175 = vunpack.c.h.b16 %v65
    %v176 = vunpack.c.l.b16 %v66
    %v177 = vunpack.c.l.b16 %v67
    %v178 = vunpack.c.h.b16 %v67
    %v179 = vunpack.c.l.b16 %v68
    %v180 = vunpack.c.l.b16 %v69
    %v181 = vunpack.c.h.b16 %v69
    %v182 = vunpack.c.l.b16 %v70
    %v183 = vpack.c.b16 %v138, %v135
    %v184 = vpack.c.b16 %v139, %v136
    %v185 = vpack.c.b16 %v140, %v137
    %v186 = vpack.c.b16 %v144, %v141
    %v187 = vpack.c.b16 %v145, %v142
    %v188 = vpack.c.b16 %v146, %v143
    %v189 = vpack.c.b16 %v150, %v147
    %v190 = vpack.c.b16 %v151, %v148
    %v191 = vpack.c.b16 %v152, %v149
    %v192 = vpack.c.b16 %v156, %v153
    %v193 = vpack.c.b16 %v157, %v154
    %v194 = vpack.c.b16 %v158, %v155
    %v195 = vpack.c.b16 %v162, %v159
    %v196 = vpack.c.b16 %v163, %v160
    %v197 = vpack.c.b16 %v164, %v161
    %v198 = vpack.c.b16 %v168, %v165
    %v199 = vpack.c.b16 %v169, %v166
    %v200 = vpack.c.b16 %v170, %v167
    %v201 = vpack.c.b16 %v174, %v171
    %v202 = vpack.c.b16 %v175, %v172
    %v203 = vpack.c.b16 %v176, %v173
    %v204 = vpack.c.b16 %v180, %v177
    %v205 = vpack.c.b16 %v181, %v178
    %v206 = vpack.c.b16 %v182, %v179
    %231 = vmatpush.bf16.msra.mxu0 %v204
    %232 = vmatpush.bf16.msra.mxu0 %v201
    %233 = vmatpush.bf16.msra.mxu0 %v198
    %234 = vmatpush.bf16.msra.mxu0 %v195
    %235 = vmatpush.bf16.msra.mxu0 %v192
    %236 = vmatpush.bf16.msra.mxu0 %v189
    %237 = vmatpush.bf16.msra.mxu0 %v186
    %238 = vmatpush.bf16.msra.mxu0 %v183
    %239 = vmatmul.bf16.gmra.mxu0 %v95
    %v240 = vpop.f32.mrf.mxu0
    %v241 = vadd.f32 %v73, %v240
    %v242 = vpop.f32.mrf.mxu0
    %v243 = vadd.f32 %v73, %v242
    %244 = vmatmul.bf16.gmra.mxu0 %v96
    %v245 = vpop.f32.mrf.mxu0
    %v246 = vadd.f32 %v73, %v245
    %v247 = vpop.f32.mrf.mxu0
    %v248 = vadd.f32 %v73, %v247
    %249 = vmatmul.bf16.gmra.mxu0 %v97
    %v250 = vpop.f32.mrf.mxu0
    %v251 = vadd.f32 %v73, %v250
    %v252 = vpop.f32.mrf.mxu0
    %v253 = vadd.f32 %v73, %v252
    %254 = vmatmul.bf16.gmra.mxu0 %v98
    %v255 = vpop.f32.mrf.mxu0
    %v256 = vadd.f32 %v73, %v255
    %v257 = vpop.f32.mrf.mxu0
    %v258 = vadd.f32 %v73, %v257
    %259 = vdwg.mxu0
    %260 = vmatpush.bf16.msra.mxu0 %v205
    %261 = vmatpush.bf16.msra.mxu0 %v202
    %262 = vmatpush.bf16.msra.mxu0 %v199
    %263 = vmatpush.bf16.msra.mxu0 %v196
    %264 = vmatpush.bf16.msra.mxu0 %v193
    %265 = vmatpush.bf16.msra.mxu0 %v190
    %266 = vmatpush.bf16.msra.mxu0 %v187
    %267 = vmatpush.bf16.msra.mxu0 %v184
    %268 = vmatmul.bf16.gmra.mxu0 %v95
    %v269 = vpop.f32.mrf.mxu0
    %v270 = vadd.f32 %v74, %v269
    %v271 = vpop.f32.mrf.mxu0
    %v272 = vadd.f32 %v74, %v271
    %273 = vmatmul.bf16.gmra.mxu0 %v96
    %v274 = vpop.f32.mrf.mxu0
    %v275 = vadd.f32 %v74, %v274
    %v276 = vpop.f32.mrf.mxu0
    %v277 = vadd.f32 %v74, %v276
    %278 = vmatmul.bf16.gmra.mxu0 %v97
    %v279 = vpop.f32.mrf.mxu0
    %v280 = vadd.f32 %v74, %v279
    %v281 = vpop.f32.mrf.mxu0
    %v282 = vadd.f32 %v74, %v281
    %283 = vmatmul.bf16.gmra.mxu0 %v98
    %v284 = vpop.f32.mrf.mxu0
    %v285 = vadd.f32 %v74, %v284
    %v286 = vpop.f32.mrf.mxu0
    %v287 = vadd.f32 %v74, %v286
    %288 = vdwg.mxu0
    %289 = vmatpush.bf16.msra.mxu0 %v206
    %290 = vmatpush.bf16.msra.mxu0 %v203
    %291 = vmatpush.bf16.msra.mxu0 %v200
    %292 = vmatpush.bf16.msra.mxu0 %v197
    %293 = vmatpush.bf16.msra.mxu0 %v194
    %294 = vmatpush.bf16.msra.mxu0 %v191
    %295 = vmatpush.bf16.msra.mxu0 %v188
    %296 = vmatpush.bf16.msra.mxu0 %v185
    %297 = vmatmul.bf16.gmra.mxu0 %v95
    %v298 = vpop.f32.mrf.mxu0
    %v299 = vadd.f32 %v75, %v298
    %v300 = vpop.f32.mrf.mxu0
    %v301 = vadd.f32 %v75, %v300
    %302 = vmatmul.bf16.gmra.mxu0 %v96
    %v303 = vpop.f32.mrf.mxu0
    %v304 = vadd.f32 %v75, %v303
    %v305 = vpop.f32.mrf.mxu0
    %v306 = vadd.f32 %v75, %v305
    %307 = vmatmul.bf16.gmra.mxu0 %v97
    %v308 = vpop.f32.mrf.mxu0
    %v309 = vadd.f32 %v75, %v308
    %v310 = vpop.f32.mrf.mxu0
    %v311 = vadd.f32 %v75, %v310
    %312 = vmatmul.bf16.gmra.mxu0 %v98
    %v313 = vpop.f32.mrf.mxu0
    %v314 = vadd.f32 %v75, %v313
    %v315 = vpop.f32.mrf.mxu0
    %v316 = vadd.f32 %v75, %v315
    %317 = vdwg.mxu0
    %v318 = vmul.f32 %v241, 0.17677669
    %v319 = vmul.f32 %v243, 0.17677669
    %v320 = vmul.f32 %v246, 0.17677669
    %v321 = vmul.f32 %v248, 0.17677669
    %v322 = vmul.f32 %v251, 0.17677669
    %v323 = vmul.f32 %v253, 0.17677669
    %v324 = vmul.f32 %v256, 0.17677669
    %v325 = vmul.f32 %v258, 0.17677669
    %v326 = vpack.c.bf16 %v318, %v318
    %v327 = vpack.c.bf16 %v319, %v319
    %v328 = vpack.c.bf16 %v320, %v320
    %v329 = vpack.c.bf16 %v321, %v321
    %v330 = vpack.c.bf16 %v322, %v322
    %v331 = vpack.c.bf16 %v323, %v323
    %v332 = vpack.c.bf16 %v324, %v324
    %v333 = vpack.c.bf16 %v325, %v325
    %334 = vst [vmem:[%s3] sm:$0xf] %v326
    %335 = vst [vmem:[%s3 + $0x4] sm:$0xf] %v327
    %336 = vst [vmem:[%s3 + $0x8] sm:$0xf] %v328
    %337 = vst [vmem:[%s3 + $0xc] sm:$0xf] %v329
    %338 = vst [vmem:[%s3 + $0x10] sm:$0xf] %v330
    %339 = vst [vmem:[%s3 + $0x14] sm:$0xf] %v331
    %340 = vst [vmem:[%s3 + $0x18] sm:$0xf] %v332
    %341 = vst [vmem:[%s3 + $0x1c] sm:$0xf] %v333
    %v342 = vpack.c.bf16 %v270, %v270
    %v343 = vpack.c.bf16 %v272, %v272
    %v344 = vpack.c.bf16 %v275, %v275
    %v345 = vpack.c.bf16 %v277, %v277
    %v346 = vpack.c.bf16 %v280, %v280
    %v347 = vpack.c.bf16 %v282, %v282
    %v348 = vpack.c.bf16 %v285, %v285
    %v349 = vpack.c.bf16 %v287, %v287
    %350 = vst [vmem:[%s4] sm:$0xf] %v342
    %351 = vst [vmem:[%s4 + $0x4] sm:$0xf] %v343
    %352 = vst [vmem:[%s4 + $0x8] sm:$0xf] %v344
    %353 = vst [vmem:[%s4 + $0xc] sm:$0xf] %v345
    %354 = vst [vmem:[%s4 + $0x10] sm:$0xf] %v346
    %355 = vst [vmem:[%s4 + $0x14] sm:$0xf] %v347
    %356 = vst [vmem:[%s4 + $0x18] sm:$0xf] %v348
    %357 = vst [vmem:[%s4 + $0x1c] sm:$0xf] %v349
    %v358 = vpack.c.bf16 %v299, %v299
    %v359 = vpack.c.bf16 %v301, %v301
    %v360 = vpack.c.bf16 %v304, %v304
    %v361 = vpack.c.bf16 %v306, %v306
    %v362 = vpack.c.bf16 %v309, %v309
    %v363 = vpack.c.bf16 %v311, %v311
    %v364 = vpack.c.bf16 %v314, %v314
    %v365 = vpack.c.bf16 %v316, %v316
    %366 = vst [vmem:[%s5] sm:$0xf] %v358
    %367 = vst [vmem:[%s5 + $0x4] sm:$0xf] %v359
    %368 = vst [vmem:[%s5 + $0x8] sm:$0xf] %v360
    %369 = vst [vmem:[%s5 + $0xc] sm:$0xf] %v361
    %370 = vst [vmem:[%s5 + $0x10] sm:$0xf] %v362
    %371 = vst [vmem:[%s5 + $0x14] sm:$0xf] %v363
    %372 = vst [vmem:[%s5 + $0x18] sm:$0xf] %v364
    %373 = vst [vmem:[%s5 + $0x1c] sm:$0xf] %v365
    // Predicated region
    $region18: #{transformer_forward.7} parent=1 // pred_check
      _
    $region19: #{transformer_forward.7} parent=1 // pred_check_branch
      %375 = sbr.rel (0) target = $region21
    $region20: #{transformer_forward.7} parent=1 // pred_region
      _
    $region21: #{transformer_forward.7} parent=1 // pred_fallthru
      _
    // Predicated region
    $region22: #{transformer_forward.7} parent=1 // pred_check
      _
    $region23: #{transformer_forward.7} parent=1 // pred_check_branch
      %377 = sbr.rel (0) target = $region25
    $region24: #{transformer_forward.7} parent=1 // pred_region
      _
    $region25: #{transformer_forward.7} parent=1 // pred_fallthru
      _
    // Predicated region
    $region26: #{transformer_forward.7} parent=1 // pred_check
      _
    $region27: #{transformer_forward.7} parent=1 // pred_check_branch
      %379 = sbr.rel (0) target = $region29
    $region28: #{transformer_forward.7} parent=1 // pred_region
      _
    $region29: #{transformer_forward.7} parent=1 // pred_fallthru
      _
    // Predicated region
    $region30: #{transformer_forward.7} parent=1 // pred_check
      _
    $region31: #{transformer_forward.7} parent=1 // pred_check_branch
      %381 = sbr.rel (0) target = $region33
    $region32: #{transformer_forward.7} parent=1 // pred_region
      _
    $region33: #{transformer_forward.7} parent=1 // pred_fallthru
      _
    // Predicated region
    $region34: #{transformer_forward.7} parent=1 // pred_check
      _
    $region35: #{transformer_forward.7} parent=1 // pred_check_branch
      %383 = sbr.rel (0) target = $region37
    $region36: #{transformer_forward.7} parent=1 // pred_region
      _
    $region37: #{transformer_forward.7} parent=1 // pred_fallthru
      _
    // Predicated region
    $region38: #{transformer_forward.7} parent=1 // pred_check
      _
    $region39: #{transformer_forward.7} parent=1 // pred_check_branch
      %385 = sbr.rel (0) target = $region41
    $region40: #{transformer_forward.7} parent=1 // pred_region
      _
    $region41: #{transformer_forward.7} parent=1 // pred_fallthru
      _
    %386 = vsyncpa [#allocation3], 1

// kernel: transformer_forward.10
$region0: #{transformer_forward.10}
  #allocation0 [shape = 'u32[]', space=smem, size = 0x4, offset = 0x4, fixed_abs, tag = 'smem constant byte address 0x4 - core index']
  #allocation1 [shape = 'u32[72,128]{1,0:T(1,128)}', space=vmem, size = 0x9000, scoped, tag = 'internal scratch']
  %s0 = inlined_call_operand.vmem [shape: bf16[64,128], index: 0, kind: input, shape index: {}]
  %s1 = inlined_call_operand.vmem [shape: bf16[128,384], index: 1, kind: input, shape index: {}]
  %s2 = inlined_call_operand.vmem [shape: f32[1,384], index: 2, kind: input, shape index: {}]
  %s3 = inlined_call_operand.vmem [shape: bf16[64,128], index: 3, kind: output, shape index: {0}]
  %s4 = inlined_call_operand.vmem [shape: bf16[64,128], index: 4, kind: output, shape index: {1}]
  %s5 = inlined_call_operand.vmem [shape: bf16[64,128], index: 5, kind: output, shape index: {2}]
  %6 = xla_tuple %s3, %s4, %s5
  %s7 = sld [smem:[#allocation0]]
  $region38: #{transformer_forward.10} parent=0
    _
  %s9 = ssub.s32 1, %s7
  %s10 = scalar_select 0, %s9, %s7
  // Predicated region
  $region2: #{transformer_forward.10} parent=0 // pred_check
    _
  $region3: #{transformer_forward.10} parent=0 // pred_check_branch
    %12 = sbr.rel (0) target = $region5
  $region4: #{transformer_forward.10} parent=0 // pred_region
    _
  $region5: #{transformer_forward.10} parent=0 // pred_fallthru
    _
  // Predicated region
  $region6: #{transformer_forward.10} parent=0 // pred_check
    _
  $region7: #{transformer_forward.10} parent=0 // pred_check_branch
    %14 = sbr.rel (0) target = $region9
  $region8: #{transformer_forward.10} parent=0 // pred_region
    _
  $region9: #{transformer_forward.10} parent=0 // pred_fallthru
    _
  // Predicated region
  $region10: #{transformer_forward.10} parent=0 // pred_check
    _
  $region11: #{transformer_forward.10} parent=0 // pred_check_branch
    %16 = sbr.rel (0) target = $region13
  $region12: #{transformer_forward.10} parent=0 // pred_region
    _
  $region13: #{transformer_forward.10} parent=0 // pred_fallthru
    _
  %v17 = vld [vmem:[%s0] sm:$0xf]
  %v18 = vld [vmem:[%s0 + $0x4] sm:$0xf]
  %v19 = vld [vmem:[%s0 + $0x8] sm:$0xf]
  %v20 = vld [vmem:[%s0 + $0xc] sm:$0xf]
  %v21 = vld [vmem:[%s0 + $0x10] sm:$0xf]
  %v22 = vld [vmem:[%s0 + $0x14] sm:$0xf]
  %v23 = vld [vmem:[%s0 + $0x18] sm:$0xf]
  %v24 = vld [vmem:[%s0 + $0x1c] sm:$0xf]
  %v25 = vld [vmem:[%s1] sm:$0xff]
  %v26 = vld [vmem:[%s1 + $0x8] sm:$0xf]
  %v27 = vld [vmem:[%s1 + $0xc] sm:$0xff]
  %v28 = vld [vmem:[%s1 + $0x14] sm:$0xf]
  %v29 = vld [vmem:[%s1 + $0x18] sm:$0xff]
  %v30 = vld [vmem:[%s1 + $0x20] sm:$0xf]
  %v31 = vld [vmem:[%s1 + $0x24] sm:$0xff]
  %v32 = vld [vmem:[%s1 + $0x2c] sm:$0xf]
  %v33 = vld [vmem:[%s1 + $0x30] sm:$0xff]
  %v34 = vld [vmem:[%s1 + $0x38] sm:$0xf]
  %v35 = vld [vmem:[%s1 + $0x3c] sm:$0xff]
  %v36 = vld [vmem:[%s1 + $0x44] sm:$0xf]
  %v37 = vld [vmem:[%s1 + $0x48] sm:$0xff]
  %v38 = vld [vmem:[%s1 + $0x50] sm:$0xf]
  %v39 = vld [vmem:[%s1 + $0x54] sm:$0xff]
  %v40 = vld [vmem:[%s1 + $0x5c] sm:$0xf]
  %v41 = vld [vmem:[%s1 + $0x60] sm:$0xff]
  %v42 = vld [vmem:[%s1 + $0x68] sm:$0xf]
  %v43 = vld [vmem:[%s1 + $0x6c] sm:$0xff]
  %v44 = vld [vmem:[%s1 + $0x74] sm:$0xf]
  %v45 = vld [vmem:[%s1 + $0x78] sm:$0xff]
  %v46 = vld [vmem:[%s1 + $0x80] sm:$0xf]
  %v47 = vld [vmem:[%s1 + $0x84] sm:$0xff]
  %v48 = vld [vmem:[%s1 + $0x8c] sm:$0xf]
  %v49 = vld [vmem:[%s1 + $0x90] sm:$0xff]
  %v50 = vld [vmem:[%s1 + $0x98] sm:$0xf]
  %v51 = vld [vmem:[%s1 + $0x9c] sm:$0xff]
  %v52 = vld [vmem:[%s1 + $0xa4] sm:$0xf]
  %v53 = vld [vmem:[%s1 + $0xa8] sm:$0xff]
  %v54 = vld [vmem:[%s1 + $0xb0] sm:$0xf]
  %v55 = vld [vmem:[%s1 + $0xb4] sm:$0xff]
  %v56 = vld [vmem:[%s1 + $0xbc] sm:$0xf]
  %v57 = vld [vmem:[%s2] sm:$0x7]
  %v59 = vperm.slane %v57, 0
  %v60 = vperm.slane %v57, 1
  %v61 = vperm.slane %v57, 2
  %v73 = vunpack.c.l.b16 %v17
  %v74 = vunpack.c.l.b16 %v18
  %v75 = vunpack.c.l.b16 %v19
  %v76 = vunpack.c.l.b16 %v20
  %v77 = vunpack.c.l.b16 %v21
  %v78 = vunpack.c.l.b16 %v22
  %v79 = vunpack.c.l.b16 %v23
  %v80 = vunpack.c.l.b16 %v24
  %v81 = vpack.c.b16 %v74, %v73
  %v82 = vpack.c.b16 %v76, %v75
  %v83 = vpack.c.b16 %v78, %v77
  %v84 = vpack.c.b16 %v80, %v79
  %v121 = vunpack.c.l.b16 %v25
  %v122 = vunpack.c.h.b16 %v25
  %v123 = vunpack.c.l.b16 %v26
  %v124 = vunpack.c.l.b16 %v27
  %v125 = vunpack.c.h.b16 %v27
  %v126 = vunpack.c.l.b16 %v28
  %v127 = vunpack.c.l.b16 %v29
  %v128 = vunpack.c.h.b16 %v29
  %v129 = vunpack.c.l.b16 %v30
  %v130 = vunpack.c.l.b16 %v31
  %v131 = vunpack.c.h.b16 %v31
  %v132 = vunpack.c.l.b16 %v32
  %v133 = vunpack.c.l.b16 %v33
  %v134 = vunpack.c.h.b16 %v33
  %v135 = vunpack.c.l.b16 %v34
  %v136 = vunpack.c.l.b16 %v35
  %v137 = vunpack.c.h.b16 %v35
  %v138 = vunpack.c.l.b16 %v36
  %v139 = vunpack.c.l.b16 %v37
  %v140 = vunpack.c.h.b16 %v37
  %v141 = vunpack.c.l.b16 %v38
  %v142 = vunpack.c.l.b16 %v39
  %v143 = vunpack.c.h.b16 %v39
  %v144 = vunpack.c.l.b16 %v40
  %v145 = vunpack.c.l.b16 %v41
  %v146 = vunpack.c.h.b16 %v41
  %v147 = vunpack.c.l.b16 %v42
  %v148 = vunpack.c.l.b16 %v43
  %v149 = vunpack.c.h.b16 %v43
  %v150 = vunpack.c.l.b16 %v44
  %v151 = vunpack.c.l.b16 %v45
  %v152 = vunpack.c.h.b16 %v45
  %v153 = vunpack.c.l.b16 %v46
  %v154 = vunpack.c.l.b16 %v47
  %v155 = vunpack.c.h.b16 %v47
  %v156 = vunpack.c.l.b16 %v48
  %v157 = vunpack.c.l.b16 %v49
  %v158 = vunpack.c.h.b16 %v49
  %v159 = vunpack.c.l.b16 %v50
  %v160 = vunpack.c.l.b16 %v51
  %v161 = vunpack.c.h.b16 %v51
  %v162 = vunpack.c.l.b16 %v52
  %v163 = vunpack.c.l.b16 %v53
  %v164 = vunpack.c.h.b16 %v53
  %v165 = vunpack.c.l.b16 %v54
  %v166 = vunpack.c.l.b16 %v55
  %v167 = vunpack.c.h.b16 %v55
  %v168 = vunpack.c.l.b16 %v56
  %v169 = vpack.c.b16 %v124, %v121
  %v170 = vpack.c.b16 %v125, %v122
  %v171 = vpack.c.b16 %v126, %v123
  %v172 = vpack.c.b16 %v130, %v127
  %v173 = vpack.c.b16 %v131, %v128
  %v174 = vpack.c.b16 %v132, %v129
  %v175 = vpack.c.b16 %v136, %v133
  %v176 = vpack.c.b16 %v137, %v134
  %v177 = vpack.c.b16 %v138, %v135
  %v178 = vpack.c.b16 %v142, %v139
  %v179 = vpack.c.b16 %v143, %v140
  %v180 = vpack.c.b16 %v144, %v141
  %v181 = vpack.c.b16 %v148, %v145
  %v182 = vpack.c.b16 %v149, %v146
  %v183 = vpack.c.b16 %v150, %v147
  %v184 = vpack.c.b16 %v154, %v151
  %v185 = vpack.c.b16 %v155, %v152
  %v186 = vpack.c.b16 %v156, %v153
  %v187 = vpack.c.b16 %v160, %v157
  %v188 = vpack.c.b16 %v161, %v158
  %v189 = vpack.c.b16 %v162, %v159
  %v190 = vpack.c.b16 %v166, %v163
  %v191 = vpack.c.b16 %v167, %v164
  %v192 = vpack.c.b16 %v168, %v165
  %217 = vmatpush.bf16.msra.mxu0 %v190
  %218 = vmatpush.bf16.msra.mxu0 %v187
  %219 = vmatpush.bf16.msra.mxu0 %v184
  %220 = vmatpush.bf16.msra.mxu0 %v181
  %221 = vmatpush.bf16.msra.mxu0 %v178
  %222 = vmatpush.bf16.msra.mxu0 %v175
  %223 = vmatpush.bf16.msra.mxu0 %v172
  %224 = vmatpush.bf16.msra.mxu0 %v169
  %225 = vmatmul.bf16.gmra.mxu0 %v81
  %v226 = vpop.f32.mrf.mxu0
  %v227 = vadd.f32 %v59, %v226
  %v228 = vpop.f32.mrf.mxu0
  %v229 = vadd.f32 %v59, %v228
  %230 = vmatmul.bf16.gmra.mxu0 %v82
  %v231 = vpop.f32.mrf.mxu0
  %v232 = vadd.f32 %v59, %v231
  %v233 = vpop.f32.mrf.mxu0
  %v234 = vadd.f32 %v59, %v233
  %235 = vmatmul.bf16.gmra.mxu0 %v83
  %v236 = vpop.f32.mrf.mxu0
  %v237 = vadd.f32 %v59, %v236
  %v238 = vpop.f32.mrf.mxu0
  %v239 = vadd.f32 %v59, %v238
  %240 = vmatmul.bf16.gmra.mxu0 %v84
  %v241 = vpop.f32.mrf.mxu0
  %v242 = vadd.f32 %v59, %v241
  %v243 = vpop.f32.mrf.mxu0
  %v244 = vadd.f32 %v59, %v243
  %245 = vdwg.mxu0
  %246 = vmatpush.bf16.msra.mxu0 %v191
  %247 = vmatpush.bf16.msra.mxu0 %v188
  %248 = vmatpush.bf16.msra.mxu0 %v185
  %249 = vmatpush.bf16.msra.mxu0 %v182
  %250 = vmatpush.bf16.msra.mxu0 %v179
  %251 = vmatpush.bf16.msra.mxu0 %v176
  %252 = vmatpush.bf16.msra.mxu0 %v173
  %253 = vmatpush.bf16.msra.mxu0 %v170
  %254 = vmatmul.bf16.gmra.mxu0 %v81
  %v255 = vpop.f32.mrf.mxu0
  %v256 = vadd.f32 %v60, %v255
  %v257 = vpop.f32.mrf.mxu0
  %v258 = vadd.f32 %v60, %v257
  %259 = vmatmul.bf16.gmra.mxu0 %v82
  %v260 = vpop.f32.mrf.mxu0
  %v261 = vadd.f32 %v60, %v260
  %v262 = vpop.f32.mrf.mxu0
  %v263 = vadd.f32 %v60, %v262
  %264 = vmatmul.bf16.gmra.mxu0 %v83
  %v265 = vpop.f32.mrf.mxu0
  %v266 = vadd.f32 %v60, %v265
  %v267 = vpop.f32.mrf.mxu0
  %v268 = vadd.f32 %v60, %v267
  %269 = vmatmul.bf16.gmra.mxu0 %v84
  %v270 = vpop.f32.mrf.mxu0
  %v271 = vadd.f32 %v60, %v270
  %v272 = vpop.f32.mrf.mxu0
  %v273 = vadd.f32 %v60, %v272
  %274 = vdwg.mxu0
  %275 = vmatpush.bf16.msra.mxu0 %v192
  %276 = vmatpush.bf16.msra.mxu0 %v189
  %277 = vmatpush.bf16.msra.mxu0 %v186
  %278 = vmatpush.bf16.msra.mxu0 %v183
  %279 = vmatpush.bf16.msra.mxu0 %v180
  %280 = vmatpush.bf16.msra.mxu0 %v177
  %281 = vmatpush.bf16.msra.mxu0 %v174
  %282 = vmatpush.bf16.msra.mxu0 %v171
  %283 = vmatmul.bf16.gmra.mxu0 %v81
  %v284 = vpop.f32.mrf.mxu0
  %v285 = vadd.f32 %v61, %v284
  %v286 = vpop.f32.mrf.mxu0
  %v287 = vadd.f32 %v61, %v286
  %288 = vmatmul.bf16.gmra.mxu0 %v82
  %v289 = vpop.f32.mrf.mxu0
  %v290 = vadd.f32 %v61, %v289
  %v291 = vpop.f32.mrf.mxu0
  %v292 = vadd.f32 %v61, %v291
  %293 = vmatmul.bf16.gmra.mxu0 %v83
  %v294 = vpop.f32.mrf.mxu0
  %v295 = vadd.f32 %v61, %v294
  %v296 = vpop.f32.mrf.mxu0
  %v297 = vadd.f32 %v61, %v296
  %298 = vmatmul.bf16.gmra.mxu0 %v84
  %v299 = vpop.f32.mrf.mxu0
  %v300 = vadd.f32 %v61, %v299
  %v301 = vpop.f32.mrf.mxu0
  %v302 = vadd.f32 %v61, %v301
  %303 = vdwg.mxu0
  %v304 = vmul.f32 %v227, 0.17677669
  %v305 = vmul.f32 %v229, 0.17677669
  %v306 = vmul.f32 %v232, 0.17677669
  %v307 = vmul.f32 %v234, 0.17677669
  %v308 = vmul.f32 %v237, 0.17677669
  %v309 = vmul.f32 %v239, 0.17677669
  %v310 = vmul.f32 %v242, 0.17677669
  %v311 = vmul.f32 %v244, 0.17677669
  %v312 = vpack.c.bf16 %v304, %v304
  %v313 = vpack.c.bf16 %v305, %v305
  %v314 = vpack.c.bf16 %v306, %v306
  %v315 = vpack.c.bf16 %v307, %v307
  %v316 = vpack.c.bf16 %v308, %v308
  %v317 = vpack.c.bf16 %v309, %v309
  %v318 = vpack.c.bf16 %v310, %v310
  %v319 = vpack.c.bf16 %v311, %v311
  %320 = vst [vmem:[%s3] sm:$0xf] %v312
  %321 = vst [vmem:[%s3 + $0x4] sm:$0xf] %v313
  %322 = vst [vmem:[%s3 + $0x8] sm:$0xf] %v314
  %323 = vst [vmem:[%s3 + $0xc] sm:$0xf] %v315
  %324 = vst [vmem:[%s3 + $0x10] sm:$0xf] %v316
  %325 = vst [vmem:[%s3 + $0x14] sm:$0xf] %v317
  %326 = vst [vmem:[%s3 + $0x18] sm:$0xf] %v318
  %327 = vst [vmem:[%s3 + $0x1c] sm:$0xf] %v319
  %v328 = vpack.c.bf16 %v256, %v256
  %v329 = vpack.c.bf16 %v258, %v258
  %v330 = vpack.c.bf16 %v261, %v261
  %v331 = vpack.c.bf16 %v263, %v263
  %v332 = vpack.c.bf16 %v266, %v266
  %v333 = vpack.c.bf16 %v268, %v268
  %v334 = vpack.c.bf16 %v271, %v271
  %v335 = vpack.c.bf16 %v273, %v273
  %336 = vst [vmem:[%s4] sm:$0xf] %v328
  %337 = vst [vmem:[%s4 + $0x4] sm:$0xf] %v329
  %338 = vst [vmem:[%s4 + $0x8] sm:$0xf] %v330
  %339 = vst [vmem:[%s4 + $0xc] sm:$0xf] %v331
  %340 = vst [vmem:[%s4 + $0x10] sm:$0xf] %v332
  %341 = vst [vmem:[%s4 + $0x14] sm:$0xf] %v333
  %342 = vst [vmem:[%s4 + $0x18] sm:$0xf] %v334
  %343 = vst [vmem:[%s4 + $0x1c] sm:$0xf] %v335
  %v344 = vpack.c.bf16 %v285, %v285
  %v345 = vpack.c.bf16 %v287, %v287
  %v346 = vpack.c.bf16 %v290, %v290
  %v347 = vpack.c.bf16 %v292, %v292
  %v348 = vpack.c.bf16 %v295, %v295
  %v349 = vpack.c.bf16 %v297, %v297
  %v350 = vpack.c.bf16 %v300, %v300
  %v351 = vpack.c.bf16 %v302, %v302
  %352 = vst [vmem:[%s5] sm:$0xf] %v344
  %353 = vst [vmem:[%s5 + $0x4] sm:$0xf] %v345
  %354 = vst [vmem:[%s5 + $0x8] sm:$0xf] %v346
  %355 = vst [vmem:[%s5 + $0xc] sm:$0xf] %v347
  %356 = vst [vmem:[%s5 + $0x10] sm:$0xf] %v348
  %357 = vst [vmem:[%s5 + $0x14] sm:$0xf] %v349
  %358 = vst [vmem:[%s5 + $0x18] sm:$0xf] %v350
  %359 = vst [vmem:[%s5 + $0x1c] sm:$0xf] %v351
  // Predicated region
  $region14: #{transformer_forward.10} parent=0 // pred_check
    _
  $region15: #{transformer_forward.10} parent=0 // pred_check_branch
    %361 = sbr.rel (0) target = $region17
  $region16: #{transformer_forward.10} parent=0 // pred_region
    _
  $region17: #{transformer_forward.10} parent=0 // pred_fallthru
    _
  // Predicated region
  $region18: #{transformer_forward.10} parent=0 // pred_check
    _
  $region19: #{transformer_forward.10} parent=0 // pred_check_branch
    %363 = sbr.rel (0) target = $region21
  $region20: #{transformer_forward.10} parent=0 // pred_region
    _
  $region21: #{transformer_forward.10} parent=0 // pred_fallthru
    _
  // Predicated region
  $region22: #{transformer_forward.10} parent=0 // pred_check
    _
  $region23: #{transformer_forward.10} parent=0 // pred_check_branch
    %365 = sbr.rel (0) target = $region25
  $region24: #{transformer_forward.10} parent=0 // pred_region
    _
  $region25: #{transformer_forward.10} parent=0 // pred_fallthru
    _
  // Predicated region
  $region26: #{transformer_forward.10} parent=0 // pred_check
    _
  $region27: #{transformer_forward.10} parent=0 // pred_check_branch
    %367 = sbr.rel (0) target = $region29
  $region28: #{transformer_forward.10} parent=0 // pred_region
    _
  $region29: #{transformer_forward.10} parent=0 // pred_fallthru
    _
  // Predicated region
  $region30: #{transformer_forward.10} parent=0 // pred_check
    _
  $region31: #{transformer_forward.10} parent=0 // pred_check_branch
    %369 = sbr.rel (0) target = $region33
  $region32: #{transformer_forward.10} parent=0 // pred_region
    _
  $region33: #{transformer_forward.10} parent=0 // pred_fallthru
    _
  // Predicated region
  $region34: #{transformer_forward.10} parent=0 // pred_check
    _
  $region35: #{transformer_forward.10} parent=0 // pred_check_branch
    %371 = sbr.rel (0) target = $region37
  $region36: #{transformer_forward.10} parent=0 // pred_region
    _
  $region37: #{transformer_forward.10} parent=0 // pred_fallthru
    _

// kernel: transformer_forward.9
$region0: #{transformer_forward.9}
  #allocation0 [shape = 'u32[]', space=smem, size = 0x4, offset = 0x4, fixed_abs, tag = 'smem constant byte address 0x4 - core index']
  #allocation1 [shape = 'u32[72,128]{1,0:T(1,128)}', space=vmem, size = 0x9000, scoped, tag = 'internal scratch']
  %s0 = inlined_call_operand.vmem [shape: bf16[64,128], index: 0, kind: input, shape index: {}]
  %s1 = inlined_call_operand.vmem [shape: bf16[128,256], index: 1, kind: input, shape index: {}]
  %s2 = inlined_call_operand.vmem [shape: f32[1,256], index: 2, kind: input, shape index: {}]
  %s3 = inlined_call_operand.vmem [shape: bf16[256,128], index: 3, kind: input, shape index: {}]
  %s4 = inlined_call_operand.vmem [shape: f32[1,128], index: 4, kind: input, shape index: {}]
  %s5 = inlined_call_operand.vmem [shape: f32[1,128], index: 5, kind: input, shape index: {}]
  %s6 = inlined_call_operand.hbm [shape: f32[1,128], index: 6, kind: input, shape index: {}]
  %s7 = inlined_call_operand.vmem [shape: bf16[64,128], index: 7, kind: output, shape index: {}]
  %s8 = sld [smem:[#allocation0]]
  $region42: #{transformer_forward.9} parent=0
    _
  %s10 = ssub.s32 1, %s8
  %s11 = scalar_select 0, %s10, %s8
  $region1: #{transformer_forward.9} parent=0
    #allocation2 [shape = 'u8[512]{0}', space=vmem, size = 0x400, scoped, tag = 'input window, operand 6, single buffered']
    #allocation3 [shape = 's32[1]{0}', space=sflag, size = 0x4, scoped, tag = 'scoped memory for transformer_forward.9']
    %12 = vsyncpa [#allocation3], 0
    // Predicated region
    $region2: #{transformer_forward.9} parent=1 // pred_check
      _
    $region3: #{transformer_forward.9} parent=1 // pred_check_branch
      %14 = sbr.rel (0) target = $region5
    $region4: #{transformer_forward.9} parent=1 // pred_region
      _
    $region5: #{transformer_forward.9} parent=1 // pred_fallthru
      _
    // Predicated region
    $region6: #{transformer_forward.9} parent=1 // pred_check
      _
    $region7: #{transformer_forward.9} parent=1 // pred_check_branch
      %16 = sbr.rel (0) target = $region9
    $region8: #{transformer_forward.9} parent=1 // pred_region
      _
    $region9: #{transformer_forward.9} parent=1 // pred_fallthru
      _
    // Predicated region
    $region10: #{transformer_forward.9} parent=1 // pred_check
      _
    $region11: #{transformer_forward.9} parent=1 // pred_check_branch
      %18 = sbr.rel (0) target = $region13
    $region12: #{transformer_forward.9} parent=1 // pred_region
      _
    $region13: #{transformer_forward.9} parent=1 // pred_fallthru
      _
    // Predicated region
    $region14: #{transformer_forward.9} parent=1 // pred_check
      _
    $region15: #{transformer_forward.9} parent=1 // pred_check_branch
      %20 = sbr.rel (0) target = $region17
    $region16: #{transformer_forward.9} parent=1 // pred_region
      _
    $region17: #{transformer_forward.9} parent=1 // pred_fallthru
      _
    // Predicated region
    $region18: #{transformer_forward.9} parent=1 // pred_check
      _
    $region19: #{transformer_forward.9} parent=1 // pred_check_branch
      %22 = sbr.rel (0) target = $region21
    $region20: #{transformer_forward.9} parent=1 // pred_region
      _
    $region21: #{transformer_forward.9} parent=1 // pred_fallthru
      _
    // Predicated region
    $region22: #{transformer_forward.9} parent=1 // pred_check
      _
    $region23: #{transformer_forward.9} parent=1 // pred_check_branch
      %24 = sbr.rel (0) target = $region25
    $region24: #{transformer_forward.9} parent=1 // pred_region
      _
    $region25: #{transformer_forward.9} parent=1 // pred_fallthru
      _
    // Predicated region
    $region26: #{transformer_forward.9} parent=1 // pred_check
      _
    $region27: #{transformer_forward.9} parent=1 // pred_check_branch
      %26 = sbr.rel (0) target = $region29
    $region28: #{transformer_forward.9} parent=1 // pred_region
      %28 = vsyncadd [#allocation3], 0
      %s30 = sshll.u32 %s6, 4
      %s31 = int_to_ptr.hbm [resolvable:$true] %s30
      %s32 = sshll.u32 [#allocation2], 4
      %s33 = int_to_ptr.vmem [resolvable:$true] %s32
      %35 = dma.hbm_to_vmem [thread:$0]  %s31, 16, %s33, [#allocation3]
    $region29: #{transformer_forward.9} parent=1 // pred_fallthru
      _
    // Predicated region
    $region30: #{transformer_forward.9} parent=1 // pred_check
      _
    $region31: #{transformer_forward.9} parent=1 // pred_check_branch
      %37 = sbr.rel (0) target = $region33
    $region32: #{transformer_forward.9} parent=1 // pred_region
      %39 = dma.done [#allocation3], 16
    $region33: #{transformer_forward.9} parent=1 // pred_fallthru
      _
    %v40 = vld [vmem:[%s0] sm:$0xf]
    %v41 = vld [vmem:[%s0 + $0x4] sm:$0xf]
    %v42 = vld [vmem:[%s0 + $0x8] sm:$0xf]
    %v43 = vld [vmem:[%s0 + $0xc] sm:$0xf]
    %v44 = vld [vmem:[%s0 + $0x10] sm:$0xf]
    %v45 = vld [vmem:[%s0 + $0x14] sm:$0xf]
    %v46 = vld [vmem:[%s0 + $0x18] sm:$0xf]
    %v47 = vld [vmem:[%s0 + $0x1c] sm:$0xf]
    %v48 = vld [vmem:[%s1] sm:$0xff]
    %v49 = vld [vmem:[%s1 + $0x8] sm:$0xff]
    %v50 = vld [vmem:[%s1 + $0x10] sm:$0xff]
    %v51 = vld [vmem:[%s1 + $0x18] sm:$0xff]
    %v52 = vld [vmem:[%s1 + $0x20] sm:$0xff]
    %v53 = vld [vmem:[%s1 + $0x28] sm:$0xff]
    %v54 = vld [vmem:[%s1 + $0x30] sm:$0xff]
    %v55 = vld [vmem:[%s1 + $0x38] sm:$0xff]
    %v56 = vld [vmem:[%s1 + $0x40] sm:$0xff]
    %v57 = vld [vmem:[%s1 + $0x48] sm:$0xff]
    %v58 = vld [vmem:[%s1 + $0x50] sm:$0xff]
    %v59 = vld [vmem:[%s1 + $0x58] sm:$0xff]
    %v60 = vld [vmem:[%s1 + $0x60] sm:$0xff]
    %v61 = vld [vmem:[%s1 + $0x68] sm:$0xff]
    %v62 = vld [vmem:[%s1 + $0x70] sm:$0xff]
    %v63 = vld [vmem:[%s1 + $0x78] sm:$0xff]
    %v64 = vld [vmem:[%s2] sm:$0x3]
    %v66 = vperm.slane %v64, 0
    %v67 = vperm.slane %v64, 1
    %v78 = vunpack.c.l.b16 %v40
    %v79 = vunpack.c.l.b16 %v41
    %v80 = vunpack.c.l.b16 %v42
    %v81 = vunpack.c.l.b16 %v43
    %v82 = vunpack.c.l.b16 %v44
    %v83 = vunpack.c.l.b16 %v45
    %v84 = vunpack.c.l.b16 %v46
    %v85 = vunpack.c.l.b16 %v47
    %v86 = vpack.c.b16 %v79, %v78
    %v87 = vpack.c.b16 %v81, %v80
    %v88 = vpack.c.b16 %v83, %v82
    %v89 = vpack.c.b16 %v85, %v84
    %v110 = vunpack.c.l.b16 %v48
    %v111 = vunpack.c.h.b16 %v48
    %v112 = vunpack.c.l.b16 %v49
    %v113 = vunpack.c.h.b16 %v49
    %v114 = vunpack.c.l.b16 %v50
    %v115 = vunpack.c.h.b16 %v50
    %v116 = vunpack.c.l.b16 %v51
    %v117 = vunpack.c.h.b16 %v51
    %v118 = vunpack.c.l.b16 %v52
    %v119 = vunpack.c.h.b16 %v52
    %v120 = vunpack.c.l.b16 %v53
    %v121 = vunpack.c.h.b16 %v53
    %v122 = vunpack.c.l.b16 %v54
    %v123 = vunpack.c.h.b16 %v54
    %v124 = vunpack.c.l.b16 %v55
    %v125 = vunpack.c.h.b16 %v55
    %v126 = vunpack.c.l.b16 %v56
    %v127 = vunpack.c.h.b16 %v56
    %v128 = vunpack.c.l.b16 %v57
    %v129 = vunpack.c.h.b16 %v57
    %v130 = vunpack.c.l.b16 %v58
    %v131 = vunpack.c.h.b16 %v58
    %v132 = vunpack.c.l.b16 %v59
    %v133 = vunpack.c.h.b16 %v59
    %v134 = vunpack.c.l.b16 %v60
    %v135 = vunpack.c.h.b16 %v60
    %v136 = vunpack.c.l.b16 %v61
    %v137 = vunpack.c.h.b16 %v61
    %v138 = vunpack.c.l.b16 %v62
    %v139 = vunpack.c.h.b16 %v62
    %v140 = vunpack.c.l.b16 %v63
    %v141 = vunpack.c.h.b16 %v63
    %v142 = vpack.c.b16 %v112, %v110
    %v143 = vpack.c.b16 %v113, %v111
    %v144 = vpack.c.b16 %v116, %v114
    %v145 = vpack.c.b16 %v117, %v115
    %v146 = vpack.c.b16 %v120, %v118
    %v147 = vpack.c.b16 %v121, %v119
    %v148 = vpack.c.b16 %v124, %v122
    %v149 = vpack.c.b16 %v125, %v123
    %v150 = vpack.c.b16 %v128, %v126
    %v151 = vpack.c.b16 %v129, %v127
    %v152 = vpack.c.b16 %v132, %v130
    %v153 = vpack.c.b16 %v133, %v131
    %v154 = vpack.c.b16 %v136, %v134
    %v155 = vpack.c.b16 %v137, %v135
    %v156 = vpack.c.b16 %v140, %v138
    %v157 = vpack.c.b16 %v141, %v139
    %174 = vmatpush.bf16.msra.mxu0 %v156
    %175 = vmatpush.bf16.msra.mxu0 %v154
    %176 = vmatpush.bf16.msra.mxu0 %v152
    %177 = vmatpush.bf16.msra.mxu0 %v150
    %178 = vmatpush.bf16.msra.mxu0 %v148
    %179 = vmatpush.bf16.msra.mxu0 %v146
    %180 = vmatpush.bf16.msra.mxu0 %v144
    %181 = vmatpush.bf16.msra.mxu0 %v142
    %182 = vmatmul.bf16.gmra.mxu0 %v86
    %v183 = vpop.f32.mrf.mxu0
    %v184 = vadd.f32 %v66, %v183
    %v185 = vpop.f32.mrf.mxu0
    %v186 = vadd.f32 %v66, %v185
    %187 = vmatmul.bf16.gmra.mxu0 %v87
    %v188 = vpop.f32.mrf.mxu0
    %v189 = vadd.f32 %v66, %v188
    %v190 = vpop.f32.mrf.mxu0
    %v191 = vadd.f32 %v66, %v190
    %192 = vmatmul.bf16.gmra.mxu0 %v88
    %v193 = vpop.f32.mrf.mxu0
    %v194 = vadd.f32 %v66, %v193
    %v195 = vpop.f32.mrf.mxu0
    %v196 = vadd.f32 %v66, %v195
    %197 = vmatmul.bf16.gmra.mxu0 %v89
    %v198 = vpop.f32.mrf.mxu0
    %v199 = vadd.f32 %v66, %v198
    %v200 = vpop.f32.mrf.mxu0
    %v201 = vadd.f32 %v66, %v200
    %202 = vdwg.mxu0
    %203 = vmatpush.bf16.msra.mxu0 %v157
    %204 = vmatpush.bf16.msra.mxu0 %v155
    %205 = vmatpush.bf16.msra.mxu0 %v153
    %206 = vmatpush.bf16.msra.mxu0 %v151
    %207 = vmatpush.bf16.msra.mxu0 %v149
    %208 = vmatpush.bf16.msra.mxu0 %v147
    %209 = vmatpush.bf16.msra.mxu0 %v145
    %210 = vmatpush.bf16.msra.mxu0 %v143
    %211 = vmatmul.bf16.gmra.mxu0 %v86
    %v212 = vpop.f32.mrf.mxu0
    %v213 = vadd.f32 %v67, %v212
    %v214 = vpop.f32.mrf.mxu0
    %v215 = vadd.f32 %v67, %v214
    %216 = vmatmul.bf16.gmra.mxu0 %v87
    %v217 = vpop.f32.mrf.mxu0
    %v218 = vadd.f32 %v67, %v217
    %v219 = vpop.f32.mrf.mxu0
    %v220 = vadd.f32 %v67, %v219
    %221 = vmatmul.bf16.gmra.mxu0 %v88
    %v222 = vpop.f32.mrf.mxu0
    %v223 = vadd.f32 %v67, %v222
    %v224 = vpop.f32.mrf.mxu0
    %v225 = vadd.f32 %v67, %v224
    %226 = vmatmul.bf16.gmra.mxu0 %v89
    %v227 = vpop.f32.mrf.mxu0
    %v228 = vadd.f32 %v67, %v227
    %v229 = vpop.f32.mrf.mxu0
    %v230 = vadd.f32 %v67, %v229
    %231 = vdwg.mxu0
    %v232 = vmax.f32 %v184, 0.0
    %v233 = vmax.f32 %v213, 0.0
    %v234 = vmax.f32 %v186, 0.0
    %v235 = vmax.f32 %v215, 0.0
    %v236 = vmax.f32 %v189, 0.0
    %v237 = vmax.f32 %v218, 0.0
    %v238 = vmax.f32 %v191, 0.0
    %v239 = vmax.f32 %v220, 0.0
    %v240 = vmax.f32 %v194, 0.0
    %v241 = vmax.f32 %v223, 0.0
    %v242 = vmax.f32 %v196, 0.0
    %v243 = vmax.f32 %v225, 0.0
    %v244 = vmax.f32 %v199, 0.0
    %v245 = vmax.f32 %v228, 0.0
    %v246 = vmax.f32 %v201, 0.0
    %v247 = vmax.f32 %v230, 0.0
    %v248 = vpack.c.bf16 %v234, %v232
    %v249 = vpack.c.bf16 %v235, %v233
    %v250 = vpack.c.bf16 %v238, %v236
    %v251 = vpack.c.bf16 %v239, %v237
    %v252 = vpack.c.bf16 %v242, %v240
    %v253 = vpack.c.bf16 %v243, %v241
    %v254 = vpack.c.bf16 %v246, %v244
    %v255 = vpack.c.bf16 %v247, %v245
    %v256 = vld [vmem:[%s3] sm:$0xf]
    %v257 = vld [vmem:[%s3 + $0x4] sm:$0xf]
    %v258 = vld [vmem:[%s3 + $0x8] sm:$0xf]
    %v259 = vld [vmem:[%s3 + $0xc] sm:$0xf]
    %v260 = vld [vmem:[%s3 + $0x10] sm:$0xf]
    %v261 = vld [vmem:[%s3 + $0x14] sm:$0xf]
    %v262 = vld [vmem:[%s3 + $0x18] sm:$0xf]
    %v263 = vld [vmem:[%s3 + $0x1c] sm:$0xf]
    %v264 = vld [vmem:[%s3 + $0x20] sm:$0xf]
    %v265 = vld [vmem:[%s3 + $0x24] sm:$0xf]
    %v266 = vld [vmem:[%s3 + $0x28] sm:$0xf]
    %v267 = vld [vmem:[%s3 + $0x2c] sm:$0xf]
    %v268 = vld [vmem:[%s3 + $0x30] sm:$0xf]
    %v269 = vld [vmem:[%s3 + $0x34] sm:$0xf]
    %v270 = vld [vmem:[%s3 + $0x38] sm:$0xf]
    %v271 = vld [vmem:[%s3 + $0x3c] sm:$0xf]
    %v272 = vld [vmem:[%s3 + $0x40] sm:$0xf]
    %v273 = vld [vmem:[%s3 + $0x44] sm:$0xf]
    %v274 = vld [vmem:[%s3 + $0x48] sm:$0xf]
    %v275 = vld [vmem:[%s3 + $0x4c] sm:$0xf]
    %v276 = vld [vmem:[%s3 + $0x50] sm:$0xf]
    %v277 = vld [vmem:[%s3 + $0x54] sm:$0xf]
    %v278 = vld [vmem:[%s3 + $0x58] sm:$0xf]
    %v279 = vld [vmem:[%s3 + $0x5c] sm:$0xf]
    %v280 = vld [vmem:[%s3 + $0x60] sm:$0xf]
    %v281 = vld [vmem:[%s3 + $0x64] sm:$0xf]
    %v282 = vld [vmem:[%s3 + $0x68] sm:$0xf]
    %v283 = vld [vmem:[%s3 + $0x6c] sm:$0xf]
    %v284 = vld [vmem:[%s3 + $0x70] sm:$0xf]
    %v285 = vld [vmem:[%s3 + $0x74] sm:$0xf]
    %v286 = vld [vmem:[%s3 + $0x78] sm:$0xf]
    %v287 = vld [vmem:[%s3 + $0x7c] sm:$0xf]
    %v288 = vld [vmem:[%s4] sm:$0x1]
    %v290 = vperm.slane %v288, 0
    %v324 = vunpack.c.l.b16 %v256
    %v325 = vunpack.c.l.b16 %v257
    %v326 = vunpack.c.l.b16 %v258
    %v327 = vunpack.c.l.b16 %v259
    %v328 = vunpack.c.l.b16 %v260
    %v329 = vunpack.c.l.b16 %v261
    %v330 = vunpack.c.l.b16 %v262
    %v331 = vunpack.c.l.b16 %v263
    %v332 = vunpack.c.l.b16 %v264
    %v333 = vunpack.c.l.b16 %v265
    %v334 = vunpack.c.l.b16 %v266
    %v335 = vunpack.c.l.b16 %v267
    %v336 = vunpack.c.l.b16 %v268
    %v337 = vunpack.c.l.b16 %v269
    %v338 = vunpack.c.l.b16 %v270
    %v339 = vunpack.c.l.b16 %v271
    %v340 = vunpack.c.l.b16 %v272
    %v341 = vunpack.c.l.b16 %v273
    %v342 = vunpack.c.l.b16 %v274
    %v343 = vunpack.c.l.b16 %v275
    %v344 = vunpack.c.l.b16 %v276
    %v345 = vunpack.c.l.b16 %v277
    %v346 = vunpack.c.l.b16 %v278
    %v347 = vunpack.c.l.b16 %v279
    %v348 = vunpack.c.l.b16 %v280
    %v349 = vunpack.c.l.b16 %v281
    %v350 = vunpack.c.l.b16 %v282
    %v351 = vunpack.c.l.b16 %v283
    %v352 = vunpack.c.l.b16 %v284
    %v353 = vunpack.c.l.b16 %v285
    %v354 = vunpack.c.l.b16 %v286
    %v355 = vunpack.c.l.b16 %v287
    %v356 = vpack.c.b16 %v325, %v324
    %v357 = vpack.c.b16 %v327, %v326
    %v358 = vpack.c.b16 %v329, %v328
    %v359 = vpack.c.b16 %v331, %v330
    %v360 = vpack.c.b16 %v333, %v332
    %v361 = vpack.c.b16 %v335, %v334
    %v362 = vpack.c.b16 %v337, %v336
    %v363 = vpack.c.b16 %v339, %v338
    %v364 = vpack.c.b16 %v341, %v340
    %v365 = vpack.c.b16 %v343, %v342
    %v366 = vpack.c.b16 %v345, %v344
    %v367 = vpack.c.b16 %v347, %v346
    %v368 = vpack.c.b16 %v349, %v348
    %v369 = vpack.c.b16 %v351, %v350
    %v370 = vpack.c.b16 %v353, %v352
    %v371 = vpack.c.b16 %v355, %v354
    %388 = vmatpush.bf16.msra.mxu0 %v363
    %389 = vmatpush.bf16.msra.mxu0 %v362
    %390 = vmatpush.bf16.msra.mxu0 %v361
    %391 = vmatpush.bf16.msra.mxu0 %v360
    %392 = vmatpush.bf16.msra.mxu0 %v359
    %393 = vmatpush.bf16.msra.mxu0 %v358
    %394 = vmatpush.bf16.msra.mxu0 %v357
    %395 = vmatpush.bf16.msra.mxu0 %v356
    %396 = vmatmul.bf16.gmra.mxu0 %v248
    %v397 = vpop.f32.mrf.mxu0
    %v398 = vadd.f32 %v290, %v397
    %v399 = vpop.f32.mrf.mxu0
    %v400 = vadd.f32 %v290, %v399
    %401 = vmatmul.bf16.gmra.mxu0 %v250
    %v402 = vpop.f32.mrf.mxu0
    %v403 = vadd.f32 %v290, %v402
    %v404 = vpop.f32.mrf.mxu0
    %v405 = vadd.f32 %v290, %v404
    %406 = vmatmul.bf16.gmra.mxu0 %v252
    %v407 = vpop.f32.mrf.mxu0
    %v408 = vadd.f32 %v290, %v407
    %v409 = vpop.f32.mrf.mxu0
    %v410 = vadd.f32 %v290, %v409
    %411 = vmatmul.bf16.gmra.mxu0 %v254
    %v412 = vpop.f32.mrf.mxu0
    %v413 = vadd.f32 %v290, %v412
    %v414 = vpop.f32.mrf.mxu0
    %v415 = vadd.f32 %v290, %v414
    %416 = vdwg.mxu0
    %417 = vmatpush.bf16.msra.mxu0 %v371
    %418 = vmatpush.bf16.msra.mxu0 %v370
    %419 = vmatpush.bf16.msra.mxu0 %v369
    %420 = vmatpush.bf16.msra.mxu0 %v368
    %421 = vmatpush.bf16.msra.mxu0 %v367
    %422 = vmatpush.bf16.msra.mxu0 %v366
    %423 = vmatpush.bf16.msra.mxu0 %v365
    %424 = vmatpush.bf16.msra.mxu0 %v364
    %425 = vmatmul.bf16.gmra.mxu0 %v249
    %v426 = vpop.f32.mrf.mxu0
    %v427 = vadd.f32 %v398, %v426
    %v428 = vpop.f32.mrf.mxu0
    %v429 = vadd.f32 %v400, %v428
    %430 = vmatmul.bf16.gmra.mxu0 %v251
    %v431 = vpop.f32.mrf.mxu0
    %v432 = vadd.f32 %v403, %v431
    %v433 = vpop.f32.mrf.mxu0
    %v434 = vadd.f32 %v405, %v433
    %435 = vmatmul.bf16.gmra.mxu0 %v253
    %v436 = vpop.f32.mrf.mxu0
    %v437 = vadd.f32 %v408, %v436
    %v438 = vpop.f32.mrf.mxu0
    %v439 = vadd.f32 %v410, %v438
    %440 = vmatmul.bf16.gmra.mxu0 %v255
    %v441 = vpop.f32.mrf.mxu0
    %v442 = vadd.f32 %v413, %v441
    %v443 = vpop.f32.mrf.mxu0
    %v444 = vadd.f32 %v415, %v443
    %445 = vdwg.mxu0
    %v446 = vunpack.c.l.bf16 %v40
    %v447 = vunpack.c.l.bf16 %v41
    %v448 = vunpack.c.l.bf16 %v42
    %v449 = vunpack.c.l.bf16 %v43
    %v450 = vunpack.c.l.bf16 %v44
    %v451 = vunpack.c.l.bf16 %v45
    %v452 = vunpack.c.l.bf16 %v46
    %v453 = vunpack.c.l.bf16 %v47
    %v454 = vadd.f32 %v446, %v427
    %v455 = vadd.f32 %v447, %v429
    %v456 = vadd.f32 %v448, %v432
    %v457 = vadd.f32 %v449, %v434
    %v458 = vadd.f32 %v450, %v437
    %v459 = vadd.f32 %v451, %v439
    %v460 = vadd.f32 %v452, %v442
    %v461 = vadd.f32 %v453, %v444
    %462 = vadd.xlane.f32.xlu0 %v454
    %v463 = vpop.xlane.xlu0 %462
    %464 = vadd.xlane.f32.xlu0 %v455
    %v465 = vpop.xlane.xlu0 %464
    %466 = vadd.xlane.f32.xlu0 %v456
    %v467 = vpop.xlane.xlu0 %466
    %468 = vadd.xlane.f32.xlu0 %v457
    %v469 = vpop.xlane.xlu0 %468
    %470 = vadd.xlane.f32.xlu0 %v458
    %v471 = vpop.xlane.xlu0 %470
    %472 = vadd.xlane.f32.xlu0 %v459
    %v473 = vpop.xlane.xlu0 %472
    %474 = vadd.xlane.f32.xlu0 %v460
    %v475 = vpop.xlane.xlu0 %474
    %476 = vadd.xlane.f32.xlu0 %v461
    %v477 = vpop.xlane.xlu0 %476
    %v478 = vrcp.pop 128.0
    %v479 = vmul.f32 128.0, %v478
    %v480 = vsub.f32 1.0, %v479
    %v481 = vmul.f32 %v478, %v480
    %v482 = vadd.f32 %v478, %v481
    %vm483 = vweird.f32 %v478
    %v484 = vsel %vm483, %v478, %v482
    %v485 = vmul.f32 %v463, %v484
    %v486 = vmul.f32 %v465, %v484
    %v487 = vmul.f32 %v467, %v484
    %v488 = vmul.f32 %v469, %v484
    %v489 = vmul.f32 %v471, %v484
    %v490 = vmul.f32 %v473, %v484
    %v491 = vmul.f32 %v475, %v484
    %v492 = vmul.f32 %v477, %v484
    %v493 = vsub.f32 %v454, %v485
    %v494 = vsub.f32 %v455, %v486
    %v495 = vsub.f32 %v456, %v487
    %v496 = vsub.f32 %v457, %v488
    %v497 = vsub.f32 %v458, %v489
    %v498 = vsub.f32 %v459, %v490
    %v499 = vsub.f32 %v460, %v491
    %v500 = vsub.f32 %v461, %v492
    %v501 = vmul.f32 %v493, %v493
    %v502 = vmul.f32 %v494, %v494
    %v503 = vmul.f32 %v495, %v495
    %v504 = vmul.f32 %v496, %v496
    %v505 = vmul.f32 %v497, %v497
    %v506 = vmul.f32 %v498, %v498
    %v507 = vmul.f32 %v499, %v499
    %v508 = vmul.f32 %v500, %v500
    %509 = vadd.xlane.f32.xlu0 %v501
    %v510 = vpop.xlane.xlu0 %509
    %511 = vadd.xlane.f32.xlu0 %v502
    %v512 = vpop.xlane.xlu0 %511
    %513 = vadd.xlane.f32.xlu0 %v503
    %v514 = vpop.xlane.xlu0 %513
    %515 = vadd.xlane.f32.xlu0 %v504
    %v516 = vpop.xlane.xlu0 %515
    %517 = vadd.xlane.f32.xlu0 %v505
    %v518 = vpop.xlane.xlu0 %517
    %519 = vadd.xlane.f32.xlu0 %v506
    %v520 = vpop.xlane.xlu0 %519
    %521 = vadd.xlane.f32.xlu0 %v507
    %v522 = vpop.xlane.xlu0 %521
    %523 = vadd.xlane.f32.xlu0 %v508
    %v524 = vpop.xlane.xlu0 %523
    %v525 = vmul.f32 %v510, %v484
    %v526 = vmul.f32 %v512, %v484
    %v527 = vmul.f32 %v514, %v484
    %v528 = vmul.f32 %v516, %v484
    %v529 = vmul.f32 %v518, %v484
    %v530 = vmul.f32 %v520, %v484
    %v531 = vmul.f32 %v522, %v484
    %v532 = vmul.f32 %v524, %v484
    %v533 = vadd.f32 %v525, 1e-05
    %v534 = vadd.f32 %v526, 1e-05
    %v535 = vadd.f32 %v527, 1e-05
    %v536 = vadd.f32 %v528, 1e-05
    %v537 = vadd.f32 %v529, 1e-05
    %v538 = vadd.f32 %v530, 1e-05
    %v539 = vadd.f32 %v531, 1e-05
    %v540 = vadd.f32 %v532, 1e-05
    %v541 = vrsqrt.pop %v533
    %v542 = vmul.f32 %v541, %v533
    %v543 = vmul.f32 %v542, %v541
    %v544 = vmul.f32 0.5, %v543
    %v545 = vsub.f32 1.5, %v544
    %v546 = vmul.f32 %v541, %v545
    %vm547 = vweird.f32 %v533
    %vm548 = vweird.f32 %v541
    %vm549 = vmor %vm547, %vm548
    %v550 = vsel %vm549, %v541, %v546
    %v551 = vrsqrt.pop %v534
    %v552 = vmul.f32 %v551, %v534
    %v553 = vmul.f32 %v552, %v551
    %v554 = vmul.f32 0.5, %v553
    %v555 = vsub.f32 1.5, %v554
    %v556 = vmul.f32 %v551, %v555
    %vm557 = vweird.f32 %v534
    %vm558 = vweird.f32 %v551
    %vm559 = vmor %vm557, %vm558
    %v560 = vsel %vm559, %v551, %v556
    %v561 = vrsqrt.pop %v535
    %v562 = vmul.f32 %v561, %v535
    %v563 = vmul.f32 %v562, %v561
    %v564 = vmul.f32 0.5, %v563
    %v565 = vsub.f32 1.5, %v564
    %v566 = vmul.f32 %v561, %v565
    %vm567 = vweird.f32 %v535
    %vm568 = vweird.f32 %v561
    %vm569 = vmor %vm567, %vm568
    %v570 = vsel %vm569, %v561, %v566
    %v571 = vrsqrt.pop %v536
    %v572 = vmul.f32 %v571, %v536
    %v573 = vmul.f32 %v572, %v571
    %v574 = vmul.f32 0.5, %v573
    %v575 = vsub.f32 1.5, %v574
    %v576 = vmul.f32 %v571, %v575
    %vm577 = vweird.f32 %v536
    %vm578 = vweird.f32 %v571
    %vm579 = vmor %vm577, %vm578
    %v580 = vsel %vm579, %v571, %v576
    %v581 = vrsqrt.pop %v537
    %v582 = vmul.f32 %v581, %v537
    %v583 = vmul.f32 %v582, %v581
    %v584 = vmul.f32 0.5, %v583
    %v585 = vsub.f32 1.5, %v584
    %v586 = vmul.f32 %v581, %v585
    %vm587 = vweird.f32 %v537
    %vm588 = vweird.f32 %v581
    %vm589 = vmor %vm587, %vm588
    %v590 = vsel %vm589, %v581, %v586
    %v591 = vrsqrt.pop %v538
    %v592 = vmul.f32 %v591, %v538
    %v593 = vmul.f32 %v592, %v591
    %v594 = vmul.f32 0.5, %v593
    %v595 = vsub.f32 1.5, %v594
    %v596 = vmul.f32 %v591, %v595
    %vm597 = vweird.f32 %v538
    %vm598 = vweird.f32 %v591
    %vm599 = vmor %vm597, %vm598
    %v600 = vsel %vm599, %v591, %v596
    %v601 = vrsqrt.pop %v539
    %v602 = vmul.f32 %v601, %v539
    %v603 = vmul.f32 %v602, %v601
    %v604 = vmul.f32 0.5, %v603
    %v605 = vsub.f32 1.5, %v604
    %v606 = vmul.f32 %v601, %v605
    %vm607 = vweird.f32 %v539
    %vm608 = vweird.f32 %v601
    %vm609 = vmor %vm607, %vm608
    %v610 = vsel %vm609, %v601, %v606
    %v611 = vrsqrt.pop %v540
    %v612 = vmul.f32 %v611, %v540
    %v613 = vmul.f32 %v612, %v611
    %v614 = vmul.f32 0.5, %v613
    %v615 = vsub.f32 1.5, %v614
    %v616 = vmul.f32 %v611, %v615
    %vm617 = vweird.f32 %v540
    %vm618 = vweird.f32 %v611
    %vm619 = vmor %vm617, %vm618
    %v620 = vsel %vm619, %v611, %v616
    %v621 = vmul.f32 %v493, %v550
    %v622 = vmul.f32 %v494, %v560
    %v623 = vmul.f32 %v495, %v570
    %v624 = vmul.f32 %v496, %v580
    %v625 = vmul.f32 %v497, %v590
    %v626 = vmul.f32 %v498, %v600
    %v627 = vmul.f32 %v499, %v610
    %v628 = vmul.f32 %v500, %v620
    %v629 = vld [vmem:[%s5] sm:$0x1]
    %v631 = vperm.slane %v629, 0
    %v633 = vmul.f32 %v621, %v631
    %v634 = vmul.f32 %v622, %v631
    %v635 = vmul.f32 %v623, %v631
    %v636 = vmul.f32 %v624, %v631
    %v637 = vmul.f32 %v625, %v631
    %v638 = vmul.f32 %v626, %v631
    %v639 = vmul.f32 %v627, %v631
    %v640 = vmul.f32 %v628, %v631
    %v641 = vld [vmem:[#allocation2] sm:$0x1]
    %v643 = vperm.slane %v641, 0
    %v645 = vadd.f32 %v633, %v643
    %v646 = vadd.f32 %v634, %v643
    %v647 = vadd.f32 %v635, %v643
    %v648 = vadd.f32 %v636, %v643
    %v649 = vadd.f32 %v637, %v643
    %v650 = vadd.f32 %v638, %v643
    %v651 = vadd.f32 %v639, %v643
    %v652 = vadd.f32 %v640, %v643
    %v653 = vpack.c.bf16 %v645, %v645
    %v654 = vpack.c.bf16 %v646, %v646
    %v655 = vpack.c.bf16 %v647, %v647
    %v656 = vpack.c.bf16 %v648, %v648
    %v657 = vpack.c.bf16 %v649, %v649
    %v658 = vpack.c.bf16 %v650, %v650
    %v659 = vpack.c.bf16 %v651, %v651
    %v660 = vpack.c.bf16 %v652, %v652
    %661 = vst [vmem:[%s7] sm:$0xf] %v653
    %662 = vst [vmem:[%s7 + $0x4] sm:$0xf] %v654
    %663 = vst [vmem:[%s7 + $0x8] sm:$0xf] %v655
    %664 = vst [vmem:[%s7 + $0xc] sm:$0xf] %v656
    %665 = vst [vmem:[%s7 + $0x10] sm:$0xf] %v657
    %666 = vst [vmem:[%s7 + $0x14] sm:$0xf] %v658
    %667 = vst [vmem:[%s7 + $0x18] sm:$0xf] %v659
    %668 = vst [vmem:[%s7 + $0x1c] sm:$0xf] %v660
    // Predicated region
    $region34: #{transformer_forward.9} parent=1 // pred_check
      _
    $region35: #{transformer_forward.9} parent=1 // pred_check_branch
      %670 = sbr.rel (0) target = $region37
    $region36: #{transformer_forward.9} parent=1 // pred_region
      _
    $region37: #{transformer_forward.9} parent=1 // pred_fallthru
      _
    // Predicated region
    $region38: #{transformer_forward.9} parent=1 // pred_check
      _
    $region39: #{transformer_forward.9} parent=1 // pred_check_branch
      %672 = sbr.rel (0) target = $region41
    $region40: #{transformer_forward.9} parent=1 // pred_region
      _
    $region41: #{transformer_forward.9} parent=1 // pred_fallthru
      _
    %673 = vsyncpa [#allocation3], 1

// kernel: transformer_forward.8
$region0: #{transformer_forward.8}
  #allocation0 [shape = 'u32[]', space=smem, size = 0x4, offset = 0x4, fixed_abs, tag = 'smem constant byte address 0x4 - core index']
  #allocation1 [shape = 'u32[72,128]{1,0:T(1,128)}', space=vmem, size = 0x9000, scoped, tag = 'internal scratch']
  #allocation2 [shape = 'f32[16,128]{1,0:T(8,128)}', space=vmem, size = 0x2000, scoped, tag = 'scratch operand']
  %s0 = inlined_call_operand.vmem [shape: bf16[2,32,128], index: 0, kind: input, shape index: {}]
  %s1 = inlined_call_operand.vmem [shape: bf16[2,32,128], index: 1, kind: input, shape index: {}]
  %s2 = inlined_call_operand.vmem [shape: bf16[2,32,128], index: 2, kind: input, shape index: {}]
  %s3 = inlined_call_operand.vmem [shape: bf16[2,32,128], index: 3, kind: input, shape index: {}]
  %s4 = inlined_call_operand.hbm [shape: bf16[128,128], index: 4, kind: input, shape index: {}]
  %s5 = inlined_call_operand.vmem [shape: f32[1,128], index: 5, kind: input, shape index: {}]
  %s6 = inlined_call_operand.vmem [shape: f32[1,128], index: 6, kind: input, shape index: {}]
  %s7 = inlined_call_operand.vmem [shape: f32[1,128], index: 7, kind: input, shape index: {}]
  %s8 = inlined_call_operand.vmem [shape: bf16[2,32,128], index: 8, kind: output, shape index: {}]
  %s9 = sld [smem:[#allocation0]]
  $region69: #{transformer_forward.8} parent=0
    _
  %s11 = ssub.s32 1, %s9
  %s12 = scalar_select 0, %s11, %s9
  $region1: #{transformer_forward.8} parent=0
    #allocation3 [shape = 'u8[32768]{0}', space=vmem, size = 0x8000, scoped, tag = 'input window, operand 4, single buffered']
    #allocation4 [shape = 's32[2]{0}', space=sflag, size = 0x8, scoped, tag = 'scoped memory for transformer_forward.8']
    %13 = vsyncpa [#allocation4], 0
    loop: start=0, step=1, limit=6
    $region2: #{transformer_forward.8} parent=1 // loop_pre_header
      _
    $region3: #{transformer_forward.8} parent=1 // loop_header
      %s15 = sphi 0, %s19
      %p16 = scmp.ge.s32.totalorder %s15, 6
      %s22 = sphi 0, %s34
      %s23 = sphi 0, %s30
      %s24 = sphi 0, %s22
      %s25 = sphi 0, %s23
      %s26 = sphi 0, %s24
      %s27 = sphi 0, %s25
      %s39 = sphi 0, %s41
      %s42 = sphi 0, %s39
      %s43 = sphi 0, %s42
      %s59 = sphi 0, %s43
      %s65 = sphi 0, %s67
      %s68 = sphi 0, %s65
      %s69 = sphi 0, %s68
      %s85 = sphi 0, %s69
      %s91 = sphi 0, %s93
      %s94 = sphi 0, %s91
      %s95 = sphi 0, %s94
      %s111 = sphi 0, %s95
      %s119 = sphi 0, %s121
      %s122 = sphi 0, %s119
      %s123 = sphi 0, %s122
      %s139 = sphi 0, %s123
      %s143 = sphi 0, %s143
      %s145 = sphi 0, %s143
      %s146 = sphi 0, %s145
      %s160 = sphi 0, %s146
      %s164 = sphi 0, %s164
      %s166 = sphi 0, %s164
      %s167 = sphi 0, %s166
      %s181 = sphi 0, %s167
      %s185 = sphi 0, %s185
      %s187 = sphi 0, %s185
      %s188 = sphi 0, %s187
      %s202 = sphi 0, %s188
      %s206 = sphi 0, %s206
      %s208 = sphi 0, %s206
      %s209 = sphi 0, %s208
      %s223 = sphi 0, %s209
      %s231 = sphi 0, %s233
      %s234 = sphi 0, %s231
      %s235 = sphi 0, %s234
      %s251 = sphi 0, %s235
    $region4: #{transformer_forward.8} parent=1 // loop_header_branch
      %18 = sbr.rel (%p16) target = $region8
    $region5: #{transformer_forward.8} parent=1 // loop_body
      %s20 = ssub.s32 %s15, 1
      %s21 = ssub.s32 %s15, 2
      %s28 = sadd.s32 1, %s23
      %p29 = scmp.ge.s32.totalorder %s28, 2
      %s30 = scalar_select %p29, 0, %s28
      %s31 = sadd.s32 1, %s22
      %s32 = scalar_select %p29, %s31, %s22
      %p33 = scmp.ge.s32.totalorder %s32, 2
      %s34 = scalar_select %p33, 0, %s32
      %s35 = ssub.s32 %s22, %s34
      %s36 = ssub.s32 %s23, %s30
      %s37 = sor.u32 %s35, %s36
      %p38 = scmp.eq.s32.totalorder %s37, 0
      %s40 = sadd.s32 %s39, 1
      %s41 = scalar_select %p38, %s39, %s40
      %p44 = pneg %p38
      %p45 = scmp.eq.s32.totalorder %s15, 3
      %p46 = por %p44, %p45
      %p47 = scmp.ne.s32.totalorder %s39, %s42
      %p48 = scmp.eq.s32.totalorder %s15, 0
      %p49 = por %p47, %p48
      %p50 = scmp.ne.s32.totalorder %s39, %s42
      %p51 = scmp.eq.s32.totalorder %s20, 3
      %p52 = por %p50, %p51
      %p53 = scmp.ne.s32.totalorder %s42, %s43
      %p54 = scmp.eq.s32.totalorder %s20, 0
      %p55 = por %p53, %p54
      %p56 = scmp.ne.s32.totalorder %s42, %s43
      %p57 = scmp.eq.s32.totalorder %s21, 3
      %p58 = por %p56, %p57
      %p60 = scmp.ne.s32.totalorder %s43, %s59
      %p61 = scmp.eq.s32.totalorder %s21, 0
      %p62 = por %p60, %p61
      %s63 = ssub.s32 %s22, %s34
      %p64 = scmp.eq.s32.totalorder %s63, 0
      %s66 = sadd.s32 %s65, 1
      %s67 = scalar_select %p64, %s65, %s66
      %p70 = pneg %p64
      %p71 = scmp.eq.s32.totalorder %s15, 3
      %p72 = por %p70, %p71
      %p73 = scmp.ne.s32.totalorder %s65, %s68
      %p74 = scmp.eq.s32.totalorder %s15, 0
      %p75 = por %p73, %p74
      %p76 = scmp.ne.s32.totalorder %s65, %s68
      %p77 = scmp.eq.s32.totalorder %s20, 3
      %p78 = por %p76, %p77
      %p79 = scmp.ne.s32.totalorder %s68, %s69
      %p80 = scmp.eq.s32.totalorder %s20, 0
      %p81 = por %p79, %p80
      %p82 = scmp.ne.s32.totalorder %s68, %s69
      %p83 = scmp.eq.s32.totalorder %s21, 3
      %p84 = por %p82, %p83
      %p86 = scmp.ne.s32.totalorder %s69, %s85
      %p87 = scmp.eq.s32.totalorder %s21, 0
      %p88 = por %p86, %p87
      %s89 = ssub.s32 %s22, %s34
      %p90 = scmp.eq.s32.totalorder %s89, 0
      %s92 = sadd.s32 %s91, 1
      %s93 = scalar_select %p90, %s91, %s92
      %p96 = pneg %p90
      %p97 = scmp.eq.s32.totalorder %s15, 3
      %p98 = por %p96, %p97
      %p99 = scmp.ne.s32.totalorder %s91, %s94
      %p100 = scmp.eq.s32.totalorder %s15, 0
      %p101 = por %p99, %p100
      %p102 = scmp.ne.s32.totalorder %s91, %s94
      %p103 = scmp.eq.s32.totalorder %s20, 3
      %p104 = por %p102, %p103
      %p105 = scmp.ne.s32.totalorder %s94, %s95
      %p106 = scmp.eq.s32.totalorder %s20, 0
      %p107 = por %p105, %p106
      %p108 = scmp.ne.s32.totalorder %s94, %s95
      %p109 = scmp.eq.s32.totalorder %s21, 3
      %p110 = por %p108, %p109
      %p112 = scmp.ne.s32.totalorder %s95, %s111
      %p113 = scmp.eq.s32.totalorder %s21, 0
      %p114 = por %p112, %p113
      %s115 = ssub.s32 %s22, %s34
      %s116 = ssub.s32 %s23, %s30
      %s117 = sor.u32 %s115, %s116
      %p118 = scmp.eq.s32.totalorder %s117, 0
      %s120 = sadd.s32 %s119, 1
      %s121 = scalar_select %p118, %s119, %s120
      %p124 = pneg %p118
      %p125 = scmp.eq.s32.totalorder %s15, 3
      %p126 = por %p124, %p125
      %p127 = scmp.ne.s32.totalorder %s119, %s122
      %p128 = scmp.eq.s32.totalorder %s15, 0
      %p129 = por %p127, %p128
      %p130 = scmp.ne.s32.totalorder %s119, %s122
      %p131 = scmp.eq.s32.totalorder %s20, 3
      %p132 = por %p130, %p131
      %p133 = scmp.ne.s32.totalorder %s122, %s123
      %p134 = scmp.eq.s32.totalorder %s20, 0
      %p135 = por %p133, %p134
      %p136 = scmp.ne.s32.totalorder %s122, %s123
      %p137 = scmp.eq.s32.totalorder %s21, 3
      %p138 = por %p136, %p137
      %p140 = scmp.ne.s32.totalorder %s123, %s139
      %p141 = scmp.eq.s32.totalorder %s21, 0
      %p142 = por %p140, %p141
      %s144 = sadd.s32 %s143, 1
      %p147 = scmp.eq.s32.totalorder %s15, 3
      %p148 = scmp.ne.s32.totalorder %s143, %s145
      %p149 = scmp.eq.s32.totalorder %s15, 0
      %p150 = por %p148, %p149
      %p151 = scmp.ne.s32.totalorder %s143, %s145
      %p152 = scmp.eq.s32.totalorder %s20, 3
      %p153 = por %p151, %p152
      %p154 = scmp.ne.s32.totalorder %s145, %s146
      %p155 = scmp.eq.s32.totalorder %s20, 0
      %p156 = por %p154, %p155
      %p157 = scmp.ne.s32.totalorder %s145, %s146
      %p158 = scmp.eq.s32.totalorder %s21, 3
      %p159 = por %p157, %p158
      %p161 = scmp.ne.s32.totalorder %s146, %s160
      %p162 = scmp.eq.s32.totalorder %s21, 0
      %p163 = por %p161, %p162
      %s165 = sadd.s32 %s164, 1
      %p168 = scmp.eq.s32.totalorder %s15, 3
      %p169 = scmp.ne.s32.totalorder %s164, %s166
      %p170 = scmp.eq.s32.totalorder %s15, 0
      %p171 = por %p169, %p170
      %p172 = scmp.ne.s32.totalorder %s164, %s166
      %p173 = scmp.eq.s32.totalorder %s20, 3
      %p174 = por %p172, %p173
      %p175 = scmp.ne.s32.totalorder %s166, %s167
      %p176 = scmp.eq.s32.totalorder %s20, 0
      %p177 = por %p175, %p176
      %p178 = scmp.ne.s32.totalorder %s166, %s167
      %p179 = scmp.eq.s32.totalorder %s21, 3
      %p180 = por %p178, %p179
      %p182 = scmp.ne.s32.totalorder %s167, %s181
      %p183 = scmp.eq.s32.totalorder %s21, 0
      %p184 = por %p182, %p183
      %s186 = sadd.s32 %s185, 1
      %p189 = scmp.eq.s32.totalorder %s15, 3
      %p190 = scmp.ne.s32.totalorder %s185, %s187
      %p191 = scmp.eq.s32.totalorder %s15, 0
      %p192 = por %p190, %p191
      %p193 = scmp.ne.s32.totalorder %s185, %s187
      %p194 = scmp.eq.s32.totalorder %s20, 3
      %p195 = por %p193, %p194
      %p196 = scmp.ne.s32.totalorder %s187, %s188
      %p197 = scmp.eq.s32.totalorder %s20, 0
      %p198 = por %p196, %p197
      %p199 = scmp.ne.s32.totalorder %s187, %s188
      %p200 = scmp.eq.s32.totalorder %s21, 3
      %p201 = por %p199, %p200
      %p203 = scmp.ne.s32.totalorder %s188, %s202
      %p204 = scmp.eq.s32.totalorder %s21, 0
      %p205 = por %p203, %p204
      %s207 = sadd.s32 %s206, 1
      %p210 = scmp.eq.s32.totalorder %s15, 3
      %p211 = scmp.ne.s32.totalorder %s206, %s208
      %p212 = scmp.eq.s32.totalorder %s15, 0
      %p213 = por %p211, %p212
      %p214 = scmp.ne.s32.totalorder %s206, %s208
      %p215 = scmp.eq.s32.totalorder %s20, 3
      %p216 = por %p214, %p215
      %p217 = scmp.ne.s32.totalorder %s208, %s209
      %p218 = scmp.eq.s32.totalorder %s20, 0
      %p219 = por %p217, %p218
      %p220 = scmp.ne.s32.totalorder %s208, %s209
      %p221 = scmp.eq.s32.totalorder %s21, 3
      %p222 = por %p220, %p221
      %p224 = scmp.ne.s32.totalorder %s209, %s223
      %p225 = scmp.eq.s32.totalorder %s21, 0
      %p226 = por %p224, %p225
      %s227 = ssub.s32 %s22, %s34
      %s228 = ssub.s32 %s23, %s30
      %s229 = sor.u32 %s227, %s228
      %p230 = scmp.eq.s32.totalorder %s229, 0
      %s232 = sadd.s32 %s231, 1
      %s233 = scalar_select %p230, %s231, %s232
      %p236 = pneg %p230
      %p237 = scmp.eq.s32.totalorder %s15, 3
      %p238 = por %p236, %p237
      %p239 = scmp.ne.s32.totalorder %s231, %s234
      %p240 = scmp.eq.s32.totalorder %s15, 0
      %p241 = por %p239, %p240
      %p242 = scmp.ne.s32.totalorder %s231, %s234
      %p243 = scmp.eq.s32.totalorder %s20, 3
      %p244 = por %p242, %p243
      %p245 = scmp.ne.s32.totalorder %s234, %s235
      %p246 = scmp.eq.s32.totalorder %s20, 0
      %p247 = por %p245, %p246
      %p248 = scmp.ne.s32.totalorder %s234, %s235
      %p249 = scmp.eq.s32.totalorder %s21, 3
      %p250 = por %p248, %p249
      %p252 = scmp.ne.s32.totalorder %s235, %s251
      %p253 = scmp.eq.s32.totalorder %s21, 0
      %p254 = por %p252, %p253
      %p255 = scmp.le.s32.totalorder 1, %s15
      %p256 = scmp.lt.s32.totalorder %s15, 5
      %p257 = pnand %p255, %p256
      %p258 = pneg %p257
      // Predicated region
      $region9: #{transformer_forward.8} parent=5 // pred_check
        _
      $region10: #{transformer_forward.8} parent=5 // pred_check_branch
        %260 = sbr.rel (%p257) target = $region12
      $region11: #{transformer_forward.8} parent=5 // pred_region
        %s261 = ssub.s32 %s15, 1
        // Predicated region
        $region13: #{transformer_forward.8} parent=11 // pred_check
          %p262 = pneg %p156
        $region14: #{transformer_forward.8} parent=11 // pred_check_branch
          %264 = sbr.rel (%p262) target = $region16
        $region15: #{transformer_forward.8} parent=11 // pred_region
          %266 = vsyncadd [#allocation4], 0
          %s267 = sshll.u32 %s4, 4
          %s268 = int_to_ptr.hbm [resolvable:$true] %s267
          %s269 = sshll.u32 [#allocation3], 4
          %s270 = int_to_ptr.vmem [resolvable:$true] %s269
          %275 = dma.hbm_to_vmem [thread:$0]  %s268, 1024, %s270, [#allocation4], 64, 64, 4
        $region16: #{transformer_forward.8} parent=11 // pred_fallthru
          _
        // Predicated region
        $region17: #{transformer_forward.8} parent=11 // pred_check
          %p276 = pneg %p177
        $region18: #{transformer_forward.8} parent=11 // pred_check_branch
          %278 = sbr.rel (%p276) target = $region20
        $region19: #{transformer_forward.8} parent=11 // pred_region
          _
        $region20: #{transformer_forward.8} parent=11 // pred_fallthru
          _
        // Predicated region
        $region21: #{transformer_forward.8} parent=11 // pred_check
          %p279 = pneg %p198
        $region22: #{transformer_forward.8} parent=11 // pred_check_branch
          %281 = sbr.rel (%p279) target = $region24
        $region23: #{transformer_forward.8} parent=11 // pred_region
          _
        $region24: #{transformer_forward.8} parent=11 // pred_fallthru
          _
        // Predicated region
        $region25: #{transformer_forward.8} parent=11 // pred_check
          %p282 = pneg %p219
        $region26: #{transformer_forward.8} parent=11 // pred_check_branch
          %284 = sbr.rel (%p282) target = $region28
        $region27: #{transformer_forward.8} parent=11 // pred_region
          _
        $region28: #{transformer_forward.8} parent=11 // pred_fallthru
          _
      $region12: #{transformer_forward.8} parent=5 // pred_fallthru
        _
      %p285 = scmp.lt.s32.totalorder %s15, 4
      // Predicated region
      $region29: #{transformer_forward.8} parent=5 // pred_check
        %p286 = pneg %p285
      $region30: #{transformer_forward.8} parent=5 // pred_check_branch
        %288 = sbr.rel (%p286) target = $region32
      $region31: #{transformer_forward.8} parent=5 // pred_region
        // Predicated region
        $region33: #{transformer_forward.8} parent=31 // pred_check
          %p289 = pneg %p49
        $region34: #{transformer_forward.8} parent=31 // pred_check_branch
          %291 = sbr.rel (%p289) target = $region36
        $region35: #{transformer_forward.8} parent=31 // pred_region
          %s292 = smul.u32 2, %s23
          %p293 = scmp.lt.s32.totalorder %s22, 1
          %s294 = scalar_select %p293, %s22, 1
          %p295 = scmp.lt.s32.totalorder %s292, 3
          %s296 = scalar_select %p295, %s292, 3
          %s297 = smul.addr %s294, 4
          %s298 = sadd.s32 %s296, %s297
          %s299 = smul.addr %s298, 4
          %s300 = scalar_lea.vmem %s0, %s299
          %s301 = smul.u32 2, %s23
        $region36: #{transformer_forward.8} parent=31 // pred_fallthru
          _
        // Predicated region
        $region37: #{transformer_forward.8} parent=31 // pred_check
          %p302 = pneg %p75
        $region38: #{transformer_forward.8} parent=31 // pred_check_branch
          %304 = sbr.rel (%p302) target = $region40
        $region39: #{transformer_forward.8} parent=31 // pred_region
          %p305 = scmp.lt.s32.totalorder %s22, 1
          %s306 = scalar_select %p305, %s22, 1
          %s307 = smul.addr %s306, 4
          %s308 = smul.addr %s307, 4
          %s309 = scalar_lea.vmem %s1, %s308
        $region40: #{transformer_forward.8} parent=31 // pred_fallthru
          _
        // Predicated region
        $region41: #{transformer_forward.8} parent=31 // pred_check
          %p310 = pneg %p101
        $region42: #{transformer_forward.8} parent=31 // pred_check_branch
          %312 = sbr.rel (%p310) target = $region44
        $region43: #{transformer_forward.8} parent=31 // pred_region
          %p313 = scmp.lt.s32.totalorder %s22, 1
          %s314 = scalar_select %p313, %s22, 1
          %s315 = smul.addr %s314, 4
          %s316 = smul.addr %s315, 4
          %s317 = scalar_lea.vmem %s2, %s316
        $region44: #{transformer_forward.8} parent=31 // pred_fallthru
          _
        // Predicated region
        $region45: #{transformer_forward.8} parent=31 // pred_check
          %p318 = pneg %p129
        $region46: #{transformer_forward.8} parent=31 // pred_check_branch
          %320 = sbr.rel (%p318) target = $region48
        $region47: #{transformer_forward.8} parent=31 // pred_region
          %s321 = smul.u32 2, %s23
          %p322 = scmp.lt.s32.totalorder %s22, 1
          %s323 = scalar_select %p322, %s22, 1
          %p324 = scmp.lt.s32.totalorder %s321, 3
          %s325 = scalar_select %p324, %s321, 3
          %s326 = smul.addr %s323, 4
          %s327 = sadd.s32 %s325, %s326
          %s328 = smul.addr %s327, 4
          %s329 = scalar_lea.vmem %s3, %s328
          %s330 = smul.u32 2, %s23
        $region48: #{transformer_forward.8} parent=31 // pred_fallthru
          _
      $region32: #{transformer_forward.8} parent=5 // pred_fallthru
        _
      %p331 = scmp.le.s32.totalorder 1, %s15
      %p332 = scmp.lt.s32.totalorder %s15, 5
      %p333 = pnand %p331, %p332
      %p334 = pneg %p333
      // Predicated region
      $region49: #{transformer_forward.8} parent=5 // pred_check
        _
      $region50: #{transformer_forward.8} parent=5 // pred_check_branch
        %336 = sbr.rel (%p333) target = $region52
      $region51: #{transformer_forward.8} parent=5 // pred_region
        %s337 = ssub.s32 %s15, 1
        // Predicated region
        $region53: #{transformer_forward.8} parent=51 // pred_check
          %p338 = pneg %p156
        $region54: #{transformer_forward.8} parent=51 // pred_check_branch
          %340 = sbr.rel (%p338) target = $region56
        $region55: #{transformer_forward.8} parent=51 // pred_region
          %342 = dma.done [#allocation4], 1024
        $region56: #{transformer_forward.8} parent=51 // pred_fallthru
          _
        %s343 = smul.u32 2, %s25
        %p344 = scmp.lt.s32.totalorder %s24, 1
        %s345 = scalar_select %p344, %s24, 1
        %p346 = scmp.lt.s32.totalorder %s343, 3
        %s347 = scalar_select %p346, %s343, 3
        %s348 = smul.addr %s345, 4
        %s349 = sadd.s32 %s347, %s348
        %s350 = smul.addr %s349, 4
        %s351 = scalar_lea.vmem %s0, %s350
        %p352 = pneg %p55
        %p353 = pneg %p52
        %p354 = scmp.lt.s32.totalorder %s24, 1
        %s355 = scalar_select %p354, %s24, 1
        %s356 = smul.addr %s355, 4
        %s357 = smul.addr %s356, 4
        %s358 = scalar_lea.vmem %s1, %s357
        %p359 = pneg %p81
        %p360 = pneg %p78
        %p361 = scmp.lt.s32.totalorder %s24, 1
        %s362 = scalar_select %p361, %s24, 1
        %s363 = smul.addr %s362, 4
        %s364 = smul.addr %s363, 4
        %s365 = scalar_lea.vmem %s2, %s364
        %p366 = pneg %p107
        %p367 = pneg %p104
        %s368 = smul.u32 2, %s25
        %p369 = scmp.lt.s32.totalorder %s24, 1
        %s370 = scalar_select %p369, %s24, 1
        %p371 = scmp.lt.s32.totalorder %s368, 3
        %s372 = scalar_select %p371, %s368, 3
        %s373 = smul.addr %s370, 4
        %s374 = sadd.s32 %s372, %s373
        %s375 = smul.addr %s374, 4
        %s376 = scalar_lea.vmem %s3, %s375
        %p377 = pneg %p135
        %p378 = pneg %p132
        %p379 = pneg %p156
        %p380 = pneg %p153
        %p381 = pneg %p177
        %p382 = pneg %p174
        %p383 = pneg %p198
        %p384 = pneg %p195
        %p385 = pneg %p219
        %p386 = pneg %p216
        %p387 = pneg %p247
        %p388 = pneg %p244
        %s389 = smul.u32 2, %s25
        %p390 = scmp.lt.s32.totalorder %s24, 1
        %s391 = scalar_select %p390, %s24, 1
        %p392 = scmp.lt.s32.totalorder %s389, 3
        %s393 = scalar_select %p392, %s389, 3
        %s394 = smul.addr %s391, 4
        %s395 = sadd.s32 %s393, %s394
        %s396 = smul.addr %s395, 4
        %s397 = scalar_lea.vmem %s8, %s396
        %s398 = smul.u32 2, %s25
        %p399 = scmp.lt.s32.totalorder %s24, 1
        %s400 = scalar_select %p399, %s24, 1
        %p401 = scmp.lt.s32.totalorder %s398, 3
        %s402 = scalar_select %p401, %s398, 3
        %s403 = smul.addr %s400, 4
        %s404 = sadd.s32 %s402, %s403
        %s405 = smul.addr %s404, 4
        %s406 = scalar_lea.vmem %s0, %s405
        %s407 = smul.u32 2, %s25
        %p408 = scmp.lt.s32.totalorder %s24, 1
        %s409 = scalar_select %p408, %s24, 1
        %s410 = smul.addr %s409, 4
        %s411 = smul.addr %s410, 4
        %s412 = scalar_lea.vmem %s1, %s411
        %p413 = scmp.lt.s32.totalorder %s24, 1
        %s414 = scalar_select %p413, %s24, 1
        %s415 = smul.addr %s414, 4
        %s416 = smul.addr %s415, 4
        %s417 = scalar_lea.vmem %s2, %s416
        %s418 = smul.u32 2, %s25
        %p419 = scmp.lt.s32.totalorder %s24, 1
        %s420 = scalar_select %p419, %s24, 1
        %p421 = scmp.lt.s32.totalorder %s418, 3
        %s422 = scalar_select %p421, %s418, 3
        %s423 = smul.addr %s420, 4
        %s424 = sadd.s32 %s422, %s423
        %s425 = smul.addr %s424, 4
        %s426 = scalar_lea.vmem %s3, %s425
        %s427 = smul.u32 2, %s25
        %s428 = smul.u32 2, %s25
        %p429 = scmp.lt.s32.totalorder %s24, 1
        %s430 = scalar_select %p429, %s24, 1
        %p431 = scmp.lt.s32.totalorder %s428, 3
        %s432 = scalar_select %p431, %s428, 3
        %s433 = smul.addr %s430, 4
        %s434 = sadd.s32 %s432, %s433
        %s435 = smul.addr %s434, 4
        %s436 = scalar_lea.vmem %s8, %s435
        %s437 = smul.u32 2, %s25
        %v439 = vld [vmem:[%s406] sm:$0xf]
        %v440 = vld [vmem:[%s406 + $0x4] sm:$0xf]
        %v441 = vld [vmem:[%s412] sm:$0xf]
        %v442 = vld [vmem:[%s412 + $0x4] sm:$0xf]
        %v443 = vld [vmem:[%s412 + $0x8] sm:$0xf]
        %v444 = vld [vmem:[%s412 + $0xc] sm:$0xf]
        %v445 = vld [vmem:[%s417] sm:$0xf]
        %v446 = vld [vmem:[%s417 + $0x4] sm:$0xf]
        %v447 = vld [vmem:[%s417 + $0x8] sm:$0xf]
        %v448 = vld [vmem:[%s417 + $0xc] sm:$0xf]
        %v449 = vlaneseq
        %v450 = vshrl.u32 %v449, 7
        %v451 = vadd.s32 %v450, 8
        %s452 = smul.u32 %s25, 16
        %v453 = vstv %s452
        %v454 = vadd.s32 %v450, %v453
        %v455 = vadd.s32 %v451, %v453
        %v456 = vlaneseq
        %v457 = vand.u32 %v456, 127
        %vm458 = vcmp.ge.s32.totalorder %v454, %v457
        %vm459 = vcmp.ge.s32.totalorder %v455, %v457
        %v462 = vunpack.c.l.b16 %v439
        %v463 = vunpack.c.l.b16 %v440
        %v464 = vpack.c.b16 %v463, %v462
        %v469 = vunpack.c.l.b16 %v441
        %v470 = vunpack.c.l.b16 %v442
        %v471 = vunpack.c.l.b16 %v443
        %v472 = vunpack.c.l.b16 %v444
        %v473 = vpack.c.b16 %v470, %v469
        %v474 = vpack.c.b16 %v472, %v471
        %vm475 = vcmask 261120
        %v477 = vsel %vm475, %v464, 0
        %v480 = vsel %vm475, %v473, 0
        %v483 = vsel %vm475, %v474, 0
        %485 = vmatpush.bf16.xpose.msra.mxu0 0
        %486 = vmatpush.bf16.xpose.msra.mxu0 0
        %487 = vmatpush.bf16.xpose.msra.mxu0 0
        %488 = vmatpush.bf16.xpose.msra.mxu0 0
        %489 = vmatpush.bf16.xpose.msra.mxu0 0
        %490 = vmatpush.bf16.xpose.msra.mxu0 0
        %491 = vmatpush.bf16.xpose.msra.mxu0 %v483
        %492 = vmatpush.bf16.xpose.msra.mxu0 %v480
        %493 = vmatmul.bf16.gmra.mxu0 %v477
        %v494 = vpop.f32.mrf.mxu0
        %v495 = vadd.f32 0.0, %v494
        %v496 = vpop.f32.mrf.mxu0
        %v497 = vadd.f32 0.0, %v496
        %498 = vdwg.mxu0
        %v499 = vsel %vm458, %v495, -1e+30
        %v500 = vsel %vm459, %v497, -1e+30
        %v501 = vsel %vm475, %v499, -inf
        %502 = vmax.xlane.f32.xlu0 %v501
        %v503 = vpop.xlane.xlu0 %502
        %v504 = vsel %vm475, %v500, -inf
        %505 = vmax.xlane.f32.xlu0 %v504
        %v506 = vpop.xlane.xlu0 %505
        %v507 = vsub.f32 %v499, %v503
        %v508 = vsub.f32 %v500, %v506
        %v509 = vmul.f32 %v507, 1.442695
        %v510 = vpow.pop %v509
        %v511 = vmul.f32 %v508, 1.442695
        %v512 = vpow.pop %v511
        %v513 = vsel %vm475, %v510, 0.0
        %514 = vadd.xlane.f32.xlu0 %v513
        %v515 = vpop.xlane.xlu0 %514
        %v516 = vsel %vm475, %v512, 0.0
        %517 = vadd.xlane.f32.xlu0 %v516
        %v518 = vpop.xlane.xlu0 %517
        %v519 = vrcp.pop %v515
        %v520 = vrcp.pop %v518
        %v521 = vmul.f32 %v510, %v519
        %v522 = vmul.f32 %v512, %v520
        %v523 = vpack.c.bf16 %v522, %v521
        %v528 = vunpack.c.l.b16 %v445
        %v529 = vunpack.c.l.b16 %v446
        %v530 = vunpack.c.l.b16 %v447
        %v531 = vunpack.c.l.b16 %v448
        %v532 = vpack.c.b16 %v529, %v528
        %v533 = vpack.c.b16 %v531, %v530
        %v537 = vsel %vm475, %v523, 0
        %539 = vmatpush.bf16.msra.mxu0 0
        %540 = vmatpush.bf16.msra.mxu0 0
        %541 = vmatpush.bf16.msra.mxu0 0
        %542 = vmatpush.bf16.msra.mxu0 0
        %543 = vmatpush.bf16.msra.mxu0 0
        %544 = vmatpush.bf16.msra.mxu0 0
        %545 = vmatpush.bf16.msra.mxu0 %v533
        %546 = vmatpush.bf16.msra.mxu0 %v532
        %547 = vmatmul.bf16.gmra.mxu0 %v537
        %v548 = vpop.f32.mrf.mxu0
        %v549 = vadd.f32 0.0, %v548
        %v550 = vpop.f32.mrf.mxu0
        %v551 = vadd.f32 0.0, %v550
        %552 = vdwg.mxu0
        %553 = vst.msk [vmem:[#allocation2] sm:$0xff] %vm475, %v549
        %554 = vst.msk [vmem:[#allocation2 + $0x8] sm:$0xff] %vm475, %v551
        %555 = vrot.lane.b32.xlu0 %v464, 96
        %v556 = vpop.permute.xlu0 %555
        %557 = vrot.lane.b32.xlu0 %v473, 96
        %v558 = vpop.permute.xlu0 %557
        %559 = vrot.lane.b32.xlu0 %v474, 96
        %v560 = vpop.permute.xlu0 %559
        %v562 = vsel %vm475, %v556, 0
        %v565 = vsel %vm475, %v558, 0
        %v568 = vsel %vm475, %v560, 0
        %570 = vmatpush.bf16.xpose.msra.mxu0 0
        %571 = vmatpush.bf16.xpose.msra.mxu0 0
        %572 = vmatpush.bf16.xpose.msra.mxu0 0
        %573 = vmatpush.bf16.xpose.msra.mxu0 0
        %574 = vmatpush.bf16.xpose.msra.mxu0 0
        %575 = vmatpush.bf16.xpose.msra.mxu0 0
        %576 = vmatpush.bf16.xpose.msra.mxu0 %v568
        %577 = vmatpush.bf16.xpose.msra.mxu0 %v565
        %578 = vmatmul.bf16.gmra.mxu0 %v562
        %v579 = vpop.f32.mrf.mxu0
        %v580 = vadd.f32 0.0, %v579
        %v581 = vpop.f32.mrf.mxu0
        %v582 = vadd.f32 0.0, %v581
        %583 = vdwg.mxu0
        %v584 = vsel %vm458, %v580, -1e+30
        %v585 = vsel %vm459, %v582, -1e+30
        %v586 = vsel %vm475, %v584, -inf
        %587 = vmax.xlane.f32.xlu0 %v586
        %v588 = vpop.xlane.xlu0 %587
        %v589 = vsel %vm475, %v585, -inf
        %590 = vmax.xlane.f32.xlu0 %v589
        %v591 = vpop.xlane.xlu0 %590
        %v592 = vsub.f32 %v584, %v588
        %v593 = vsub.f32 %v585, %v591
        %v594 = vmul.f32 %v592, 1.442695
        %v595 = vpow.pop %v594
        %v596 = vmul.f32 %v593, 1.442695
        %v597 = vpow.pop %v596
        %v598 = vsel %vm475, %v595, 0.0
        %599 = vadd.xlane.f32.xlu0 %v598
        %v600 = vpop.xlane.xlu0 %599
        %v601 = vsel %vm475, %v597, 0.0
        %602 = vadd.xlane.f32.xlu0 %v601
        %v603 = vpop.xlane.xlu0 %602
        %v604 = vrcp.pop %v600
        %v605 = vrcp.pop %v603
        %v606 = vmul.f32 %v595, %v604
        %v607 = vmul.f32 %v597, %v605
        %v608 = vpack.c.bf16 %v607, %v606
        %609 = vrot.lane.b32.xlu0 %v532, 96
        %v610 = vpop.permute.xlu0 %609
        %611 = vrot.lane.b32.xlu0 %v533, 96
        %v612 = vpop.permute.xlu0 %611
        %v616 = vsel %vm475, %v608, 0
        %618 = vmatpush.bf16.msra.mxu0 0
        %619 = vmatpush.bf16.msra.mxu0 0
        %620 = vmatpush.bf16.msra.mxu0 0
        %621 = vmatpush.bf16.msra.mxu0 0
        %622 = vmatpush.bf16.msra.mxu0 0
        %623 = vmatpush.bf16.msra.mxu0 0
        %624 = vmatpush.bf16.msra.mxu0 %v612
        %625 = vmatpush.bf16.msra.mxu0 %v610
        %626 = vmatmul.bf16.gmra.mxu0 %v616
        %v627 = vpop.f32.mrf.mxu0
        %v628 = vadd.f32 0.0, %v627
        %v629 = vpop.f32.mrf.mxu0
        %v630 = vadd.f32 0.0, %v629
        %631 = vdwg.mxu0
        %634 = vrot.lane.b32.xlu0 %v628, 32
        %v635 = vpop.permute.xlu0 %634
        %636 = vrot.lane.b32.xlu0 %v630, 32
        %v637 = vpop.permute.xlu0 %636
        %vm640 = vcmask 523520
        %641 = vst.msk [vmem:[#allocation2] sm:$0xff] %vm640, %v635
        %642 = vst.msk [vmem:[#allocation2 + $0x8] sm:$0xff] %vm640, %v637
        %643 = vrot.lane.b32.xlu0 %v464, 64
        %v644 = vpop.permute.xlu0 %643
        %645 = vrot.lane.b32.xlu0 %v473, 64
        %v646 = vpop.permute.xlu0 %645
        %647 = vrot.lane.b32.xlu0 %v474, 64
        %v648 = vpop.permute.xlu0 %647
        %v650 = vsel %vm475, %v644, 0
        %v653 = vsel %vm475, %v646, 0
        %v656 = vsel %vm475, %v648, 0
        %658 = vmatpush.bf16.xpose.msra.mxu0 0
        %659 = vmatpush.bf16.xpose.msra.mxu0 0
        %660 = vmatpush.bf16.xpose.msra.mxu0 0
        %661 = vmatpush.bf16.xpose.msra.mxu0 0
        %662 = vmatpush.bf16.xpose.msra.mxu0 0
        %663 = vmatpush.bf16.xpose.msra.mxu0 0
        %664 = vmatpush.bf16.xpose.msra.mxu0 %v656
        %665 = vmatpush.bf16.xpose.msra.mxu0 %v653
        %666 = vmatmul.bf16.gmra.mxu0 %v650
        %v667 = vpop.f32.mrf.mxu0
        %v668 = vadd.f32 0.0, %v667
        %v669 = vpop.f32.mrf.mxu0
        %v670 = vadd.f32 0.0, %v669
        %671 = vdwg.mxu0
        %v672 = vsel %vm458, %v668, -1e+30
        %v673 = vsel %vm459, %v670, -1e+30
        %v674 = vsel %vm475, %v672, -inf
        %675 = vmax.xlane.f32.xlu0 %v674
        %v676 = vpop.xlane.xlu0 %675
        %v677 = vsel %vm475, %v673, -inf
        %678 = vmax.xlane.f32.xlu0 %v677
        %v679 = vpop.xlane.xlu0 %678
        %v680 = vsub.f32 %v672, %v676
        %v681 = vsub.f32 %v673, %v679
        %v682 = vmul.f32 %v680, 1.442695
        %v683 = vpow.pop %v682
        %v684 = vmul.f32 %v681, 1.442695
        %v685 = vpow.pop %v684
        %v686 = vsel %vm475, %v683, 0.0
        %687 = vadd.xlane.f32.xlu0 %v686
        %v688 = vpop.xlane.xlu0 %687
        %v689 = vsel %vm475, %v685, 0.0
        %690 = vadd.xlane.f32.xlu0 %v689
        %v691 = vpop.xlane.xlu0 %690
        %v692 = vrcp.pop %v688
        %v693 = vrcp.pop %v691
        %v694 = vmul.f32 %v683, %v692
        %v695 = vmul.f32 %v685, %v693
        %v696 = vpack.c.bf16 %v695, %v694
        %697 = vrot.lane.b32.xlu0 %v532, 64
        %v698 = vpop.permute.xlu0 %697
        %699 = vrot.lane.b32.xlu0 %v533, 64
        %v700 = vpop.permute.xlu0 %699
        %v704 = vsel %vm475, %v696, 0
        %706 = vmatpush.bf16.msra.mxu0 0
        %707 = vmatpush.bf16.msra.mxu0 0
        %708 = vmatpush.bf16.msra.mxu0 0
        %709 = vmatpush.bf16.msra.mxu0 0
        %710 = vmatpush.bf16.msra.mxu0 0
        %711 = vmatpush.bf16.msra.mxu0 0
        %712 = vmatpush.bf16.msra.mxu0 %v700
        %713 = vmatpush.bf16.msra.mxu0 %v698
        %714 = vmatmul.bf16.gmra.mxu0 %v704
        %v715 = vpop.f32.mrf.mxu0
        %v716 = vadd.f32 0.0, %v715
        %v717 = vpop.f32.mrf.mxu0
        %v718 = vadd.f32 0.0, %v717
        %719 = vdwg.mxu0
        %722 = vrot.lane.b32.xlu0 %v716, 64
        %v723 = vpop.permute.xlu0 %722
        %724 = vrot.lane.b32.xlu0 %v718, 64
        %v725 = vpop.permute.xlu0 %724
        %vm728 = vcmask 785920
        %729 = vst.msk [vmem:[#allocation2] sm:$0xff] %vm728, %v723
        %730 = vst.msk [vmem:[#allocation2 + $0x8] sm:$0xff] %vm728, %v725
        %731 = vrot.lane.b32.xlu0 %v464, 32
        %v732 = vpop.permute.xlu0 %731
        %733 = vrot.lane.b32.xlu0 %v473, 32
        %v734 = vpop.permute.xlu0 %733
        %735 = vrot.lane.b32.xlu0 %v474, 32
        %v736 = vpop.permute.xlu0 %735
        %v738 = vsel %vm475, %v732, 0
        %v741 = vsel %vm475, %v734, 0
        %v744 = vsel %vm475, %v736, 0
        %746 = vmatpush.bf16.xpose.msra.mxu0 0
        %747 = vmatpush.bf16.xpose.msra.mxu0 0
        %748 = vmatpush.bf16.xpose.msra.mxu0 0
        %749 = vmatpush.bf16.xpose.msra.mxu0 0
        %750 = vmatpush.bf16.xpose.msra.mxu0 0
        %751 = vmatpush.bf16.xpose.msra.mxu0 0
        %752 = vmatpush.bf16.xpose.msra.mxu0 %v744
        %753 = vmatpush.bf16.xpose.msra.mxu0 %v741
        %754 = vmatmul.bf16.gmra.mxu0 %v738
        %v755 = vpop.f32.mrf.mxu0
        %v756 = vadd.f32 0.0, %v755
        %v757 = vpop.f32.mrf.mxu0
        %v758 = vadd.f32 0.0, %v757
        %759 = vdwg.mxu0
        %v760 = vsel %vm458, %v756, -1e+30
        %v761 = vsel %vm459, %v758, -1e+30
        %v762 = vsel %vm475, %v760, -inf
        %763 = vmax.xlane.f32.xlu0 %v762
        %v764 = vpop.xlane.xlu0 %763
        %v765 = vsel %vm475, %v761, -inf
        %766 = vmax.xlane.f32.xlu0 %v765
        %v767 = vpop.xlane.xlu0 %766
        %v768 = vsub.f32 %v760, %v764
        %v769 = vsub.f32 %v761, %v767
        %v770 = vmul.f32 %v768, 1.442695
        %v771 = vpow.pop %v770
        %v772 = vmul.f32 %v769, 1.442695
        %v773 = vpow.pop %v772
        %v774 = vsel %vm475, %v771, 0.0
        %775 = vadd.xlane.f32.xlu0 %v774
        %v776 = vpop.xlane.xlu0 %775
        %v777 = vsel %vm475, %v773, 0.0
        %778 = vadd.xlane.f32.xlu0 %v777
        %v779 = vpop.xlane.xlu0 %778
        %v780 = vrcp.pop %v776
        %v781 = vrcp.pop %v779
        %v782 = vmul.f32 %v771, %v780
        %v783 = vmul.f32 %v773, %v781
        %v784 = vpack.c.bf16 %v783, %v782
        %785 = vrot.lane.b32.xlu0 %v532, 32
        %v786 = vpop.permute.xlu0 %785
        %787 = vrot.lane.b32.xlu0 %v533, 32
        %v788 = vpop.permute.xlu0 %787
        %v792 = vsel %vm475, %v784, 0
        %794 = vmatpush.bf16.msra.mxu0 0
        %795 = vmatpush.bf16.msra.mxu0 0
        %796 = vmatpush.bf16.msra.mxu0 0
        %797 = vmatpush.bf16.msra.mxu0 0
        %798 = vmatpush.bf16.msra.mxu0 0
        %799 = vmatpush.bf16.msra.mxu0 0
        %800 = vmatpush.bf16.msra.mxu0 %v788
        %801 = vmatpush.bf16.msra.mxu0 %v786
        %802 = vmatmul.bf16.gmra.mxu0 %v792
        %v803 = vpop.f32.mrf.mxu0
        %v804 = vadd.f32 0.0, %v803
        %v805 = vpop.f32.mrf.mxu0
        %v806 = vadd.f32 0.0, %v805
        %807 = vdwg.mxu0
        %810 = vrot.lane.b32.xlu0 %v804, 96
        %v811 = vpop.permute.xlu0 %810
        %812 = vrot.lane.b32.xlu0 %v806, 96
        %v813 = vpop.permute.xlu0 %812
        %vm816 = vcmask 1048320
        %817 = vst.msk [vmem:[#allocation2] sm:$0xff] %vm816, %v811
        %818 = vst.msk [vmem:[#allocation2 + $0x8] sm:$0xff] %vm816, %v813
        %v819 = vld [vmem:[#allocation2] sm:$0xff]
        %v820 = vld [vmem:[#allocation2 + $0x8] sm:$0xff]
        %v821 = vpack.c.bf16 %v820, %v819
        %v822 = vld [vmem:[#allocation3] sm:$0xf]
        %v823 = vld [vmem:[#allocation3 + $0x4] sm:$0xf]
        %v824 = vld [vmem:[#allocation3 + $0x8] sm:$0xf]
        %v825 = vld [vmem:[#allocation3 + $0xc] sm:$0xf]
        %v826 = vld [vmem:[#allocation3 + $0x10] sm:$0xf]
        %v827 = vld [vmem:[#allocation3 + $0x14] sm:$0xf]
        %v828 = vld [vmem:[#allocation3 + $0x18] sm:$0xf]
        %v829 = vld [vmem:[#allocation3 + $0x1c] sm:$0xf]
        %v830 = vld [vmem:[#allocation3 + $0x20] sm:$0xf]
        %v831 = vld [vmem:[#allocation3 + $0x24] sm:$0xf]
        %v832 = vld [vmem:[#allocation3 + $0x28] sm:$0xf]
        %v833 = vld [vmem:[#allocation3 + $0x2c] sm:$0xf]
        %v834 = vld [vmem:[#allocation3 + $0x30] sm:$0xf]
        %v835 = vld [vmem:[#allocation3 + $0x34] sm:$0xf]
        %v836 = vld [vmem:[#allocation3 + $0x38] sm:$0xf]
        %v837 = vld [vmem:[#allocation3 + $0x3c] sm:$0xf]
        %v838 = vld [vmem:[%s5] sm:$0x1]
        %v840 = vperm.slane %v838, 0
        %v858 = vunpack.c.l.b16 %v822
        %v859 = vunpack.c.l.b16 %v823
        %v860 = vunpack.c.l.b16 %v824
        %v861 = vunpack.c.l.b16 %v825
        %v862 = vunpack.c.l.b16 %v826
        %v863 = vunpack.c.l.b16 %v827
        %v864 = vunpack.c.l.b16 %v828
        %v865 = vunpack.c.l.b16 %v829
        %v866 = vunpack.c.l.b16 %v830
        %v867 = vunpack.c.l.b16 %v831
        %v868 = vunpack.c.l.b16 %v832
        %v869 = vunpack.c.l.b16 %v833
        %v870 = vunpack.c.l.b16 %v834
        %v871 = vunpack.c.l.b16 %v835
        %v872 = vunpack.c.l.b16 %v836
        %v873 = vunpack.c.l.b16 %v837
        %v874 = vpack.c.b16 %v859, %v858
        %v875 = vpack.c.b16 %v861, %v860
        %v876 = vpack.c.b16 %v863, %v862
        %v877 = vpack.c.b16 %v865, %v864
        %v878 = vpack.c.b16 %v867, %v866
        %v879 = vpack.c.b16 %v869, %v868
        %v880 = vpack.c.b16 %v871, %v870
        %v881 = vpack.c.b16 %v873, %v872
        %890 = vmatpush.bf16.msra.mxu0 %v881
        %891 = vmatpush.bf16.msra.mxu0 %v880
        %892 = vmatpush.bf16.msra.mxu0 %v879
        %893 = vmatpush.bf16.msra.mxu0 %v878
        %894 = vmatpush.bf16.msra.mxu0 %v877
        %895 = vmatpush.bf16.msra.mxu0 %v876
        %896 = vmatpush.bf16.msra.mxu0 %v875
        %897 = vmatpush.bf16.msra.mxu0 %v874
        %898 = vmatmul.bf16.gmra.mxu0 %v821
        %v899 = vpop.f32.mrf.mxu0
        %v900 = vadd.f32 %v840, %v899
        %v901 = vpop.f32.mrf.mxu0
        %v902 = vadd.f32 %v840, %v901
        %903 = vdwg.mxu0
        %v904 = vld [vmem:[%s426] sm:$0xf]
        %v905 = vld [vmem:[%s426 + $0x4] sm:$0xf]
        %v906 = vunpack.c.l.bf16 %v904
        %v907 = vunpack.c.l.bf16 %v905
        %v908 = vadd.f32 %v906, %v900
        %v909 = vadd.f32 %v907, %v902
        %910 = vadd.xlane.f32.xlu0 %v908
        %v911 = vpop.xlane.xlu0 %910
        %912 = vadd.xlane.f32.xlu0 %v909
        %v913 = vpop.xlane.xlu0 %912
        %v914 = vrcp.pop 128.0
        %v915 = vmul.f32 128.0, %v914
        %v916 = vsub.f32 1.0, %v915
        %v917 = vmul.f32 %v914, %v916
        %v918 = vadd.f32 %v914, %v917
        %vm919 = vweird.f32 %v914
        %v920 = vsel %vm919, %v914, %v918
        %v921 = vmul.f32 %v911, %v920
        %v922 = vmul.f32 %v913, %v920
        %v923 = vsub.f32 %v908, %v921
        %v924 = vsub.f32 %v909, %v922
        %v925 = vmul.f32 %v923, %v923
        %v926 = vmul.f32 %v924, %v924
        %927 = vadd.xlane.f32.xlu0 %v925
        %v928 = vpop.xlane.xlu0 %927
        %929 = vadd.xlane.f32.xlu0 %v926
        %v930 = vpop.xlane.xlu0 %929
        %v931 = vmul.f32 %v928, %v920
        %v932 = vmul.f32 %v930, %v920
        %v933 = vadd.f32 %v931, 1e-05
        %v934 = vadd.f32 %v932, 1e-05
        %v935 = vrsqrt.pop %v933
        %v936 = vmul.f32 %v935, %v933
        %v937 = vmul.f32 %v936, %v935
        %v938 = vmul.f32 0.5, %v937
        %v939 = vsub.f32 1.5, %v938
        %v940 = vmul.f32 %v935, %v939
        %vm941 = vweird.f32 %v933
        %vm942 = vweird.f32 %v935
        %vm943 = vmor %vm941, %vm942
        %v944 = vsel %vm943, %v935, %v940
        %v945 = vrsqrt.pop %v934
        %v946 = vmul.f32 %v945, %v934
        %v947 = vmul.f32 %v946, %v945
        %v948 = vmul.f32 0.5, %v947
        %v949 = vsub.f32 1.5, %v948
        %v950 = vmul.f32 %v945, %v949
        %vm951 = vweird.f32 %v934
        %vm952 = vweird.f32 %v945
        %vm953 = vmor %vm951, %vm952
        %v954 = vsel %vm953, %v945, %v950
        %v955 = vmul.f32 %v923, %v944
        %v956 = vmul.f32 %v924, %v954
        %v957 = vld [vmem:[%s6] sm:$0x1]
        %v959 = vperm.slane %v957, 0
        %v961 = vmul.f32 %v955, %v959
        %v962 = vmul.f32 %v956, %v959
        %v963 = vld [vmem:[%s7] sm:$0x1]
        %v965 = vperm.slane %v963, 0
        %v967 = vadd.f32 %v961, %v965
        %v968 = vadd.f32 %v962, %v965
        %v969 = vpack.c.bf16 %v967, %v967
        %v970 = vpack.c.bf16 %v968, %v968
        %971 = vst [vmem:[%s436] sm:$0xf] %v969
        %972 = vst [vmem:[%s436 + $0x4] sm:$0xf] %v970
        %s973 = smul.u32 2, %s25
        %p974 = scmp.lt.s32.totalorder %s24, 1
        %s975 = scalar_select %p974, %s24, 1
        %p976 = scmp.lt.s32.totalorder %s973, 3
        %s977 = scalar_select %p976, %s973, 3
        %s978 = smul.addr %s975, 4
        %s979 = sadd.s32 %s977, %s978
        %s980 = smul.addr %s979, 4
        %s981 = scalar_lea.vmem %s8, %s980
        // Predicated region
        $region57: #{transformer_forward.8} parent=51 // pred_check
          %p982 = pneg %p244
        $region58: #{transformer_forward.8} parent=51 // pred_check_branch
          %984 = sbr.rel (%p982) target = $region60
        $region59: #{transformer_forward.8} parent=51 // pred_region
          %s985 = smul.u32 2, %s25
        $region60: #{transformer_forward.8} parent=51 // pred_fallthru
          _
      $region52: #{transformer_forward.8} parent=5 // pred_fallthru
        _
      %p986 = scmp.le.s32.totalorder 2, %s15
      // Predicated region
      $region61: #{transformer_forward.8} parent=5 // pred_check
        %p987 = pneg %p986
      $region62: #{transformer_forward.8} parent=5 // pred_check_branch
        %989 = sbr.rel (%p987) target = $region64
      $region63: #{transformer_forward.8} parent=5 // pred_region
        %s990 = ssub.s32 %s15, 2
        // Predicated region
        $region65: #{transformer_forward.8} parent=63 // pred_check
          %p991 = pneg %p250
        $region66: #{transformer_forward.8} parent=63 // pred_check_branch
          %993 = sbr.rel (%p991) target = $region68
        $region67: #{transformer_forward.8} parent=63 // pred_region
          %s994 = smul.u32 2, %s27
          %p995 = scmp.lt.s32.totalorder %s26, 1
          %s996 = scalar_select %p995, %s26, 1
          %p997 = scmp.lt.s32.totalorder %s994, 3
          %s998 = scalar_select %p997, %s994, 3
          %s999 = smul.addr %s996, 4
          %s1000 = sadd.s32 %s998, %s999
          %s1001 = smul.addr %s1000, 4
          %s1002 = scalar_lea.vmem %s8, %s1001
        $region68: #{transformer_forward.8} parent=63 // pred_fallthru
          _
      $region64: #{transformer_forward.8} parent=5 // pred_fallthru
        _
    $region6: #{transformer_forward.8} parent=1 // loop_footer
      %s19 = sadd.s32 1, %s15
    $region7: #{transformer_forward.8} parent=1 // loop_footer_branch
      %14 = sbr.rel target = $region3
    $region8: #{transformer_forward.8} parent=1 // loop_exit
      _
    %1003 = vsyncpa [#allocation4], 1
    %s1004 = scalar_lea.sflag [#allocation4], 1
    %1005 = vsyncpa %s1004, 1

// kernel: transformer_forward.11
$region0: #{transformer_forward.11}
  #allocation0 [shape = 'u32[]', space=smem, size = 0x4, offset = 0x4, fixed_abs, tag = 'smem constant byte address 0x4 - core index']
  #allocation1 [shape = 'u32[72,128]{1,0:T(1,128)}', space=vmem, size = 0x9000, scoped, tag = 'internal scratch']
  #allocation2 [shape = 'f32[16,128]{1,0:T(8,128)}', space=vmem, size = 0x2000, scoped, tag = 'scratch operand']
  %s0 = inlined_call_operand.vmem [shape: bf16[2,32,128], index: 0, kind: input, shape index: {}]
  %s1 = inlined_call_operand.vmem [shape: bf16[2,32,128], index: 1, kind: input, shape index: {}]
  %s2 = inlined_call_operand.vmem [shape: bf16[2,32,128], index: 2, kind: input, shape index: {}]
  %s3 = inlined_call_operand.vmem [shape: bf16[2,32,128], index: 3, kind: input, shape index: {}]
  %s4 = inlined_call_operand.vmem [shape: bf16[128,128], index: 4, kind: input, shape index: {}]
  %s5 = inlined_call_operand.vmem [shape: f32[1,128], index: 5, kind: input, shape index: {}]
  %s6 = inlined_call_operand.vmem [shape: f32[1,128], index: 6, kind: input, shape index: {}]
  %s7 = inlined_call_operand.vmem [shape: f32[1,128], index: 7, kind: input, shape index: {}]
  %s8 = inlined_call_operand.vmem [shape: bf16[2,32,128], index: 8, kind: output, shape index: {}]
  %s9 = sld [smem:[#allocation0]]
  $region65: #{transformer_forward.11} parent=0
    _
  %s11 = ssub.s32 1, %s9
  %s12 = scalar_select 0, %s11, %s9
  loop: start=0, step=1, limit=6
  $region2: #{transformer_forward.11} parent=0 // loop_pre_header
    _
  $region3: #{transformer_forward.11} parent=0 // loop_header
    %s14 = sphi 0, %s18
    %p15 = scmp.ge.s32.totalorder %s14, 6
    %s21 = sphi 0, %s33
    %s22 = sphi 0, %s29
    %s23 = sphi 0, %s21
    %s24 = sphi 0, %s22
    %s25 = sphi 0, %s23
    %s26 = sphi 0, %s24
    %s38 = sphi 0, %s40
    %s41 = sphi 0, %s38
    %s42 = sphi 0, %s41
    %s58 = sphi 0, %s42
    %s64 = sphi 0, %s66
    %s67 = sphi 0, %s64
    %s68 = sphi 0, %s67
    %s84 = sphi 0, %s68
    %s90 = sphi 0, %s92
    %s93 = sphi 0, %s90
    %s94 = sphi 0, %s93
    %s110 = sphi 0, %s94
    %s118 = sphi 0, %s120
    %s121 = sphi 0, %s118
    %s122 = sphi 0, %s121
    %s138 = sphi 0, %s122
    %s142 = sphi 0, %s142
    %s144 = sphi 0, %s142
    %s145 = sphi 0, %s144
    %s159 = sphi 0, %s145
    %s163 = sphi 0, %s163
    %s165 = sphi 0, %s163
    %s166 = sphi 0, %s165
    %s180 = sphi 0, %s166
    %s184 = sphi 0, %s184
    %s186 = sphi 0, %s184
    %s187 = sphi 0, %s186
    %s201 = sphi 0, %s187
    %s205 = sphi 0, %s205
    %s207 = sphi 0, %s205
    %s208 = sphi 0, %s207
    %s222 = sphi 0, %s208
    %s230 = sphi 0, %s232
    %s233 = sphi 0, %s230
    %s234 = sphi 0, %s233
    %s250 = sphi 0, %s234
  $region4: #{transformer_forward.11} parent=0 // loop_header_branch
    %17 = sbr.rel (%p15) target = $region8
  $region5: #{transformer_forward.11} parent=0 // loop_body
    %s19 = ssub.s32 %s14, 1
    %s20 = ssub.s32 %s14, 2
    %s27 = sadd.s32 1, %s22
    %p28 = scmp.ge.s32.totalorder %s27, 2
    %s29 = scalar_select %p28, 0, %s27
    %s30 = sadd.s32 1, %s21
    %s31 = scalar_select %p28, %s30, %s21
    %p32 = scmp.ge.s32.totalorder %s31, 2
    %s33 = scalar_select %p32, 0, %s31
    %s34 = ssub.s32 %s21, %s33
    %s35 = ssub.s32 %s22, %s29
    %s36 = sor.u32 %s34, %s35
    %p37 = scmp.eq.s32.totalorder %s36, 0
    %s39 = sadd.s32 %s38, 1
    %s40 = scalar_select %p37, %s38, %s39
    %p43 = pneg %p37
    %p44 = scmp.eq.s32.totalorder %s14, 3
    %p45 = por %p43, %p44
    %p46 = scmp.ne.s32.totalorder %s38, %s41
    %p47 = scmp.eq.s32.totalorder %s14, 0
    %p48 = por %p46, %p47
    %p49 = scmp.ne.s32.totalorder %s38, %s41
    %p50 = scmp.eq.s32.totalorder %s19, 3
    %p51 = por %p49, %p50
    %p52 = scmp.ne.s32.totalorder %s41, %s42
    %p53 = scmp.eq.s32.totalorder %s19, 0
    %p54 = por %p52, %p53
    %p55 = scmp.ne.s32.totalorder %s41, %s42
    %p56 = scmp.eq.s32.totalorder %s20, 3
    %p57 = por %p55, %p56
    %p59 = scmp.ne.s32.totalorder %s42, %s58
    %p60 = scmp.eq.s32.totalorder %s20, 0
    %p61 = por %p59, %p60
    %s62 = ssub.s32 %s21, %s33
    %p63 = scmp.eq.s32.totalorder %s62, 0
    %s65 = sadd.s32 %s64, 1
    %s66 = scalar_select %p63, %s64, %s65
    %p69 = pneg %p63
    %p70 = scmp.eq.s32.totalorder %s14, 3
    %p71 = por %p69, %p70
    %p72 = scmp.ne.s32.totalorder %s64, %s67
    %p73 = scmp.eq.s32.totalorder %s14, 0
    %p74 = por %p72, %p73
    %p75 = scmp.ne.s32.totalorder %s64, %s67
    %p76 = scmp.eq.s32.totalorder %s19, 3
    %p77 = por %p75, %p76
    %p78 = scmp.ne.s32.totalorder %s67, %s68
    %p79 = scmp.eq.s32.totalorder %s19, 0
    %p80 = por %p78, %p79
    %p81 = scmp.ne.s32.totalorder %s67, %s68
    %p82 = scmp.eq.s32.totalorder %s20, 3
    %p83 = por %p81, %p82
    %p85 = scmp.ne.s32.totalorder %s68, %s84
    %p86 = scmp.eq.s32.totalorder %s20, 0
    %p87 = por %p85, %p86
    %s88 = ssub.s32 %s21, %s33
    %p89 = scmp.eq.s32.totalorder %s88, 0
    %s91 = sadd.s32 %s90, 1
    %s92 = scalar_select %p89, %s90, %s91
    %p95 = pneg %p89
    %p96 = scmp.eq.s32.totalorder %s14, 3
    %p97 = por %p95, %p96
    %p98 = scmp.ne.s32.totalorder %s90, %s93
    %p99 = scmp.eq.s32.totalorder %s14, 0
    %p100 = por %p98, %p99
    %p101 = scmp.ne.s32.totalorder %s90, %s93
    %p102 = scmp.eq.s32.totalorder %s19, 3
    %p103 = por %p101, %p102
    %p104 = scmp.ne.s32.totalorder %s93, %s94
    %p105 = scmp.eq.s32.totalorder %s19, 0
    %p106 = por %p104, %p105
    %p107 = scmp.ne.s32.totalorder %s93, %s94
    %p108 = scmp.eq.s32.totalorder %s20, 3
    %p109 = por %p107, %p108
    %p111 = scmp.ne.s32.totalorder %s94, %s110
    %p112 = scmp.eq.s32.totalorder %s20, 0
    %p113 = por %p111, %p112
    %s114 = ssub.s32 %s21, %s33
    %s115 = ssub.s32 %s22, %s29
    %s116 = sor.u32 %s114, %s115
    %p117 = scmp.eq.s32.totalorder %s116, 0
    %s119 = sadd.s32 %s118, 1
    %s120 = scalar_select %p117, %s118, %s119
    %p123 = pneg %p117
    %p124 = scmp.eq.s32.totalorder %s14, 3
    %p125 = por %p123, %p124
    %p126 = scmp.ne.s32.totalorder %s118, %s121
    %p127 = scmp.eq.s32.totalorder %s14, 0
    %p128 = por %p126, %p127
    %p129 = scmp.ne.s32.totalorder %s118, %s121
    %p130 = scmp.eq.s32.totalorder %s19, 3
    %p131 = por %p129, %p130
    %p132 = scmp.ne.s32.totalorder %s121, %s122
    %p133 = scmp.eq.s32.totalorder %s19, 0
    %p134 = por %p132, %p133
    %p135 = scmp.ne.s32.totalorder %s121, %s122
    %p136 = scmp.eq.s32.totalorder %s20, 3
    %p137 = por %p135, %p136
    %p139 = scmp.ne.s32.totalorder %s122, %s138
    %p140 = scmp.eq.s32.totalorder %s20, 0
    %p141 = por %p139, %p140
    %s143 = sadd.s32 %s142, 1
    %p146 = scmp.eq.s32.totalorder %s14, 3
    %p147 = scmp.ne.s32.totalorder %s142, %s144
    %p148 = scmp.eq.s32.totalorder %s14, 0
    %p149 = por %p147, %p148
    %p150 = scmp.ne.s32.totalorder %s142, %s144
    %p151 = scmp.eq.s32.totalorder %s19, 3
    %p152 = por %p150, %p151
    %p153 = scmp.ne.s32.totalorder %s144, %s145
    %p154 = scmp.eq.s32.totalorder %s19, 0
    %p155 = por %p153, %p154
    %p156 = scmp.ne.s32.totalorder %s144, %s145
    %p157 = scmp.eq.s32.totalorder %s20, 3
    %p158 = por %p156, %p157
    %p160 = scmp.ne.s32.totalorder %s145, %s159
    %p161 = scmp.eq.s32.totalorder %s20, 0
    %p162 = por %p160, %p161
    %s164 = sadd.s32 %s163, 1
    %p167 = scmp.eq.s32.totalorder %s14, 3
    %p168 = scmp.ne.s32.totalorder %s163, %s165
    %p169 = scmp.eq.s32.totalorder %s14, 0
    %p170 = por %p168, %p169
    %p171 = scmp.ne.s32.totalorder %s163, %s165
    %p172 = scmp.eq.s32.totalorder %s19, 3
    %p173 = por %p171, %p172
    %p174 = scmp.ne.s32.totalorder %s165, %s166
    %p175 = scmp.eq.s32.totalorder %s19, 0
    %p176 = por %p174, %p175
    %p177 = scmp.ne.s32.totalorder %s165, %s166
    %p178 = scmp.eq.s32.totalorder %s20, 3
    %p179 = por %p177, %p178
    %p181 = scmp.ne.s32.totalorder %s166, %s180
    %p182 = scmp.eq.s32.totalorder %s20, 0
    %p183 = por %p181, %p182
    %s185 = sadd.s32 %s184, 1
    %p188 = scmp.eq.s32.totalorder %s14, 3
    %p189 = scmp.ne.s32.totalorder %s184, %s186
    %p190 = scmp.eq.s32.totalorder %s14, 0
    %p191 = por %p189, %p190
    %p192 = scmp.ne.s32.totalorder %s184, %s186
    %p193 = scmp.eq.s32.totalorder %s19, 3
    %p194 = por %p192, %p193
    %p195 = scmp.ne.s32.totalorder %s186, %s187
    %p196 = scmp.eq.s32.totalorder %s19, 0
    %p197 = por %p195, %p196
    %p198 = scmp.ne.s32.totalorder %s186, %s187
    %p199 = scmp.eq.s32.totalorder %s20, 3
    %p200 = por %p198, %p199
    %p202 = scmp.ne.s32.totalorder %s187, %s201
    %p203 = scmp.eq.s32.totalorder %s20, 0
    %p204 = por %p202, %p203
    %s206 = sadd.s32 %s205, 1
    %p209 = scmp.eq.s32.totalorder %s14, 3
    %p210 = scmp.ne.s32.totalorder %s205, %s207
    %p211 = scmp.eq.s32.totalorder %s14, 0
    %p212 = por %p210, %p211
    %p213 = scmp.ne.s32.totalorder %s205, %s207
    %p214 = scmp.eq.s32.totalorder %s19, 3
    %p215 = por %p213, %p214
    %p216 = scmp.ne.s32.totalorder %s207, %s208
    %p217 = scmp.eq.s32.totalorder %s19, 0
    %p218 = por %p216, %p217
    %p219 = scmp.ne.s32.totalorder %s207, %s208
    %p220 = scmp.eq.s32.totalorder %s20, 3
    %p221 = por %p219, %p220
    %p223 = scmp.ne.s32.totalorder %s208, %s222
    %p224 = scmp.eq.s32.totalorder %s20, 0
    %p225 = por %p223, %p224
    %s226 = ssub.s32 %s21, %s33
    %s227 = ssub.s32 %s22, %s29
    %s228 = sor.u32 %s226, %s227
    %p229 = scmp.eq.s32.totalorder %s228, 0
    %s231 = sadd.s32 %s230, 1
    %s232 = scalar_select %p229, %s230, %s231
    %p235 = pneg %p229
    %p236 = scmp.eq.s32.totalorder %s14, 3
    %p237 = por %p235, %p236
    %p238 = scmp.ne.s32.totalorder %s230, %s233
    %p239 = scmp.eq.s32.totalorder %s14, 0
    %p240 = por %p238, %p239
    %p241 = scmp.ne.s32.totalorder %s230, %s233
    %p242 = scmp.eq.s32.totalorder %s19, 3
    %p243 = por %p241, %p242
    %p244 = scmp.ne.s32.totalorder %s233, %s234
    %p245 = scmp.eq.s32.totalorder %s19, 0
    %p246 = por %p244, %p245
    %p247 = scmp.ne.s32.totalorder %s233, %s234
    %p248 = scmp.eq.s32.totalorder %s20, 3
    %p249 = por %p247, %p248
    %p251 = scmp.ne.s32.totalorder %s234, %s250
    %p252 = scmp.eq.s32.totalorder %s20, 0
    %p253 = por %p251, %p252
    %p254 = scmp.le.s32.totalorder 1, %s14
    %p255 = scmp.lt.s32.totalorder %s14, 5
    %p256 = pnand %p254, %p255
    %p257 = pneg %p256
    // Predicated region
    $region9: #{transformer_forward.11} parent=5 // pred_check
      _
    $region10: #{transformer_forward.11} parent=5 // pred_check_branch
      %259 = sbr.rel (%p256) target = $region12
    $region11: #{transformer_forward.11} parent=5 // pred_region
      %s260 = ssub.s32 %s14, 1
      // Predicated region
      $region13: #{transformer_forward.11} parent=11 // pred_check
        %p261 = pneg %p155
      $region14: #{transformer_forward.11} parent=11 // pred_check_branch
        %263 = sbr.rel (%p261) target = $region16
      $region15: #{transformer_forward.11} parent=11 // pred_region
        _
      $region16: #{transformer_forward.11} parent=11 // pred_fallthru
        _
      // Predicated region
      $region17: #{transformer_forward.11} parent=11 // pred_check
        %p264 = pneg %p176
      $region18: #{transformer_forward.11} parent=11 // pred_check_branch
        %266 = sbr.rel (%p264) target = $region20
      $region19: #{transformer_forward.11} parent=11 // pred_region
        _
      $region20: #{transformer_forward.11} parent=11 // pred_fallthru
        _
      // Predicated region
      $region21: #{transformer_forward.11} parent=11 // pred_check
        %p267 = pneg %p197
      $region22: #{transformer_forward.11} parent=11 // pred_check_branch
        %269 = sbr.rel (%p267) target = $region24
      $region23: #{transformer_forward.11} parent=11 // pred_region
        _
      $region24: #{transformer_forward.11} parent=11 // pred_fallthru
        _
      // Predicated region
      $region25: #{transformer_forward.11} parent=11 // pred_check
        %p270 = pneg %p218
      $region26: #{transformer_forward.11} parent=11 // pred_check_branch
        %272 = sbr.rel (%p270) target = $region28
      $region27: #{transformer_forward.11} parent=11 // pred_region
        _
      $region28: #{transformer_forward.11} parent=11 // pred_fallthru
        _
    $region12: #{transformer_forward.11} parent=5 // pred_fallthru
      _
    %p273 = scmp.lt.s32.totalorder %s14, 4
    // Predicated region
    $region29: #{transformer_forward.11} parent=5 // pred_check
      %p274 = pneg %p273
    $region30: #{transformer_forward.11} parent=5 // pred_check_branch
      %276 = sbr.rel (%p274) target = $region32
    $region31: #{transformer_forward.11} parent=5 // pred_region
      // Predicated region
      $region33: #{transformer_forward.11} parent=31 // pred_check
        %p277 = pneg %p48
      $region34: #{transformer_forward.11} parent=31 // pred_check_branch
        %279 = sbr.rel (%p277) target = $region36
      $region35: #{transformer_forward.11} parent=31 // pred_region
        %s280 = smul.u32 2, %s22
        %p281 = scmp.lt.s32.totalorder %s21, 1
        %s282 = scalar_select %p281, %s21, 1
        %p283 = scmp.lt.s32.totalorder %s280, 3
        %s284 = scalar_select %p283, %s280, 3
        %s285 = smul.addr %s282, 4
        %s286 = sadd.s32 %s284, %s285
        %s287 = smul.addr %s286, 4
        %s288 = scalar_lea.vmem %s0, %s287
        %s289 = smul.u32 2, %s22
      $region36: #{transformer_forward.11} parent=31 // pred_fallthru
        _
      // Predicated region
      $region37: #{transformer_forward.11} parent=31 // pred_check
        %p290 = pneg %p74
      $region38: #{transformer_forward.11} parent=31 // pred_check_branch
        %292 = sbr.rel (%p290) target = $region40
      $region39: #{transformer_forward.11} parent=31 // pred_region
        %p293 = scmp.lt.s32.totalorder %s21, 1
        %s294 = scalar_select %p293, %s21, 1
        %s295 = smul.addr %s294, 4
        %s296 = smul.addr %s295, 4
        %s297 = scalar_lea.vmem %s1, %s296
      $region40: #{transformer_forward.11} parent=31 // pred_fallthru
        _
      // Predicated region
      $region41: #{transformer_forward.11} parent=31 // pred_check
        %p298 = pneg %p100
      $region42: #{transformer_forward.11} parent=31 // pred_check_branch
        %300 = sbr.rel (%p298) target = $region44
      $region43: #{transformer_forward.11} parent=31 // pred_region
        %p301 = scmp.lt.s32.totalorder %s21, 1
        %s302 = scalar_select %p301, %s21, 1
        %s303 = smul.addr %s302, 4
        %s304 = smul.addr %s303, 4
        %s305 = scalar_lea.vmem %s2, %s304
      $region44: #{transformer_forward.11} parent=31 // pred_fallthru
        _
      // Predicated region
      $region45: #{transformer_forward.11} parent=31 // pred_check
        %p306 = pneg %p128
      $region46: #{transformer_forward.11} parent=31 // pred_check_branch
        %308 = sbr.rel (%p306) target = $region48
      $region47: #{transformer_forward.11} parent=31 // pred_region
        %s309 = smul.u32 2, %s22
        %p310 = scmp.lt.s32.totalorder %s21, 1
        %s311 = scalar_select %p310, %s21, 1
        %p312 = scmp.lt.s32.totalorder %s309, 3
        %s313 = scalar_select %p312, %s309, 3
        %s314 = smul.addr %s311, 4
        %s315 = sadd.s32 %s313, %s314
        %s316 = smul.addr %s315, 4
        %s317 = scalar_lea.vmem %s3, %s316
        %s318 = smul.u32 2, %s22
      $region48: #{transformer_forward.11} parent=31 // pred_fallthru
        _
    $region32: #{transformer_forward.11} parent=5 // pred_fallthru
      _
    %p319 = scmp.le.s32.totalorder 1, %s14
    %p320 = scmp.lt.s32.totalorder %s14, 5
    %p321 = pnand %p319, %p320
    %p322 = pneg %p321
    // Predicated region
    $region49: #{transformer_forward.11} parent=5 // pred_check
      _
    $region50: #{transformer_forward.11} parent=5 // pred_check_branch
      %324 = sbr.rel (%p321) target = $region52
    $region51: #{transformer_forward.11} parent=5 // pred_region
      %s325 = ssub.s32 %s14, 1
      %s326 = smul.u32 2, %s24
      %p327 = scmp.lt.s32.totalorder %s23, 1
      %s328 = scalar_select %p327, %s23, 1
      %p329 = scmp.lt.s32.totalorder %s326, 3
      %s330 = scalar_select %p329, %s326, 3
      %s331 = smul.addr %s328, 4
      %s332 = sadd.s32 %s330, %s331
      %s333 = smul.addr %s332, 4
      %s334 = scalar_lea.vmem %s0, %s333
      %p335 = pneg %p54
      %p336 = pneg %p51
      %p337 = scmp.lt.s32.totalorder %s23, 1
      %s338 = scalar_select %p337, %s23, 1
      %s339 = smul.addr %s338, 4
      %s340 = smul.addr %s339, 4
      %s341 = scalar_lea.vmem %s1, %s340
      %p342 = pneg %p80
      %p343 = pneg %p77
      %p344 = scmp.lt.s32.totalorder %s23, 1
      %s345 = scalar_select %p344, %s23, 1
      %s346 = smul.addr %s345, 4
      %s347 = smul.addr %s346, 4
      %s348 = scalar_lea.vmem %s2, %s347
      %p349 = pneg %p106
      %p350 = pneg %p103
      %s351 = smul.u32 2, %s24
      %p352 = scmp.lt.s32.totalorder %s23, 1
      %s353 = scalar_select %p352, %s23, 1
      %p354 = scmp.lt.s32.totalorder %s351, 3
      %s355 = scalar_select %p354, %s351, 3
      %s356 = smul.addr %s353, 4
      %s357 = sadd.s32 %s355, %s356
      %s358 = smul.addr %s357, 4
      %s359 = scalar_lea.vmem %s3, %s358
      %p360 = pneg %p134
      %p361 = pneg %p131
      %p362 = pneg %p155
      %p363 = pneg %p152
      %p364 = pneg %p176
      %p365 = pneg %p173
      %p366 = pneg %p197
      %p367 = pneg %p194
      %p368 = pneg %p218
      %p369 = pneg %p215
      %p370 = pneg %p246
      %p371 = pneg %p243
      %s372 = smul.u32 2, %s24
      %p373 = scmp.lt.s32.totalorder %s23, 1
      %s374 = scalar_select %p373, %s23, 1
      %p375 = scmp.lt.s32.totalorder %s372, 3
      %s376 = scalar_select %p375, %s372, 3
      %s377 = smul.addr %s374, 4
      %s378 = sadd.s32 %s376, %s377
      %s379 = smul.addr %s378, 4
      %s380 = scalar_lea.vmem %s8, %s379
      %s381 = smul.u32 2, %s24
      %p382 = scmp.lt.s32.totalorder %s23, 1
      %s383 = scalar_select %p382, %s23, 1
      %p384 = scmp.lt.s32.totalorder %s381, 3
      %s385 = scalar_select %p384, %s381, 3
      %s386 = smul.addr %s383, 4
      %s387 = sadd.s32 %s385, %s386
      %s388 = smul.addr %s387, 4
      %s389 = scalar_lea.vmem %s0, %s388
      %s390 = smul.u32 2, %s24
      %p391 = scmp.lt.s32.totalorder %s23, 1
      %s392 = scalar_select %p391, %s23, 1
      %s393 = smul.addr %s392, 4
      %s394 = smul.addr %s393, 4
      %s395 = scalar_lea.vmem %s1, %s394
      %p396 = scmp.lt.s32.totalorder %s23, 1
      %s397 = scalar_select %p396, %s23, 1
      %s398 = smul.addr %s397, 4
      %s399 = smul.addr %s398, 4
      %s400 = scalar_lea.vmem %s2, %s399
      %s401 = smul.u32 2, %s24
      %p402 = scmp.lt.s32.totalorder %s23, 1
      %s403 = scalar_select %p402, %s23, 1
      %p404 = scmp.lt.s32.totalorder %s401, 3
      %s405 = scalar_select %p404, %s401, 3
      %s406 = smul.addr %s403, 4
      %s407 = sadd.s32 %s405, %s406
      %s408 = smul.addr %s407, 4
      %s409 = scalar_lea.vmem %s3, %s408
      %s410 = smul.u32 2, %s24
      %s411 = smul.u32 2, %s24
      %p412 = scmp.lt.s32.totalorder %s23, 1
      %s413 = scalar_select %p412, %s23, 1
      %p414 = scmp.lt.s32.totalorder %s411, 3
      %s415 = scalar_select %p414, %s411, 3
      %s416 = smul.addr %s413, 4
      %s417 = sadd.s32 %s415, %s416
      %s418 = smul.addr %s417, 4
      %s419 = scalar_lea.vmem %s8, %s418
      %s420 = smul.u32 2, %s24
      %v422 = vld [vmem:[%s389] sm:$0xf]
      %v423 = vld [vmem:[%s389 + $0x4] sm:$0xf]
      %v424 = vld [vmem:[%s395] sm:$0xf]
      %v425 = vld [vmem:[%s395 + $0x4] sm:$0xf]
      %v426 = vld [vmem:[%s395 + $0x8] sm:$0xf]
      %v427 = vld [vmem:[%s395 + $0xc] sm:$0xf]
      %v428 = vld [vmem:[%s400] sm:$0xf]
      %v429 = vld [vmem:[%s400 + $0x4] sm:$0xf]
      %v430 = vld [vmem:[%s400 + $0x8] sm:$0xf]
      %v431 = vld [vmem:[%s400 + $0xc] sm:$0xf]
      %v432 = vlaneseq
      %v433 = vshrl.u32 %v432, 7
      %v434 = vadd.s32 %v433, 8
      %s435 = smul.u32 %s24, 16
      %v436 = vstv %s435
      %v437 = vadd.s32 %v433, %v436
      %v438 = vadd.s32 %v434, %v436
      %v439 = vlaneseq
      %v440 = vand.u32 %v439, 127
      %vm441 = vcmp.ge.s32.totalorder %v437, %v440
      %vm442 = vcmp.ge.s32.totalorder %v438, %v440
      %v445 = vunpack.c.l.b16 %v422
      %v446 = vunpack.c.l.b16 %v423
      %v447 = vpack.c.b16 %v446, %v445
      %v452 = vunpack.c.l.b16 %v424
      %v453 = vunpack.c.l.b16 %v425
      %v454 = vunpack.c.l.b16 %v426
      %v455 = vunpack.c.l.b16 %v427
      %v456 = vpack.c.b16 %v453, %v452
      %v457 = vpack.c.b16 %v455, %v454
      %vm458 = vcmask 261120
      %v460 = vsel %vm458, %v447, 0
      %v463 = vsel %vm458, %v456, 0
      %v466 = vsel %vm458, %v457, 0
      %468 = vmatpush.bf16.xpose.msra.mxu0 0
      %469 = vmatpush.bf16.xpose.msra.mxu0 0
      %470 = vmatpush.bf16.xpose.msra.mxu0 0
      %471 = vmatpush.bf16.xpose.msra.mxu0 0
      %472 = vmatpush.bf16.xpose.msra.mxu0 0
      %473 = vmatpush.bf16.xpose.msra.mxu0 0
      %474 = vmatpush.bf16.xpose.msra.mxu0 %v466
      %475 = vmatpush.bf16.xpose.msra.mxu0 %v463
      %476 = vmatmul.bf16.gmra.mxu0 %v460
      %v477 = vpop.f32.mrf.mxu0
      %v478 = vadd.f32 0.0, %v477
      %v479 = vpop.f32.mrf.mxu0
      %v480 = vadd.f32 0.0, %v479
      %481 = vdwg.mxu0
      %v482 = vsel %vm441, %v478, -1e+30
      %v483 = vsel %vm442, %v480, -1e+30
      %v484 = vsel %vm458, %v482, -inf
      %485 = vmax.xlane.f32.xlu0 %v484
      %v486 = vpop.xlane.xlu0 %485
      %v487 = vsel %vm458, %v483, -inf
      %488 = vmax.xlane.f32.xlu0 %v487
      %v489 = vpop.xlane.xlu0 %488
      %v490 = vsub.f32 %v482, %v486
      %v491 = vsub.f32 %v483, %v489
      %v492 = vmul.f32 %v490, 1.442695
      %v493 = vpow.pop %v492
      %v494 = vmul.f32 %v491, 1.442695
      %v495 = vpow.pop %v494
      %v496 = vsel %vm458, %v493, 0.0
      %497 = vadd.xlane.f32.xlu0 %v496
      %v498 = vpop.xlane.xlu0 %497
      %v499 = vsel %vm458, %v495, 0.0
      %500 = vadd.xlane.f32.xlu0 %v499
      %v501 = vpop.xlane.xlu0 %500
      %v502 = vrcp.pop %v498
      %v503 = vrcp.pop %v501
      %v504 = vmul.f32 %v493, %v502
      %v505 = vmul.f32 %v495, %v503
      %v506 = vpack.c.bf16 %v505, %v504
      %v511 = vunpack.c.l.b16 %v428
      %v512 = vunpack.c.l.b16 %v429
      %v513 = vunpack.c.l.b16 %v430
      %v514 = vunpack.c.l.b16 %v431
      %v515 = vpack.c.b16 %v512, %v511
      %v516 = vpack.c.b16 %v514, %v513
      %v520 = vsel %vm458, %v506, 0
      %522 = vmatpush.bf16.msra.mxu0 0
      %523 = vmatpush.bf16.msra.mxu0 0
      %524 = vmatpush.bf16.msra.mxu0 0
      %525 = vmatpush.bf16.msra.mxu0 0
      %526 = vmatpush.bf16.msra.mxu0 0
      %527 = vmatpush.bf16.msra.mxu0 0
      %528 = vmatpush.bf16.msra.mxu0 %v516
      %529 = vmatpush.bf16.msra.mxu0 %v515
      %530 = vmatmul.bf16.gmra.mxu0 %v520
      %v531 = vpop.f32.mrf.mxu0
      %v532 = vadd.f32 0.0, %v531
      %v533 = vpop.f32.mrf.mxu0
      %v534 = vadd.f32 0.0, %v533
      %535 = vdwg.mxu0
      %536 = vst.msk [vmem:[#allocation2] sm:$0xff] %vm458, %v532
      %537 = vst.msk [vmem:[#allocation2 + $0x8] sm:$0xff] %vm458, %v534
      %538 = vrot.lane.b32.xlu0 %v447, 96
      %v539 = vpop.permute.xlu0 %538
      %540 = vrot.lane.b32.xlu0 %v456, 96
      %v541 = vpop.permute.xlu0 %540
      %542 = vrot.lane.b32.xlu0 %v457, 96
      %v543 = vpop.permute.xlu0 %542
      %v545 = vsel %vm458, %v539, 0
      %v548 = vsel %vm458, %v541, 0
      %v551 = vsel %vm458, %v543, 0
      %553 = vmatpush.bf16.xpose.msra.mxu0 0
      %554 = vmatpush.bf16.xpose.msra.mxu0 0
      %555 = vmatpush.bf16.xpose.msra.mxu0 0
      %556 = vmatpush.bf16.xpose.msra.mxu0 0
      %557 = vmatpush.bf16.xpose.msra.mxu0 0
      %558 = vmatpush.bf16.xpose.msra.mxu0 0
      %559 = vmatpush.bf16.xpose.msra.mxu0 %v551
      %560 = vmatpush.bf16.xpose.msra.mxu0 %v548
      %561 = vmatmul.bf16.gmra.mxu0 %v545
      %v562 = vpop.f32.mrf.mxu0
      %v563 = vadd.f32 0.0, %v562
      %v564 = vpop.f32.mrf.mxu0
      %v565 = vadd.f32 0.0, %v564
      %566 = vdwg.mxu0
      %v567 = vsel %vm441, %v563, -1e+30
      %v568 = vsel %vm442, %v565, -1e+30
      %v569 = vsel %vm458, %v567, -inf
      %570 = vmax.xlane.f32.xlu0 %v569
      %v571 = vpop.xlane.xlu0 %570
      %v572 = vsel %vm458, %v568, -inf
      %573 = vmax.xlane.f32.xlu0 %v572
      %v574 = vpop.xlane.xlu0 %573
      %v575 = vsub.f32 %v567, %v571
      %v576 = vsub.f32 %v568, %v574
      %v577 = vmul.f32 %v575, 1.442695
      %v578 = vpow.pop %v577
      %v579 = vmul.f32 %v576, 1.442695
      %v580 = vpow.pop %v579
      %v581 = vsel %vm458, %v578, 0.0
      %582 = vadd.xlane.f32.xlu0 %v581
      %v583 = vpop.xlane.xlu0 %582
      %v584 = vsel %vm458, %v580, 0.0
      %585 = vadd.xlane.f32.xlu0 %v584
      %v586 = vpop.xlane.xlu0 %585
      %v587 = vrcp.pop %v583
      %v588 = vrcp.pop %v586
      %v589 = vmul.f32 %v578, %v587
      %v590 = vmul.f32 %v580, %v588
      %v591 = vpack.c.bf16 %v590, %v589
      %592 = vrot.lane.b32.xlu0 %v515, 96
      %v593 = vpop.permute.xlu0 %592
      %594 = vrot.lane.b32.xlu0 %v516, 96
      %v595 = vpop.permute.xlu0 %594
      %v599 = vsel %vm458, %v591, 0
      %601 = vmatpush.bf16.msra.mxu0 0
      %602 = vmatpush.bf16.msra.mxu0 0
      %603 = vmatpush.bf16.msra.mxu0 0
      %604 = vmatpush.bf16.msra.mxu0 0
      %605 = vmatpush.bf16.msra.mxu0 0
      %606 = vmatpush.bf16.msra.mxu0 0
      %607 = vmatpush.bf16.msra.mxu0 %v595
      %608 = vmatpush.bf16.msra.mxu0 %v593
      %609 = vmatmul.bf16.gmra.mxu0 %v599
      %v610 = vpop.f32.mrf.mxu0
      %v611 = vadd.f32 0.0, %v610
      %v612 = vpop.f32.mrf.mxu0
      %v613 = vadd.f32 0.0, %v612
      %614 = vdwg.mxu0
      %617 = vrot.lane.b32.xlu0 %v611, 32
      %v618 = vpop.permute.xlu0 %617
      %619 = vrot.lane.b32.xlu0 %v613, 32
      %v620 = vpop.permute.xlu0 %619
      %vm623 = vcmask 523520
      %624 = vst.msk [vmem:[#allocation2] sm:$0xff] %vm623, %v618
      %625 = vst.msk [vmem:[#allocation2 + $0x8] sm:$0xff] %vm623, %v620
      %626 = vrot.lane.b32.xlu0 %v447, 64
      %v627 = vpop.permute.xlu0 %626
      %628 = vrot.lane.b32.xlu0 %v456, 64
      %v629 = vpop.permute.xlu0 %628
      %630 = vrot.lane.b32.xlu0 %v457, 64
      %v631 = vpop.permute.xlu0 %630
      %v633 = vsel %vm458, %v627, 0
      %v636 = vsel %vm458, %v629, 0
      %v639 = vsel %vm458, %v631, 0
      %641 = vmatpush.bf16.xpose.msra.mxu0 0
      %642 = vmatpush.bf16.xpose.msra.mxu0 0
      %643 = vmatpush.bf16.xpose.msra.mxu0 0
      %644 = vmatpush.bf16.xpose.msra.mxu0 0
      %645 = vmatpush.bf16.xpose.msra.mxu0 0
      %646 = vmatpush.bf16.xpose.msra.mxu0 0
      %647 = vmatpush.bf16.xpose.msra.mxu0 %v639
      %648 = vmatpush.bf16.xpose.msra.mxu0 %v636
      %649 = vmatmul.bf16.gmra.mxu0 %v633
      %v650 = vpop.f32.mrf.mxu0
      %v651 = vadd.f32 0.0, %v650
      %v652 = vpop.f32.mrf.mxu0
      %v653 = vadd.f32 0.0, %v652
      %654 = vdwg.mxu0
      %v655 = vsel %vm441, %v651, -1e+30
      %v656 = vsel %vm442, %v653, -1e+30
      %v657 = vsel %vm458, %v655, -inf
      %658 = vmax.xlane.f32.xlu0 %v657
      %v659 = vpop.xlane.xlu0 %658
      %v660 = vsel %vm458, %v656, -inf
      %661 = vmax.xlane.f32.xlu0 %v660
      %v662 = vpop.xlane.xlu0 %661
      %v663 = vsub.f32 %v655, %v659
      %v664 = vsub.f32 %v656, %v662
      %v665 = vmul.f32 %v663, 1.442695
      %v666 = vpow.pop %v665
      %v667 = vmul.f32 %v664, 1.442695
      %v668 = vpow.pop %v667
      %v669 = vsel %vm458, %v666, 0.0
      %670 = vadd.xlane.f32.xlu0 %v669
      %v671 = vpop.xlane.xlu0 %670
      %v672 = vsel %vm458, %v668, 0.0
      %673 = vadd.xlane.f32.xlu0 %v672
      %v674 = vpop.xlane.xlu0 %673
      %v675 = vrcp.pop %v671
      %v676 = vrcp.pop %v674
      %v677 = vmul.f32 %v666, %v675
      %v678 = vmul.f32 %v668, %v676
      %v679 = vpack.c.bf16 %v678, %v677
      %680 = vrot.lane.b32.xlu0 %v515, 64
      %v681 = vpop.permute.xlu0 %680
      %682 = vrot.lane.b32.xlu0 %v516, 64
      %v683 = vpop.permute.xlu0 %682
      %v687 = vsel %vm458, %v679, 0
      %689 = vmatpush.bf16.msra.mxu0 0
      %690 = vmatpush.bf16.msra.mxu0 0
      %691 = vmatpush.bf16.msra.mxu0 0
      %692 = vmatpush.bf16.msra.mxu0 0
      %693 = vmatpush.bf16.msra.mxu0 0
      %694 = vmatpush.bf16.msra.mxu0 0
      %695 = vmatpush.bf16.msra.mxu0 %v683
      %696 = vmatpush.bf16.msra.mxu0 %v681
      %697 = vmatmul.bf16.gmra.mxu0 %v687
      %v698 = vpop.f32.mrf.mxu0
      %v699 = vadd.f32 0.0, %v698
      %v700 = vpop.f32.mrf.mxu0
      %v701 = vadd.f32 0.0, %v700
      %702 = vdwg.mxu0
      %705 = vrot.lane.b32.xlu0 %v699, 64
      %v706 = vpop.permute.xlu0 %705
      %707 = vrot.lane.b32.xlu0 %v701, 64
      %v708 = vpop.permute.xlu0 %707
      %vm711 = vcmask 785920
      %712 = vst.msk [vmem:[#allocation2] sm:$0xff] %vm711, %v706
      %713 = vst.msk [vmem:[#allocation2 + $0x8] sm:$0xff] %vm711, %v708
      %714 = vrot.lane.b32.xlu0 %v447, 32
      %v715 = vpop.permute.xlu0 %714
      %716 = vrot.lane.b32.xlu0 %v456, 32
      %v717 = vpop.permute.xlu0 %716
      %718 = vrot.lane.b32.xlu0 %v457, 32
      %v719 = vpop.permute.xlu0 %718
      %v721 = vsel %vm458, %v715, 0
      %v724 = vsel %vm458, %v717, 0
      %v727 = vsel %vm458, %v719, 0
      %729 = vmatpush.bf16.xpose.msra.mxu0 0
      %730 = vmatpush.bf16.xpose.msra.mxu0 0
      %731 = vmatpush.bf16.xpose.msra.mxu0 0
      %732 = vmatpush.bf16.xpose.msra.mxu0 0
      %733 = vmatpush.bf16.xpose.msra.mxu0 0
      %734 = vmatpush.bf16.xpose.msra.mxu0 0
      %735 = vmatpush.bf16.xpose.msra.mxu0 %v727
      %736 = vmatpush.bf16.xpose.msra.mxu0 %v724
      %737 = vmatmul.bf16.gmra.mxu0 %v721
      %v738 = vpop.f32.mrf.mxu0
      %v739 = vadd.f32 0.0, %v738
      %v740 = vpop.f32.mrf.mxu0
      %v741 = vadd.f32 0.0, %v740
      %742 = vdwg.mxu0
      %v743 = vsel %vm441, %v739, -1e+30
      %v744 = vsel %vm442, %v741, -1e+30
      %v745 = vsel %vm458, %v743, -inf
      %746 = vmax.xlane.f32.xlu0 %v745
      %v747 = vpop.xlane.xlu0 %746
      %v748 = vsel %vm458, %v744, -inf
      %749 = vmax.xlane.f32.xlu0 %v748
      %v750 = vpop.xlane.xlu0 %749
      %v751 = vsub.f32 %v743, %v747
      %v752 = vsub.f32 %v744, %v750
      %v753 = vmul.f32 %v751, 1.442695
      %v754 = vpow.pop %v753
      %v755 = vmul.f32 %v752, 1.442695
      %v756 = vpow.pop %v755
      %v757 = vsel %vm458, %v754, 0.0
      %758 = vadd.xlane.f32.xlu0 %v757
      %v759 = vpop.xlane.xlu0 %758
      %v760 = vsel %vm458, %v756, 0.0
      %761 = vadd.xlane.f32.xlu0 %v760
      %v762 = vpop.xlane.xlu0 %761
      %v763 = vrcp.pop %v759
      %v764 = vrcp.pop %v762
      %v765 = vmul.f32 %v754, %v763
      %v766 = vmul.f32 %v756, %v764
      %v767 = vpack.c.bf16 %v766, %v765
      %768 = vrot.lane.b32.xlu0 %v515, 32
      %v769 = vpop.permute.xlu0 %768
      %770 = vrot.lane.b32.xlu0 %v516, 32
      %v771 = vpop.permute.xlu0 %770
      %v775 = vsel %vm458, %v767, 0
      %777 = vmatpush.bf16.msra.mxu0 0
      %778 = vmatpush.bf16.msra.mxu0 0
      %779 = vmatpush.bf16.msra.mxu0 0
      %780 = vmatpush.bf16.msra.mxu0 0
      %781 = vmatpush.bf16.msra.mxu0 0
      %782 = vmatpush.bf16.msra.mxu0 0
      %783 = vmatpush.bf16.msra.mxu0 %v771
      %784 = vmatpush.bf16.msra.mxu0 %v769
      %785 = vmatmul.bf16.gmra.mxu0 %v775
      %v786 = vpop.f32.mrf.mxu0
      %v787 = vadd.f32 0.0, %v786
      %v788 = vpop.f32.mrf.mxu0
      %v789 = vadd.f32 0.0, %v788
      %790 = vdwg.mxu0
      %793 = vrot.lane.b32.xlu0 %v787, 96
      %v794 = vpop.permute.xlu0 %793
      %795 = vrot.lane.b32.xlu0 %v789, 96
      %v796 = vpop.permute.xlu0 %795
      %vm799 = vcmask 1048320
      %800 = vst.msk [vmem:[#allocation2] sm:$0xff] %vm799, %v794
      %801 = vst.msk [vmem:[#allocation2 + $0x8] sm:$0xff] %vm799, %v796
      %v802 = vld [vmem:[#allocation2] sm:$0xff]
      %v803 = vld [vmem:[#allocation2 + $0x8] sm:$0xff]
      %v804 = vpack.c.bf16 %v803, %v802
      %v805 = vld [vmem:[%s4] sm:$0xf]
      %v806 = vld [vmem:[%s4 + $0x4] sm:$0xf]
      %v807 = vld [vmem:[%s4 + $0x8] sm:$0xf]
      %v808 = vld [vmem:[%s4 + $0xc] sm:$0xf]
      %v809 = vld [vmem:[%s4 + $0x10] sm:$0xf]
      %v810 = vld [vmem:[%s4 + $0x14] sm:$0xf]
      %v811 = vld [vmem:[%s4 + $0x18] sm:$0xf]
      %v812 = vld [vmem:[%s4 + $0x1c] sm:$0xf]
      %v813 = vld [vmem:[%s4 + $0x20] sm:$0xf]
      %v814 = vld [vmem:[%s4 + $0x24] sm:$0xf]
      %v815 = vld [vmem:[%s4 + $0x28] sm:$0xf]
      %v816 = vld [vmem:[%s4 + $0x2c] sm:$0xf]
      %v817 = vld [vmem:[%s4 + $0x30] sm:$0xf]
      %v818 = vld [vmem:[%s4 + $0x34] sm:$0xf]
      %v819 = vld [vmem:[%s4 + $0x38] sm:$0xf]
      %v820 = vld [vmem:[%s4 + $0x3c] sm:$0xf]
      %v821 = vld [vmem:[%s5] sm:$0x1]
      %v823 = vperm.slane %v821, 0
      %v841 = vunpack.c.l.b16 %v805
      %v842 = vunpack.c.l.b16 %v806
      %v843 = vunpack.c.l.b16 %v807
      %v844 = vunpack.c.l.b16 %v808
      %v845 = vunpack.c.l.b16 %v809
      %v846 = vunpack.c.l.b16 %v810
      %v847 = vunpack.c.l.b16 %v811
      %v848 = vunpack.c.l.b16 %v812
      %v849 = vunpack.c.l.b16 %v813
      %v850 = vunpack.c.l.b16 %v814
      %v851 = vunpack.c.l.b16 %v815
      %v852 = vunpack.c.l.b16 %v816
      %v853 = vunpack.c.l.b16 %v817
      %v854 = vunpack.c.l.b16 %v818
      %v855 = vunpack.c.l.b16 %v819
      %v856 = vunpack.c.l.b16 %v820
      %v857 = vpack.c.b16 %v842, %v841
      %v858 = vpack.c.b16 %v844, %v843
      %v859 = vpack.c.b16 %v846, %v845
      %v860 = vpack.c.b16 %v848, %v847
      %v861 = vpack.c.b16 %v850, %v849
      %v862 = vpack.c.b16 %v852, %v851
      %v863 = vpack.c.b16 %v854, %v853
      %v864 = vpack.c.b16 %v856, %v855
      %873 = vmatpush.bf16.msra.mxu0 %v864
      %874 = vmatpush.bf16.msra.mxu0 %v863
      %875 = vmatpush.bf16.msra.mxu0 %v862
      %876 = vmatpush.bf16.msra.mxu0 %v861
      %877 = vmatpush.bf16.msra.mxu0 %v860
      %878 = vmatpush.bf16.msra.mxu0 %v859
      %879 = vmatpush.bf16.msra.mxu0 %v858
      %880 = vmatpush.bf16.msra.mxu0 %v857
      %881 = vmatmul.bf16.gmra.mxu0 %v804
      %v882 = vpop.f32.mrf.mxu0
      %v883 = vadd.f32 %v823, %v882
      %v884 = vpop.f32.mrf.mxu0
      %v885 = vadd.f32 %v823, %v884
      %886 = vdwg.mxu0
      %v887 = vld [vmem:[%s409] sm:$0xf]
      %v888 = vld [vmem:[%s409 + $0x4] sm:$0xf]
      %v889 = vunpack.c.l.bf16 %v887
      %v890 = vunpack.c.l.bf16 %v888
      %v891 = vadd.f32 %v889, %v883
      %v892 = vadd.f32 %v890, %v885
      %893 = vadd.xlane.f32.xlu0 %v891
      %v894 = vpop.xlane.xlu0 %893
      %895 = vadd.xlane.f32.xlu0 %v892
      %v896 = vpop.xlane.xlu0 %895
      %v897 = vrcp.pop 128.0
      %v898 = vmul.f32 128.0, %v897
      %v899 = vsub.f32 1.0, %v898
      %v900 = vmul.f32 %v897, %v899
      %v901 = vadd.f32 %v897, %v900
      %vm902 = vweird.f32 %v897
      %v903 = vsel %vm902, %v897, %v901
      %v904 = vmul.f32 %v894, %v903
      %v905 = vmul.f32 %v896, %v903
      %v906 = vsub.f32 %v891, %v904
      %v907 = vsub.f32 %v892, %v905
      %v908 = vmul.f32 %v906, %v906
      %v909 = vmul.f32 %v907, %v907
      %910 = vadd.xlane.f32.xlu0 %v908
      %v911 = vpop.xlane.xlu0 %910
      %912 = vadd.xlane.f32.xlu0 %v909
      %v913 = vpop.xlane.xlu0 %912
      %v914 = vmul.f32 %v911, %v903
      %v915 = vmul.f32 %v913, %v903
      %v916 = vadd.f32 %v914, 1e-05
      %v917 = vadd.f32 %v915, 1e-05
      %v918 = vrsqrt.pop %v916
      %v919 = vmul.f32 %v918, %v916
      %v920 = vmul.f32 %v919, %v918
      %v921 = vmul.f32 0.5, %v920
      %v922 = vsub.f32 1.5, %v921
      %v923 = vmul.f32 %v918, %v922
      %vm924 = vweird.f32 %v916
      %vm925 = vweird.f32 %v918
      %vm926 = vmor %vm924, %vm925
      %v927 = vsel %vm926, %v918, %v923
      %v928 = vrsqrt.pop %v917
      %v929 = vmul.f32 %v928, %v917
      %v930 = vmul.f32 %v929, %v928
      %v931 = vmul.f32 0.5, %v930
      %v932 = vsub.f32 1.5, %v931
      %v933 = vmul.f32 %v928, %v932
      %vm934 = vweird.f32 %v917
      %vm935 = vweird.f32 %v928
      %vm936 = vmor %vm934, %vm935
      %v937 = vsel %vm936, %v928, %v933
      %v938 = vmul.f32 %v906, %v927
      %v939 = vmul.f32 %v907, %v937
      %v940 = vld [vmem:[%s6] sm:$0x1]
      %v942 = vperm.slane %v940, 0
      %v944 = vmul.f32 %v938, %v942
      %v945 = vmul.f32 %v939, %v942
      %v946 = vld [vmem:[%s7] sm:$0x1]
      %v948 = vperm.slane %v946, 0
      %v950 = vadd.f32 %v944, %v948
      %v951 = vadd.f32 %v945, %v948
      %v952 = vpack.c.bf16 %v950, %v950
      %v953 = vpack.c.bf16 %v951, %v951
      %954 = vst [vmem:[%s419] sm:$0xf] %v952
      %955 = vst [vmem:[%s419 + $0x4] sm:$0xf] %v953
      %s956 = smul.u32 2, %s24
      %p957 = scmp.lt.s32.totalorder %s23, 1
      %s958 = scalar_select %p957, %s23, 1
      %p959 = scmp.lt.s32.totalorder %s956, 3
      %s960 = scalar_select %p959, %s956, 3
      %s961 = smul.addr %s958, 4
      %s962 = sadd.s32 %s960, %s961
      %s963 = smul.addr %s962, 4
      %s964 = scalar_lea.vmem %s8, %s963
      // Predicated region
      $region53: #{transformer_forward.11} parent=51 // pred_check
        %p965 = pneg %p243
      $region54: #{transformer_forward.11} parent=51 // pred_check_branch
        %967 = sbr.rel (%p965) target = $region56
      $region55: #{transformer_forward.11} parent=51 // pred_region
        %s968 = smul.u32 2, %s24
      $region56: #{transformer_forward.11} parent=51 // pred_fallthru
        _
    $region52: #{transformer_forward.11} parent=5 // pred_fallthru
      _
    %p969 = scmp.le.s32.totalorder 2, %s14
    // Predicated region
    $region57: #{transformer_forward.11} parent=5 // pred_check
      %p970 = pneg %p969
    $region58: #{transformer_forward.11} parent=5 // pred_check_branch
      %972 = sbr.rel (%p970) target = $region60
    $region59: #{transformer_forward.11} parent=5 // pred_region
      %s973 = ssub.s32 %s14, 2
      // Predicated region
      $region61: #{transformer_forward.11} parent=59 // pred_check
        %p974 = pneg %p249
      $region62: #{transformer_forward.11} parent=59 // pred_check_branch
        %976 = sbr.rel (%p974) target = $region64
      $region63: #{transformer_forward.11} parent=59 // pred_region
        %s977 = smul.u32 2, %s26
        %p978 = scmp.lt.s32.totalorder %s25, 1
        %s979 = scalar_select %p978, %s25, 1
        %p980 = scmp.lt.s32.totalorder %s977, 3
        %s981 = scalar_select %p980, %s977, 3
        %s982 = smul.addr %s979, 4
        %s983 = sadd.s32 %s981, %s982
        %s984 = smul.addr %s983, 4
        %s985 = scalar_lea.vmem %s8, %s984
      $region64: #{transformer_forward.11} parent=59 // pred_fallthru
        _
    $region60: #{transformer_forward.11} parent=5 // pred_fallthru
      _
  $region6: #{transformer_forward.11} parent=0 // loop_footer
    %s18 = sadd.s32 1, %s14
  $region7: #{transformer_forward.11} parent=0 // loop_footer_branch
    %13 = sbr.rel target = $region3
  $region8: #{transformer_forward.11} parent=0 // loop_exit
    _

// kernel: transformer_forward.13
$region0: #{transformer_forward.13}
  #allocation0 [shape = 'u32[]', space=smem, size = 0x4, offset = 0x4, fixed_abs, tag = 'smem constant byte address 0x4 - core index']
  #allocation1 [shape = 'u32[72,128]{1,0:T(1,128)}', space=vmem, size = 0x9000, scoped, tag = 'internal scratch']
  %s0 = inlined_call_operand.vmem [shape: bf16[64,128], index: 0, kind: input, shape index: {}]
  %s1 = inlined_call_operand.hbm [shape: bf16[128,256], index: 1, kind: input, shape index: {}]
  %s2 = inlined_call_operand.vmem [shape: f32[1,256], index: 2, kind: input, shape index: {}]
  %s3 = inlined_call_operand.vmem [shape: f32[64,256], index: 3, kind: output, shape index: {}]
  %s4 = sld [smem:[#allocation0]]
  $region26: #{transformer_forward.13} parent=0
    _
  %s6 = ssub.s32 1, %s4
  %s7 = scalar_select 0, %s6, %s4
  $region1: #{transformer_forward.13} parent=0
    #allocation2 [shape = 'u8[65536]{0}', space=vmem, size = 0x10000, scoped, tag = 'input window, operand 1, single buffered']
    #allocation3 [shape = 's32[1]{0}', space=sflag, size = 0x4, scoped, tag = 'scoped memory for transformer_forward.13']
    %8 = vsyncpa [#allocation3], 0
    // Predicated region
    $region2: #{transformer_forward.13} parent=1 // pred_check
      _
    $region3: #{transformer_forward.13} parent=1 // pred_check_branch
      %10 = sbr.rel (0) target = $region5
    $region4: #{transformer_forward.13} parent=1 // pred_region
      _
    $region5: #{transformer_forward.13} parent=1 // pred_fallthru
      _
    // Predicated region
    $region6: #{transformer_forward.13} parent=1 // pred_check
      _
    $region7: #{transformer_forward.13} parent=1 // pred_check_branch
      %12 = sbr.rel (0) target = $region9
    $region8: #{transformer_forward.13} parent=1 // pred_region
      %14 = vsyncadd [#allocation3], 0
      %s15 = sshll.u32 %s1, 4
      %s16 = int_to_ptr.hbm [resolvable:$true] %s15
      %s17 = sshll.u32 [#allocation2], 4
      %s18 = int_to_ptr.vmem [resolvable:$true] %s17
      %23 = dma.hbm_to_vmem [thread:$0]  %s16, 2048, %s18, [#allocation3], 128, 128, 8
    $region9: #{transformer_forward.13} parent=1 // pred_fallthru
      _
    // Predicated region
    $region10: #{transformer_forward.13} parent=1 // pred_check
      _
    $region11: #{transformer_forward.13} parent=1 // pred_check_branch
      %25 = sbr.rel (0) target = $region13
    $region12: #{transformer_forward.13} parent=1 // pred_region
      _
    $region13: #{transformer_forward.13} parent=1 // pred_fallthru
      _
    // Predicated region
    $region14: #{transformer_forward.13} parent=1 // pred_check
      _
    $region15: #{transformer_forward.13} parent=1 // pred_check_branch
      %27 = sbr.rel (0) target = $region17
    $region16: #{transformer_forward.13} parent=1 // pred_region
      %29 = dma.done [#allocation3], 2048
    $region17: #{transformer_forward.13} parent=1 // pred_fallthru
      _
    %v30 = vld [vmem:[%s0] sm:$0xf]
    %v31 = vld [vmem:[%s0 + $0x4] sm:$0xf]
    %v32 = vld [vmem:[%s0 + $0x8] sm:$0xf]
    %v33 = vld [vmem:[%s0 + $0xc] sm:$0xf]
    %v34 = vld [vmem:[%s0 + $0x10] sm:$0xf]
    %v35 = vld [vmem:[%s0 + $0x14] sm:$0xf]
    %v36 = vld [vmem:[%s0 + $0x18] sm:$0xf]
    %v37 = vld [vmem:[%s0 + $0x1c] sm:$0xf]
    %v38 = vld [vmem:[#allocation2] sm:$0xff]
    %v39 = vld [vmem:[#allocation2 + $0x8] sm:$0xff]
    %v40 = vld [vmem:[#allocation2 + $0x10] sm:$0xff]
    %v41 = vld [vmem:[#allocation2 + $0x18] sm:$0xff]
    %v42 = vld [vmem:[#allocation2 + $0x20] sm:$0xff]
    %v43 = vld [vmem:[#allocation2 + $0x28] sm:$0xff]
    %v44 = vld [vmem:[#allocation2 + $0x30] sm:$0xff]
    %v45 = vld [vmem:[#allocation2 + $0x38] sm:$0xff]
    %v46 = vld [vmem:[#allocation2 + $0x40] sm:$0xff]
    %v47 = vld [vmem:[#allocation2 + $0x48] sm:$0xff]
    %v48 = vld [vmem:[#allocation2 + $0x50] sm:$0xff]
    %v49 = vld [vmem:[#allocation2 + $0x58] sm:$0xff]
    %v50 = vld [vmem:[#allocation2 + $0x60] sm:$0xff]
    %v51 = vld [vmem:[#allocation2 + $0x68] sm:$0xff]
    %v52 = vld [vmem:[#allocation2 + $0x70] sm:$0xff]
    %v53 = vld [vmem:[#allocation2 + $0x78] sm:$0xff]
    %v54 = vld [vmem:[%s2] sm:$0x3]
    %v56 = vperm.slane %v54, 0
    %v57 = vperm.slane %v54, 1
    %v68 = vunpack.c.l.b16 %v30
    %v69 = vunpack.c.l.b16 %v31
    %v70 = vunpack.c.l.b16 %v32
    %v71 = vunpack.c.l.b16 %v33
    %v72 = vunpack.c.l.b16 %v34
    %v73 = vunpack.c.l.b16 %v35
    %v74 = vunpack.c.l.b16 %v36
    %v75 = vunpack.c.l.b16 %v37
    %v76 = vpack.c.b16 %v69, %v68
    %v77 = vpack.c.b16 %v71, %v70
    %v78 = vpack.c.b16 %v73, %v72
    %v79 = vpack.c.b16 %v75, %v74
    %v100 = vunpack.c.l.b16 %v38
    %v101 = vunpack.c.h.b16 %v38
    %v102 = vunpack.c.l.b16 %v39
    %v103 = vunpack.c.h.b16 %v39
    %v104 = vunpack.c.l.b16 %v40
    %v105 = vunpack.c.h.b16 %v40
    %v106 = vunpack.c.l.b16 %v41
    %v107 = vunpack.c.h.b16 %v41
    %v108 = vunpack.c.l.b16 %v42
    %v109 = vunpack.c.h.b16 %v42
    %v110 = vunpack.c.l.b16 %v43
    %v111 = vunpack.c.h.b16 %v43
    %v112 = vunpack.c.l.b16 %v44
    %v113 = vunpack.c.h.b16 %v44
    %v114 = vunpack.c.l.b16 %v45
    %v115 = vunpack.c.h.b16 %v45
    %v116 = vunpack.c.l.b16 %v46
    %v117 = vunpack.c.h.b16 %v46
    %v118 = vunpack.c.l.b16 %v47
    %v119 = vunpack.c.h.b16 %v47
    %v120 = vunpack.c.l.b16 %v48
    %v121 = vunpack.c.h.b16 %v48
    %v122 = vunpack.c.l.b16 %v49
    %v123 = vunpack.c.h.b16 %v49
    %v124 = vunpack.c.l.b16 %v50
    %v125 = vunpack.c.h.b16 %v50
    %v126 = vunpack.c.l.b16 %v51
    %v127 = vunpack.c.h.b16 %v51
    %v128 = vunpack.c.l.b16 %v52
    %v129 = vunpack.c.h.b16 %v52
    %v130 = vunpack.c.l.b16 %v53
    %v131 = vunpack.c.h.b16 %v53
    %v132 = vpack.c.b16 %v102, %v100
    %v133 = vpack.c.b16 %v103, %v101
    %v134 = vpack.c.b16 %v106, %v104
    %v135 = vpack.c.b16 %v107, %v105
    %v136 = vpack.c.b16 %v110, %v108
    %v137 = vpack.c.b16 %v111, %v109
    %v138 = vpack.c.b16 %v114, %v112
    %v139 = vpack.c.b16 %v115, %v113
    %v140 = vpack.c.b16 %v118, %v116
    %v141 = vpack.c.b16 %v119, %v117
    %v142 = vpack.c.b16 %v122, %v120
    %v143 = vpack.c.b16 %v123, %v121
    %v144 = vpack.c.b16 %v126, %v124
    %v145 = vpack.c.b16 %v127, %v125
    %v146 = vpack.c.b16 %v130, %v128
    %v147 = vpack.c.b16 %v131, %v129
    %164 = vmatpush.bf16.msra.mxu0 %v146
    %165 = vmatpush.bf16.msra.mxu0 %v144
    %166 = vmatpush.bf16.msra.mxu0 %v142
    %167 = vmatpush.bf16.msra.mxu0 %v140
    %168 = vmatpush.bf16.msra.mxu0 %v138
    %169 = vmatpush.bf16.msra.mxu0 %v136
    %170 = vmatpush.bf16.msra.mxu0 %v134
    %171 = vmatpush.bf16.msra.mxu0 %v132
    %172 = vmatmul.bf16.gmra.mxu0 %v76
    %v173 = vpop.f32.mrf.mxu0
    %v174 = vadd.f32 %v56, %v173
    %v175 = vpop.f32.mrf.mxu0
    %v176 = vadd.f32 %v56, %v175
    %177 = vmatmul.bf16.gmra.mxu0 %v77
    %v178 = vpop.f32.mrf.mxu0
    %v179 = vadd.f32 %v56, %v178
    %v180 = vpop.f32.mrf.mxu0
    %v181 = vadd.f32 %v56, %v180
    %182 = vmatmul.bf16.gmra.mxu0 %v78
    %v183 = vpop.f32.mrf.mxu0
    %v184 = vadd.f32 %v56, %v183
    %v185 = vpop.f32.mrf.mxu0
    %v186 = vadd.f32 %v56, %v185
    %187 = vmatmul.bf16.gmra.mxu0 %v79
    %v188 = vpop.f32.mrf.mxu0
    %v189 = vadd.f32 %v56, %v188
    %v190 = vpop.f32.mrf.mxu0
    %v191 = vadd.f32 %v56, %v190
    %192 = vdwg.mxu0
    %193 = vmatpush.bf16.msra.mxu0 %v147
    %194 = vmatpush.bf16.msra.mxu0 %v145
    %195 = vmatpush.bf16.msra.mxu0 %v143
    %196 = vmatpush.bf16.msra.mxu0 %v141
    %197 = vmatpush.bf16.msra.mxu0 %v139
    %198 = vmatpush.bf16.msra.mxu0 %v137
    %199 = vmatpush.bf16.msra.mxu0 %v135
    %200 = vmatpush.bf16.msra.mxu0 %v133
    %201 = vmatmul.bf16.gmra.mxu0 %v76
    %v202 = vpop.f32.mrf.mxu0
    %v203 = vadd.f32 %v57, %v202
    %v204 = vpop.f32.mrf.mxu0
    %v205 = vadd.f32 %v57, %v204
    %206 = vmatmul.bf16.gmra.mxu0 %v77
    %v207 = vpop.f32.mrf.mxu0
    %v208 = vadd.f32 %v57, %v207
    %v209 = vpop.f32.mrf.mxu0
    %v210 = vadd.f32 %v57, %v209
    %211 = vmatmul.bf16.gmra.mxu0 %v78
    %v212 = vpop.f32.mrf.mxu0
    %v213 = vadd.f32 %v57, %v212
    %v214 = vpop.f32.mrf.mxu0
    %v215 = vadd.f32 %v57, %v214
    %216 = vmatmul.bf16.gmra.mxu0 %v79
    %v217 = vpop.f32.mrf.mxu0
    %v218 = vadd.f32 %v57, %v217
    %v219 = vpop.f32.mrf.mxu0
    %v220 = vadd.f32 %v57, %v219
    %221 = vdwg.mxu0
    %222 = vst [vmem:[%s3] sm:$0xff] %v174
    %223 = vst [vmem:[%s3 + $0x8] sm:$0xff] %v203
    %224 = vst [vmem:[%s3 + $0x10] sm:$0xff] %v176
    %225 = vst [vmem:[%s3 + $0x18] sm:$0xff] %v205
    %226 = vst [vmem:[%s3 + $0x20] sm:$0xff] %v179
    %227 = vst [vmem:[%s3 + $0x28] sm:$0xff] %v208
    %228 = vst [vmem:[%s3 + $0x30] sm:$0xff] %v181
    %229 = vst [vmem:[%s3 + $0x38] sm:$0xff] %v210
    %230 = vst [vmem:[%s3 + $0x40] sm:$0xff] %v184
    %231 = vst [vmem:[%s3 + $0x48] sm:$0xff] %v213
    %232 = vst [vmem:[%s3 + $0x50] sm:$0xff] %v186
    %233 = vst [vmem:[%s3 + $0x58] sm:$0xff] %v215
    %234 = vst [vmem:[%s3 + $0x60] sm:$0xff] %v189
    %235 = vst [vmem:[%s3 + $0x68] sm:$0xff] %v218
    %236 = vst [vmem:[%s3 + $0x70] sm:$0xff] %v191
    %237 = vst [vmem:[%s3 + $0x78] sm:$0xff] %v220
    // Predicated region
    $region18: #{transformer_forward.13} parent=1 // pred_check
      _
    $region19: #{transformer_forward.13} parent=1 // pred_check_branch
      %239 = sbr.rel (0) target = $region21
    $region20: #{transformer_forward.13} parent=1 // pred_region
      _
    $region21: #{transformer_forward.13} parent=1 // pred_fallthru
      _
    // Predicated region
    $region22: #{transformer_forward.13} parent=1 // pred_check
      _
    $region23: #{transformer_forward.13} parent=1 // pred_check_branch
      %241 = sbr.rel (0) target = $region25
    $region24: #{transformer_forward.13} parent=1 // pred_region
      _
    $region25: #{transformer_forward.13} parent=1 // pred_fallthru
      _
    %242 = vsyncpa [#allocation3], 1

// kernel: transformer_forward.12
$region0: #{transformer_forward.12}
  #allocation0 [shape = 'u32[]', space=smem, size = 0x4, offset = 0x4, fixed_abs, tag = 'smem constant byte address 0x4 - core index']
  #allocation1 [shape = 'u32[72,128]{1,0:T(1,128)}', space=vmem, size = 0x9000, scoped, tag = 'internal scratch']
  %s0 = inlined_call_operand.vmem [shape: bf16[64,128], index: 0, kind: input, shape index: {}]
  %s1 = inlined_call_operand.vmem [shape: bf16[128,256], index: 1, kind: input, shape index: {}]
  %s2 = inlined_call_operand.vmem [shape: f32[1,256], index: 2, kind: input, shape index: {}]
  %s3 = inlined_call_operand.hbm [shape: bf16[256,128], index: 3, kind: input, shape index: {}]
  %s4 = inlined_call_operand.vmem [shape: f32[1,128], index: 4, kind: input, shape index: {}]
  %s5 = inlined_call_operand.vmem [shape: f32[1,128], index: 5, kind: input, shape index: {}]
  %s6 = inlined_call_operand.vmem [shape: f32[1,128], index: 6, kind: input, shape index: {}]
  %s7 = inlined_call_operand.vmem [shape: bf16[64,128], index: 7, kind: output, shape index: {}]
  %s8 = sld [smem:[#allocation0]]
  $region42: #{transformer_forward.12} parent=0
    _
  %s10 = ssub.s32 1, %s8
  %s11 = scalar_select 0, %s10, %s8
  $region1: #{transformer_forward.12} parent=0
    #allocation2 [shape = 'u8[65536]{0}', space=vmem, size = 0x10000, scoped, tag = 'input window, operand 3, single buffered']
    #allocation3 [shape = 's32[1]{0}', space=sflag, size = 0x4, scoped, tag = 'scoped memory for transformer_forward.12']
    %12 = vsyncpa [#allocation3], 0
    // Predicated region
    $region2: #{transformer_forward.12} parent=1 // pred_check
      _
    $region3: #{transformer_forward.12} parent=1 // pred_check_branch
      %14 = sbr.rel (0) target = $region5
    $region4: #{transformer_forward.12} parent=1 // pred_region
      _
    $region5: #{transformer_forward.12} parent=1 // pred_fallthru
      _
    // Predicated region
    $region6: #{transformer_forward.12} parent=1 // pred_check
      _
    $region7: #{transformer_forward.12} parent=1 // pred_check_branch
      %16 = sbr.rel (0) target = $region9
    $region8: #{transformer_forward.12} parent=1 // pred_region
      _
    $region9: #{transformer_forward.12} parent=1 // pred_fallthru
      _
    // Predicated region
    $region10: #{transformer_forward.12} parent=1 // pred_check
      _
    $region11: #{transformer_forward.12} parent=1 // pred_check_branch
      %18 = sbr.rel (0) target = $region13
    $region12: #{transformer_forward.12} parent=1 // pred_region
      _
    $region13: #{transformer_forward.12} parent=1 // pred_fallthru
      _
    // Predicated region
    $region14: #{transformer_forward.12} parent=1 // pred_check
      _
    $region15: #{transformer_forward.12} parent=1 // pred_check_branch
      %20 = sbr.rel (0) target = $region17
    $region16: #{transformer_forward.12} parent=1 // pred_region
      %22 = vsyncadd [#allocation3], 0
      %s23 = sshll.u32 %s3, 4
      %s24 = int_to_ptr.hbm [resolvable:$true] %s23
      %s25 = sshll.u32 [#allocation2], 4
      %s26 = int_to_ptr.vmem [resolvable:$true] %s25
      %31 = dma.hbm_to_vmem [thread:$0]  %s24, 2048, %s26, [#allocation3], 64, 64, 4
    $region17: #{transformer_forward.12} parent=1 // pred_fallthru
      _
    // Predicated region
    $region18: #{transformer_forward.12} parent=1 // pred_check
      _
    $region19: #{transformer_forward.12} parent=1 // pred_check_branch
      %33 = sbr.rel (0) target = $region21
    $region20: #{transformer_forward.12} parent=1 // pred_region
      _
    $region21: #{transformer_forward.12} parent=1 // pred_fallthru
      _
    // Predicated region
    $region22: #{transformer_forward.12} parent=1 // pred_check
      _
    $region23: #{transformer_forward.12} parent=1 // pred_check_branch
      %35 = sbr.rel (0) target = $region25
    $region24: #{transformer_forward.12} parent=1 // pred_region
      _
    $region25: #{transformer_forward.12} parent=1 // pred_fallthru
      _
    // Predicated region
    $region26: #{transformer_forward.12} parent=1 // pred_check
      _
    $region27: #{transformer_forward.12} parent=1 // pred_check_branch
      %37 = sbr.rel (0) target = $region29
    $region28: #{transformer_forward.12} parent=1 // pred_region
      _
    $region29: #{transformer_forward.12} parent=1 // pred_fallthru
      _
    // Predicated region
    $region30: #{transformer_forward.12} parent=1 // pred_check
      _
    $region31: #{transformer_forward.12} parent=1 // pred_check_branch
      %39 = sbr.rel (0) target = $region33
    $region32: #{transformer_forward.12} parent=1 // pred_region
      %41 = dma.done [#allocation3], 2048
    $region33: #{transformer_forward.12} parent=1 // pred_fallthru
      _
    %v42 = vld [vmem:[%s0] sm:$0xf]
    %v43 = vld [vmem:[%s0 + $0x4] sm:$0xf]
    %v44 = vld [vmem:[%s0 + $0x8] sm:$0xf]
    %v45 = vld [vmem:[%s0 + $0xc] sm:$0xf]
    %v46 = vld [vmem:[%s0 + $0x10] sm:$0xf]
    %v47 = vld [vmem:[%s0 + $0x14] sm:$0xf]
    %v48 = vld [vmem:[%s0 + $0x18] sm:$0xf]
    %v49 = vld [vmem:[%s0 + $0x1c] sm:$0xf]
    %v50 = vld [vmem:[%s1] sm:$0xff]
    %v51 = vld [vmem:[%s1 + $0x8] sm:$0xff]
    %v52 = vld [vmem:[%s1 + $0x10] sm:$0xff]
    %v53 = vld [vmem:[%s1 + $0x18] sm:$0xff]
    %v54 = vld [vmem:[%s1 + $0x20] sm:$0xff]
    %v55 = vld [vmem:[%s1 + $0x28] sm:$0xff]
    %v56 = vld [vmem:[%s1 + $0x30] sm:$0xff]
    %v57 = vld [vmem:[%s1 + $0x38] sm:$0xff]
    %v58 = vld [vmem:[%s1 + $0x40] sm:$0xff]
    %v59 = vld [vmem:[%s1 + $0x48] sm:$0xff]
    %v60 = vld [vmem:[%s1 + $0x50] sm:$0xff]
    %v61 = vld [vmem:[%s1 + $0x58] sm:$0xff]
    %v62 = vld [vmem:[%s1 + $0x60] sm:$0xff]
    %v63 = vld [vmem:[%s1 + $0x68] sm:$0xff]
    %v64 = vld [vmem:[%s1 + $0x70] sm:$0xff]
    %v65 = vld [vmem:[%s1 + $0x78] sm:$0xff]
    %v66 = vld [vmem:[%s2] sm:$0x3]
    %v68 = vperm.slane %v66, 0
    %v69 = vperm.slane %v66, 1
    %v80 = vunpack.c.l.b16 %v42
    %v81 = vunpack.c.l.b16 %v43
    %v82 = vunpack.c.l.b16 %v44
    %v83 = vunpack.c.l.b16 %v45
    %v84 = vunpack.c.l.b16 %v46
    %v85 = vunpack.c.l.b16 %v47
    %v86 = vunpack.c.l.b16 %v48
    %v87 = vunpack.c.l.b16 %v49
    %v88 = vpack.c.b16 %v81, %v80
    %v89 = vpack.c.b16 %v83, %v82
    %v90 = vpack.c.b16 %v85, %v84
    %v91 = vpack.c.b16 %v87, %v86
    %v112 = vunpack.c.l.b16 %v50
    %v113 = vunpack.c.h.b16 %v50
    %v114 = vunpack.c.l.b16 %v51
    %v115 = vunpack.c.h.b16 %v51
    %v116 = vunpack.c.l.b16 %v52
    %v117 = vunpack.c.h.b16 %v52
    %v118 = vunpack.c.l.b16 %v53
    %v119 = vunpack.c.h.b16 %v53
    %v120 = vunpack.c.l.b16 %v54
    %v121 = vunpack.c.h.b16 %v54
    %v122 = vunpack.c.l.b16 %v55
    %v123 = vunpack.c.h.b16 %v55
    %v124 = vunpack.c.l.b16 %v56
    %v125 = vunpack.c.h.b16 %v56
    %v126 = vunpack.c.l.b16 %v57
    %v127 = vunpack.c.h.b16 %v57
    %v128 = vunpack.c.l.b16 %v58
    %v129 = vunpack.c.h.b16 %v58
    %v130 = vunpack.c.l.b16 %v59
    %v131 = vunpack.c.h.b16 %v59
    %v132 = vunpack.c.l.b16 %v60
    %v133 = vunpack.c.h.b16 %v60
    %v134 = vunpack.c.l.b16 %v61
    %v135 = vunpack.c.h.b16 %v61
    %v136 = vunpack.c.l.b16 %v62
    %v137 = vunpack.c.h.b16 %v62
    %v138 = vunpack.c.l.b16 %v63
    %v139 = vunpack.c.h.b16 %v63
    %v140 = vunpack.c.l.b16 %v64
    %v141 = vunpack.c.h.b16 %v64
    %v142 = vunpack.c.l.b16 %v65
    %v143 = vunpack.c.h.b16 %v65
    %v144 = vpack.c.b16 %v114, %v112
    %v145 = vpack.c.b16 %v115, %v113
    %v146 = vpack.c.b16 %v118, %v116
    %v147 = vpack.c.b16 %v119, %v117
    %v148 = vpack.c.b16 %v122, %v120
    %v149 = vpack.c.b16 %v123, %v121
    %v150 = vpack.c.b16 %v126, %v124
    %v151 = vpack.c.b16 %v127, %v125
    %v152 = vpack.c.b16 %v130, %v128
    %v153 = vpack.c.b16 %v131, %v129
    %v154 = vpack.c.b16 %v134, %v132
    %v155 = vpack.c.b16 %v135, %v133
    %v156 = vpack.c.b16 %v138, %v136
    %v157 = vpack.c.b16 %v139, %v137
    %v158 = vpack.c.b16 %v142, %v140
    %v159 = vpack.c.b16 %v143, %v141
    %176 = vmatpush.bf16.msra.mxu0 %v158
    %177 = vmatpush.bf16.msra.mxu0 %v156
    %178 = vmatpush.bf16.msra.mxu0 %v154
    %179 = vmatpush.bf16.msra.mxu0 %v152
    %180 = vmatpush.bf16.msra.mxu0 %v150
    %181 = vmatpush.bf16.msra.mxu0 %v148
    %182 = vmatpush.bf16.msra.mxu0 %v146
    %183 = vmatpush.bf16.msra.mxu0 %v144
    %184 = vmatmul.bf16.gmra.mxu0 %v88
    %v185 = vpop.f32.mrf.mxu0
    %v186 = vadd.f32 %v68, %v185
    %v187 = vpop.f32.mrf.mxu0
    %v188 = vadd.f32 %v68, %v187
    %189 = vmatmul.bf16.gmra.mxu0 %v89
    %v190 = vpop.f32.mrf.mxu0
    %v191 = vadd.f32 %v68, %v190
    %v192 = vpop.f32.mrf.mxu0
    %v193 = vadd.f32 %v68, %v192
    %194 = vmatmul.bf16.gmra.mxu0 %v90
    %v195 = vpop.f32.mrf.mxu0
    %v196 = vadd.f32 %v68, %v195
    %v197 = vpop.f32.mrf.mxu0
    %v198 = vadd.f32 %v68, %v197
    %199 = vmatmul.bf16.gmra.mxu0 %v91
    %v200 = vpop.f32.mrf.mxu0
    %v201 = vadd.f32 %v68, %v200
    %v202 = vpop.f32.mrf.mxu0
    %v203 = vadd.f32 %v68, %v202
    %204 = vdwg.mxu0
    %205 = vmatpush.bf16.msra.mxu0 %v159
    %206 = vmatpush.bf16.msra.mxu0 %v157
    %207 = vmatpush.bf16.msra.mxu0 %v155
    %208 = vmatpush.bf16.msra.mxu0 %v153
    %209 = vmatpush.bf16.msra.mxu0 %v151
    %210 = vmatpush.bf16.msra.mxu0 %v149
    %211 = vmatpush.bf16.msra.mxu0 %v147
    %212 = vmatpush.bf16.msra.mxu0 %v145
    %213 = vmatmul.bf16.gmra.mxu0 %v88
    %v214 = vpop.f32.mrf.mxu0
    %v215 = vadd.f32 %v69, %v214
    %v216 = vpop.f32.mrf.mxu0
    %v217 = vadd.f32 %v69, %v216
    %218 = vmatmul.bf16.gmra.mxu0 %v89
    %v219 = vpop.f32.mrf.mxu0
    %v220 = vadd.f32 %v69, %v219
    %v221 = vpop.f32.mrf.mxu0
    %v222 = vadd.f32 %v69, %v221
    %223 = vmatmul.bf16.gmra.mxu0 %v90
    %v224 = vpop.f32.mrf.mxu0
    %v225 = vadd.f32 %v69, %v224
    %v226 = vpop.f32.mrf.mxu0
    %v227 = vadd.f32 %v69, %v226
    %228 = vmatmul.bf16.gmra.mxu0 %v91
    %v229 = vpop.f32.mrf.mxu0
    %v230 = vadd.f32 %v69, %v229
    %v231 = vpop.f32.mrf.mxu0
    %v232 = vadd.f32 %v69, %v231
    %233 = vdwg.mxu0
    %v234 = vmax.f32 %v186, 0.0
    %v235 = vmax.f32 %v215, 0.0
    %v236 = vmax.f32 %v188, 0.0
    %v237 = vmax.f32 %v217, 0.0
    %v238 = vmax.f32 %v191, 0.0
    %v239 = vmax.f32 %v220, 0.0
    %v240 = vmax.f32 %v193, 0.0
    %v241 = vmax.f32 %v222, 0.0
    %v242 = vmax.f32 %v196, 0.0
    %v243 = vmax.f32 %v225, 0.0
    %v244 = vmax.f32 %v198, 0.0
    %v245 = vmax.f32 %v227, 0.0
    %v246 = vmax.f32 %v201, 0.0
    %v247 = vmax.f32 %v230, 0.0
    %v248 = vmax.f32 %v203, 0.0
    %v249 = vmax.f32 %v232, 0.0
    %v250 = vpack.c.bf16 %v236, %v234
    %v251 = vpack.c.bf16 %v237, %v235
    %v252 = vpack.c.bf16 %v240, %v238
    %v253 = vpack.c.bf16 %v241, %v239
    %v254 = vpack.c.bf16 %v244, %v242
    %v255 = vpack.c.bf16 %v245, %v243
    %v256 = vpack.c.bf16 %v248, %v246
    %v257 = vpack.c.bf16 %v249, %v247
    %v258 = vld [vmem:[#allocation2] sm:$0xf]
    %v259 = vld [vmem:[#allocation2 + $0x4] sm:$0xf]
    %v260 = vld [vmem:[#allocation2 + $0x8] sm:$0xf]
    %v261 = vld [vmem:[#allocation2 + $0xc] sm:$0xf]
    %v262 = vld [vmem:[#allocation2 + $0x10] sm:$0xf]
    %v263 = vld [vmem:[#allocation2 + $0x14] sm:$0xf]
    %v264 = vld [vmem:[#allocation2 + $0x18] sm:$0xf]
    %v265 = vld [vmem:[#allocation2 + $0x1c] sm:$0xf]
    %v266 = vld [vmem:[#allocation2 + $0x20] sm:$0xf]
    %v267 = vld [vmem:[#allocation2 + $0x24] sm:$0xf]
    %v268 = vld [vmem:[#allocation2 + $0x28] sm:$0xf]
    %v269 = vld [vmem:[#allocation2 + $0x2c] sm:$0xf]
    %v270 = vld [vmem:[#allocation2 + $0x30] sm:$0xf]
    %v271 = vld [vmem:[#allocation2 + $0x34] sm:$0xf]
    %v272 = vld [vmem:[#allocation2 + $0x38] sm:$0xf]
    %v273 = vld [vmem:[#allocation2 + $0x3c] sm:$0xf]
    %v274 = vld [vmem:[#allocation2 + $0x40] sm:$0xf]
    %v275 = vld [vmem:[#allocation2 + $0x44] sm:$0xf]
    %v276 = vld [vmem:[#allocation2 + $0x48] sm:$0xf]
    %v277 = vld [vmem:[#allocation2 + $0x4c] sm:$0xf]
    %v278 = vld [vmem:[#allocation2 + $0x50] sm:$0xf]
    %v279 = vld [vmem:[#allocation2 + $0x54] sm:$0xf]
    %v280 = vld [vmem:[#allocation2 + $0x58] sm:$0xf]
    %v281 = vld [vmem:[#allocation2 + $0x5c] sm:$0xf]
    %v282 = vld [vmem:[#allocation2 + $0x60] sm:$0xf]
    %v283 = vld [vmem:[#allocation2 + $0x64] sm:$0xf]
    %v284 = vld [vmem:[#allocation2 + $0x68] sm:$0xf]
    %v285 = vld [vmem:[#allocation2 + $0x6c] sm:$0xf]
    %v286 = vld [vmem:[#allocation2 + $0x70] sm:$0xf]
    %v287 = vld [vmem:[#allocation2 + $0x74] sm:$0xf]
    %v288 = vld [vmem:[#allocation2 + $0x78] sm:$0xf]
    %v289 = vld [vmem:[#allocation2 + $0x7c] sm:$0xf]
    %v290 = vld [vmem:[%s4] sm:$0x1]
    %v292 = vperm.slane %v290, 0
    %v326 = vunpack.c.l.b16 %v258
    %v327 = vunpack.c.l.b16 %v259
    %v328 = vunpack.c.l.b16 %v260
    %v329 = vunpack.c.l.b16 %v261
    %v330 = vunpack.c.l.b16 %v262
    %v331 = vunpack.c.l.b16 %v263
    %v332 = vunpack.c.l.b16 %v264
    %v333 = vunpack.c.l.b16 %v265
    %v334 = vunpack.c.l.b16 %v266
    %v335 = vunpack.c.l.b16 %v267
    %v336 = vunpack.c.l.b16 %v268
    %v337 = vunpack.c.l.b16 %v269
    %v338 = vunpack.c.l.b16 %v270
    %v339 = vunpack.c.l.b16 %v271
    %v340 = vunpack.c.l.b16 %v272
    %v341 = vunpack.c.l.b16 %v273
    %v342 = vunpack.c.l.b16 %v274
    %v343 = vunpack.c.l.b16 %v275
    %v344 = vunpack.c.l.b16 %v276
    %v345 = vunpack.c.l.b16 %v277
    %v346 = vunpack.c.l.b16 %v278
    %v347 = vunpack.c.l.b16 %v279
    %v348 = vunpack.c.l.b16 %v280
    %v349 = vunpack.c.l.b16 %v281
    %v350 = vunpack.c.l.b16 %v282
    %v351 = vunpack.c.l.b16 %v283
    %v352 = vunpack.c.l.b16 %v284
    %v353 = vunpack.c.l.b16 %v285
    %v354 = vunpack.c.l.b16 %v286
    %v355 = vunpack.c.l.b16 %v287
    %v356 = vunpack.c.l.b16 %v288
    %v357 = vunpack.c.l.b16 %v289
    %v358 = vpack.c.b16 %v327, %v326
    %v359 = vpack.c.b16 %v329, %v328
    %v360 = vpack.c.b16 %v331, %v330
    %v361 = vpack.c.b16 %v333, %v332
    %v362 = vpack.c.b16 %v335, %v334
    %v363 = vpack.c.b16 %v337, %v336
    %v364 = vpack.c.b16 %v339, %v338
    %v365 = vpack.c.b16 %v341, %v340
    %v366 = vpack.c.b16 %v343, %v342
    %v367 = vpack.c.b16 %v345, %v344
    %v368 = vpack.c.b16 %v347, %v346
    %v369 = vpack.c.b16 %v349, %v348
    %v370 = vpack.c.b16 %v351, %v350
    %v371 = vpack.c.b16 %v353, %v352
    %v372 = vpack.c.b16 %v355, %v354
    %v373 = vpack.c.b16 %v357, %v356
    %390 = vmatpush.bf16.msra.mxu0 %v365
    %391 = vmatpush.bf16.msra.mxu0 %v364
    %392 = vmatpush.bf16.msra.mxu0 %v363
    %393 = vmatpush.bf16.msra.mxu0 %v362
    %394 = vmatpush.bf16.msra.mxu0 %v361
    %395 = vmatpush.bf16.msra.mxu0 %v360
    %396 = vmatpush.bf16.msra.mxu0 %v359
    %397 = vmatpush.bf16.msra.mxu0 %v358
    %398 = vmatmul.bf16.gmra.mxu0 %v250
    %v399 = vpop.f32.mrf.mxu0
    %v400 = vadd.f32 %v292, %v399
    %v401 = vpop.f32.mrf.mxu0
    %v402 = vadd.f32 %v292, %v401
    %403 = vmatmul.bf16.gmra.mxu0 %v252
    %v404 = vpop.f32.mrf.mxu0
    %v405 = vadd.f32 %v292, %v404
    %v406 = vpop.f32.mrf.mxu0
    %v407 = vadd.f32 %v292, %v406
    %408 = vmatmul.bf16.gmra.mxu0 %v254
    %v409 = vpop.f32.mrf.mxu0
    %v410 = vadd.f32 %v292, %v409
    %v411 = vpop.f32.mrf.mxu0
    %v412 = vadd.f32 %v292, %v411
    %413 = vmatmul.bf16.gmra.mxu0 %v256
    %v414 = vpop.f32.mrf.mxu0
    %v415 = vadd.f32 %v292, %v414
    %v416 = vpop.f32.mrf.mxu0
    %v417 = vadd.f32 %v292, %v416
    %418 = vdwg.mxu0
    %419 = vmatpush.bf16.msra.mxu0 %v373
    %420 = vmatpush.bf16.msra.mxu0 %v372
    %421 = vmatpush.bf16.msra.mxu0 %v371
    %422 = vmatpush.bf16.msra.mxu0 %v370
    %423 = vmatpush.bf16.msra.mxu0 %v369
    %424 = vmatpush.bf16.msra.mxu0 %v368
    %425 = vmatpush.bf16.msra.mxu0 %v367
    %426 = vmatpush.bf16.msra.mxu0 %v366
    %427 = vmatmul.bf16.gmra.mxu0 %v251
    %v428 = vpop.f32.mrf.mxu0
    %v429 = vadd.f32 %v400, %v428
    %v430 = vpop.f32.mrf.mxu0
    %v431 = vadd.f32 %v402, %v430
    %432 = vmatmul.bf16.gmra.mxu0 %v253
    %v433 = vpop.f32.mrf.mxu0
    %v434 = vadd.f32 %v405, %v433
    %v435 = vpop.f32.mrf.mxu0
    %v436 = vadd.f32 %v407, %v435
    %437 = vmatmul.bf16.gmra.mxu0 %v255
    %v438 = vpop.f32.mrf.mxu0
    %v439 = vadd.f32 %v410, %v438
    %v440 = vpop.f32.mrf.mxu0
    %v441 = vadd.f32 %v412, %v440
    %442 = vmatmul.bf16.gmra.mxu0 %v257
    %v443 = vpop.f32.mrf.mxu0
    %v444 = vadd.f32 %v415, %v443
    %v445 = vpop.f32.mrf.mxu0
    %v446 = vadd.f32 %v417, %v445
    %447 = vdwg.mxu0
    %v448 = vunpack.c.l.bf16 %v42
    %v449 = vunpack.c.l.bf16 %v43
    %v450 = vunpack.c.l.bf16 %v44
    %v451 = vunpack.c.l.bf16 %v45
    %v452 = vunpack.c.l.bf16 %v46
    %v453 = vunpack.c.l.bf16 %v47
    %v454 = vunpack.c.l.bf16 %v48
    %v455 = vunpack.c.l.bf16 %v49
    %v456 = vadd.f32 %v448, %v429
    %v457 = vadd.f32 %v449, %v431
    %v458 = vadd.f32 %v450, %v434
    %v459 = vadd.f32 %v451, %v436
    %v460 = vadd.f32 %v452, %v439
    %v461 = vadd.f32 %v453, %v441
    %v462 = vadd.f32 %v454, %v444
    %v463 = vadd.f32 %v455, %v446
    %464 = vadd.xlane.f32.xlu0 %v456
    %v465 = vpop.xlane.xlu0 %464
    %466 = vadd.xlane.f32.xlu0 %v457
    %v467 = vpop.xlane.xlu0 %466
    %468 = vadd.xlane.f32.xlu0 %v458
    %v469 = vpop.xlane.xlu0 %468
    %470 = vadd.xlane.f32.xlu0 %v459
    %v471 = vpop.xlane.xlu0 %470
    %472 = vadd.xlane.f32.xlu0 %v460
    %v473 = vpop.xlane.xlu0 %472
    %474 = vadd.xlane.f32.xlu0 %v461
    %v475 = vpop.xlane.xlu0 %474
    %476 = vadd.xlane.f32.xlu0 %v462
    %v477 = vpop.xlane.xlu0 %476
    %478 = vadd.xlane.f32.xlu0 %v463
    %v479 = vpop.xlane.xlu0 %478
    %v480 = vrcp.pop 128.0
    %v481 = vmul.f32 128.0, %v480
    %v482 = vsub.f32 1.0, %v481
    %v483 = vmul.f32 %v480, %v482
    %v484 = vadd.f32 %v480, %v483
    %vm485 = vweird.f32 %v480
    %v486 = vsel %vm485, %v480, %v484
    %v487 = vmul.f32 %v465, %v486
    %v488 = vmul.f32 %v467, %v486
    %v489 = vmul.f32 %v469, %v486
    %v490 = vmul.f32 %v471, %v486
    %v491 = vmul.f32 %v473, %v486
    %v492 = vmul.f32 %v475, %v486
    %v493 = vmul.f32 %v477, %v486
    %v494 = vmul.f32 %v479, %v486
    %v495 = vsub.f32 %v456, %v487
    %v496 = vsub.f32 %v457, %v488
    %v497 = vsub.f32 %v458, %v489
    %v498 = vsub.f32 %v459, %v490
    %v499 = vsub.f32 %v460, %v491
    %v500 = vsub.f32 %v461, %v492
    %v501 = vsub.f32 %v462, %v493
    %v502 = vsub.f32 %v463, %v494
    %v503 = vmul.f32 %v495, %v495
    %v504 = vmul.f32 %v496, %v496
    %v505 = vmul.f32 %v497, %v497
    %v506 = vmul.f32 %v498, %v498
    %v507 = vmul.f32 %v499, %v499
    %v508 = vmul.f32 %v500, %v500
    %v509 = vmul.f32 %v501, %v501
    %v510 = vmul.f32 %v502, %v502
    %511 = vadd.xlane.f32.xlu0 %v503
    %v512 = vpop.xlane.xlu0 %511
    %513 = vadd.xlane.f32.xlu0 %v504
    %v514 = vpop.xlane.xlu0 %513
    %515 = vadd.xlane.f32.xlu0 %v505
    %v516 = vpop.xlane.xlu0 %515
    %517 = vadd.xlane.f32.xlu0 %v506
    %v518 = vpop.xlane.xlu0 %517
    %519 = vadd.xlane.f32.xlu0 %v507
    %v520 = vpop.xlane.xlu0 %519
    %521 = vadd.xlane.f32.xlu0 %v508
    %v522 = vpop.xlane.xlu0 %521
    %523 = vadd.xlane.f32.xlu0 %v509
    %v524 = vpop.xlane.xlu0 %523
    %525 = vadd.xlane.f32.xlu0 %v510
    %v526 = vpop.xlane.xlu0 %525
    %v527 = vmul.f32 %v512, %v486
    %v528 = vmul.f32 %v514, %v486
    %v529 = vmul.f32 %v516, %v486
    %v530 = vmul.f32 %v518, %v486
    %v531 = vmul.f32 %v520, %v486
    %v532 = vmul.f32 %v522, %v486
    %v533 = vmul.f32 %v524, %v486
    %v534 = vmul.f32 %v526, %v486
    %v535 = vadd.f32 %v527, 1e-05
    %v536 = vadd.f32 %v528, 1e-05
    %v537 = vadd.f32 %v529, 1e-05
    %v538 = vadd.f32 %v530, 1e-05
    %v539 = vadd.f32 %v531, 1e-05
    %v540 = vadd.f32 %v532, 1e-05
    %v541 = vadd.f32 %v533, 1e-05
    %v542 = vadd.f32 %v534, 1e-05
    %v543 = vrsqrt.pop %v535
    %v544 = vmul.f32 %v543, %v535
    %v545 = vmul.f32 %v544, %v543
    %v546 = vmul.f32 0.5, %v545
    %v547 = vsub.f32 1.5, %v546
    %v548 = vmul.f32 %v543, %v547
    %vm549 = vweird.f32 %v535
    %vm550 = vweird.f32 %v543
    %vm551 = vmor %vm549, %vm550
    %v552 = vsel %vm551, %v543, %v548
    %v553 = vrsqrt.pop %v536
    %v554 = vmul.f32 %v553, %v536
    %v555 = vmul.f32 %v554, %v553
    %v556 = vmul.f32 0.5, %v555
    %v557 = vsub.f32 1.5, %v556
    %v558 = vmul.f32 %v553, %v557
    %vm559 = vweird.f32 %v536
    %vm560 = vweird.f32 %v553
    %vm561 = vmor %vm559, %vm560
    %v562 = vsel %vm561, %v553, %v558
    %v563 = vrsqrt.pop %v537
    %v564 = vmul.f32 %v563, %v537
    %v565 = vmul.f32 %v564, %v563
    %v566 = vmul.f32 0.5, %v565
    %v567 = vsub.f32 1.5, %v566
    %v568 = vmul.f32 %v563, %v567
    %vm569 = vweird.f32 %v537
    %vm570 = vweird.f32 %v563
    %vm571 = vmor %vm569, %vm570
    %v572 = vsel %vm571, %v563, %v568
    %v573 = vrsqrt.pop %v538
    %v574 = vmul.f32 %v573, %v538
    %v575 = vmul.f32 %v574, %v573
    %v576 = vmul.f32 0.5, %v575
    %v577 = vsub.f32 1.5, %v576
    %v578 = vmul.f32 %v573, %v577
    %vm579 = vweird.f32 %v538
    %vm580 = vweird.f32 %v573
    %vm581 = vmor %vm579, %vm580
    %v582 = vsel %vm581, %v573, %v578
    %v583 = vrsqrt.pop %v539
    %v584 = vmul.f32 %v583, %v539
    %v585 = vmul.f32 %v584, %v583
    %v586 = vmul.f32 0.5, %v585
    %v587 = vsub.f32 1.5, %v586
    %v588 = vmul.f32 %v583, %v587
    %vm589 = vweird.f32 %v539
    %vm590 = vweird.f32 %v583
    %vm591 = vmor %vm589, %vm590
    %v592 = vsel %vm591, %v583, %v588
    %v593 = vrsqrt.pop %v540
    %v594 = vmul.f32 %v593, %v540
    %v595 = vmul.f32 %v594, %v593
    %v596 = vmul.f32 0.5, %v595
    %v597 = vsub.f32 1.5, %v596
    %v598 = vmul.f32 %v593, %v597
    %vm599 = vweird.f32 %v540
    %vm600 = vweird.f32 %v593
    %vm601 = vmor %vm599, %vm600
    %v602 = vsel %vm601, %v593, %v598
    %v603 = vrsqrt.pop %v541
    %v604 = vmul.f32 %v603, %v541
    %v605 = vmul.f32 %v604, %v603
    %v606 = vmul.f32 0.5, %v605
    %v607 = vsub.f32 1.5, %v606
    %v608 = vmul.f32 %v603, %v607
    %vm609 = vweird.f32 %v541
    %vm610 = vweird.f32 %v603
    %vm611 = vmor %vm609, %vm610
    %v612 = vsel %vm611, %v603, %v608
    %v613 = vrsqrt.pop %v542
    %v614 = vmul.f32 %v613, %v542
    %v615 = vmul.f32 %v614, %v613
    %v616 = vmul.f32 0.5, %v615
    %v617 = vsub.f32 1.5, %v616
    %v618 = vmul.f32 %v613, %v617
    %vm619 = vweird.f32 %v542
    %vm620 = vweird.f32 %v613
    %vm621 = vmor %vm619, %vm620
    %v622 = vsel %vm621, %v613, %v618
    %v623 = vmul.f32 %v495, %v552
    %v624 = vmul.f32 %v496, %v562
    %v625 = vmul.f32 %v497, %v572
    %v626 = vmul.f32 %v498, %v582
    %v627 = vmul.f32 %v499, %v592
    %v628 = vmul.f32 %v500, %v602
    %v629 = vmul.f32 %v501, %v612
    %v630 = vmul.f32 %v502, %v622
    %v631 = vld [vmem:[%s5] sm:$0x1]
    %v633 = vperm.slane %v631, 0
    %v635 = vmul.f32 %v623, %v633
    %v636 = vmul.f32 %v624, %v633
    %v637 = vmul.f32 %v625, %v633
    %v638 = vmul.f32 %v626, %v633
    %v639 = vmul.f32 %v627, %v633
    %v640 = vmul.f32 %v628, %v633
    %v641 = vmul.f32 %v629, %v633
    %v642 = vmul.f32 %v630, %v633
    %v643 = vld [vmem:[%s6] sm:$0x1]
    %v645 = vperm.slane %v643, 0
    %v647 = vadd.f32 %v635, %v645
    %v648 = vadd.f32 %v636, %v645
    %v649 = vadd.f32 %v637, %v645
    %v650 = vadd.f32 %v638, %v645
    %v651 = vadd.f32 %v639, %v645
    %v652 = vadd.f32 %v640, %v645
    %v653 = vadd.f32 %v641, %v645
    %v654 = vadd.f32 %v642, %v645
    %v655 = vpack.c.bf16 %v647, %v647
    %v656 = vpack.c.bf16 %v648, %v648
    %v657 = vpack.c.bf16 %v649, %v649
    %v658 = vpack.c.bf16 %v650, %v650
    %v659 = vpack.c.bf16 %v651, %v651
    %v660 = vpack.c.bf16 %v652, %v652
    %v661 = vpack.c.bf16 %v653, %v653
    %v662 = vpack.c.bf16 %v654, %v654
    %663 = vst [vmem:[%s7] sm:$0xf] %v655
    %664 = vst [vmem:[%s7 + $0x4] sm:$0xf] %v656
    %665 = vst [vmem:[%s7 + $0x8] sm:$0xf] %v657
    %666 = vst [vmem:[%s7 + $0xc] sm:$0xf] %v658
    %667 = vst [vmem:[%s7 + $0x10] sm:$0xf] %v659
    %668 = vst [vmem:[%s7 + $0x14] sm:$0xf] %v660
    %669 = vst [vmem:[%s7 + $0x18] sm:$0xf] %v661
    %670 = vst [vmem:[%s7 + $0x1c] sm:$0xf] %v662
    // Predicated region
    $region34: #{transformer_forward.12} parent=1 // pred_check
      _
    $region35: #{transformer_forward.12} parent=1 // pred_check_branch
      %672 = sbr.rel (0) target = $region37
    $region36: #{transformer_forward.12} parent=1 // pred_region
      _
    $region37: #{transformer_forward.12} parent=1 // pred_fallthru
      _
    // Predicated region
    $region38: #{transformer_forward.12} parent=1 // pred_check
      _
    $region39: #{transformer_forward.12} parent=1 // pred_check_branch
      %674 = sbr.rel (0) target = $region41
    $region40: #{transformer_forward.12} parent=1 // pred_region
      _
    $region41: #{transformer_forward.12} parent=1 // pred_fallthru
      _
    %675 = vsyncpa [#allocation3], 1

</llo_original>
